<compile_context>
chip_gen: v7x
topology: tpu7x:2x2x1
jax: 0.10.0
libtpu: 0.0.40
codegen_flags: <defaults>
</compile_context>

<pallas_src>
import functools

import jax
import jax.numpy as jnp
from jax.experimental import pallas as pl
from jax.experimental.pallas import tpu as pltpu


# ---------------------------------------------------------------------------
# Fused conv1 + relu + pool + conv2 + relu + pool (one image per grid step)
# ---------------------------------------------------------------------------
def _two_stage_conv_kernel(x_ref, w1_ref, b1_ref, w2_ref, b2_ref, o_ref,
                           xp1_ref, y1_ref, y1w_ref, xp2_ref, y2_ref, y2w_ref,
                           *, H, W, Cin, C1, C2):
    # x_ref  : (H, W, Cin)          one image, NHWC (channels on lanes)
    # w*_ref : (3, 3, I, O)         conv weights
    # b*_ref : (1, O)
    # o_ref  : (H//4, W//4, C2)     output after both pools
    Hh, Wh = H // 2, W // 2
    Hq, Wq = Hh // 2, Wh // 2

    # -------- stage 1: conv3x3 (pad 1) + bias + ReLU --------
    xp1_ref[...] = jnp.zeros(xp1_ref.shape, xp1_ref.dtype)
    xp1_ref[pl.ds(1, H), pl.ds(1, W), :] = x_ref[...]

    acc = jnp.zeros((H * W, C1), jnp.float32)
    for kh in range(3):                      # static unroll: LLO sees all 9 taps
        for kw in range(3):
            xs = xp1_ref[pl.ds(kh, H), pl.ds(kw, W), :].reshape(H * W, Cin)
            wk = w1_ref[kh, kw]              # (Cin, C1)
            if Cin == 1:
                acc = acc + xs * wk          # degenerate K=1: outer product on VPU
            else:
                acc = acc + jnp.dot(xs, wk, preferred_element_type=jnp.float32)
    y1_ref[...] = jnp.maximum(acc + b1_ref[...], 0.0).reshape(H, W, C1)

    # -------- pool 1 (2x2 / stride 2), written straight into the padded
    #          stage-2 input so the pooled tensor never exists twice --------
    y1w_ref[...] = jnp.maximum(y1_ref[:, pl.ds(0, Wh, 2), :],
                               y1_ref[:, pl.ds(1, Wh, 2), :])       # pool W
    xp2_ref[...] = jnp.zeros(xp2_ref.shape, xp2_ref.dtype)
    xp2_ref[pl.ds(1, Hh), pl.ds(1, Wh), :] = jnp.maximum(
        y1w_ref[pl.ds(0, Hh, 2), :, :],
        y1w_ref[pl.ds(1, Hh, 2), :, :])                             # pool H

    # -------- stage 2: conv3x3 (pad 1) + bias + ReLU --------
    acc2 = jnp.zeros((Hh * Wh, C2), jnp.float32)
    for kh in range(3):
        for kw in range(3):
            xs = xp2_ref[pl.ds(kh, Hh), pl.ds(kw, Wh), :].reshape(Hh * Wh, C1)
            acc2 = acc2 + jnp.dot(xs, w2_ref[kh, kw],
                                  preferred_element_type=jnp.float32)
    y2_ref[...] = jnp.maximum(acc2 + b2_ref[...], 0.0).reshape(Hh, Wh, C2)

    # -------- pool 2 --------
    y2w_ref[...] = jnp.maximum(y2_ref[:, pl.ds(0, Wq, 2), :],
                               y2_ref[:, pl.ds(1, Wq, 2), :])
    o_ref[...] = jnp.maximum(y2w_ref[pl.ds(0, Hq, 2), :, :],
                             y2w_ref[pl.ds(1, Hq, 2), :, :])


def conv_stages(x_nhwc, w1, b1, w2, b2):
    N, H, W, Cin = x_nhwc.shape
    C1, C2 = w1.shape[-1], w2.shape[-1]
    assert H % 4 == 0 and W % 4 == 0, "two max_pool2d(2,2) stages assume H, W % 4 == 0"
    Hh, Wh, Hq, Wq = H // 2, W // 2, H // 4, W // 4

    kernel = functools.partial(_two_stage_conv_kernel,
                               H=H, W=W, Cin=Cin, C1=C1, C2=C2)
    flops = 2 * N * 9 * (H * W * Cin * C1 + Hh * Wh * C1 * C2)
    bytes_accessed = 4 * (N * H * W * Cin + 9 * (Cin * C1 + C1 * C2)
                          + C1 + C2 + N * Hq * Wq * C2)

    # TODO(synk): at full Atari scale (e.g. 180x80) the channel dim (1/16/32)
    # on lanes pads VMEM scratch to 128 lanes; if VMEM becomes the binding
    # resource, tile H into row bands per grid step instead of whole images.
    return pl.pallas_call(
        kernel,
        out_shape=jax.ShapeDtypeStruct((N, Hq, Wq, C2), jnp.float32),
        grid_spec=pltpu.PrefetchScalarGridSpec(
            num_scalar_prefetch=0,
            grid=(N,),                                    # one image per step
            in_specs=[
                pl.BlockSpec((None, H, W, Cin), lambda n: (n, 0, 0, 0)),
                pl.BlockSpec((3, 3, Cin, C1), lambda n: (0, 0, 0, 0)),  # resident
                pl.BlockSpec((1, C1), lambda n: (0, 0)),
                pl.BlockSpec((3, 3, C1, C2), lambda n: (0, 0, 0, 0)),   # resident
                pl.BlockSpec((1, C2), lambda n: (0, 0)),
            ],
            out_specs=pl.BlockSpec((None, Hq, Wq, C2), lambda n: (n, 0, 0, 0)),
            scratch_shapes=[
                pltpu.VMEM((H + 2, W + 2, Cin), jnp.float32),   # padded conv1 input
                pltpu.VMEM((H, W, C1), jnp.float32),            # conv1 + relu
                pltpu.VMEM((H, Wh, C1), jnp.float32),           # after W-pool 1
                pltpu.VMEM((Hh + 2, Wh + 2, C1), jnp.float32),  # padded conv2 input
                pltpu.VMEM((Hh, Wh, C2), jnp.float32),          # conv2 + relu
                pltpu.VMEM((Hh, Wq, C2), jnp.float32),          # after W-pool 2
            ],
        ),
        compiler_params=pltpu.CompilerParams(
            dimension_semantics=("parallel",)),           # v7x: split batch over TCs
        cost_estimate=pl.CostEstimate(
            flops=flops, transcendentals=0, bytes_accessed=bytes_accessed),
    )(x_nhwc, w1, b1, w2, b2)


# ---------------------------------------------------------------------------
# Fused MLP head: l1..l4 (+ReLU) + softmax, intermediates stay in VMEM
# ---------------------------------------------------------------------------
def _mlp_softmax_kernel(x_ref, w1_ref, b1_ref, w2_ref, b2_ref, w3_ref, b3_ref,
                        w4_ref, b4_ref, o_ref):
    h = jnp.dot(x_ref[...], w1_ref[...], preferred_element_type=jnp.float32)
    h = jnp.maximum(h + b1_ref[...], 0.0)
    h = jnp.dot(h, w2_ref[...], preferred_element_type=jnp.float32)
    h = jnp.maximum(h + b2_ref[...], 0.0)
    h = jnp.dot(h, w3_ref[...], preferred_element_type=jnp.float32)
    h = jnp.maximum(h + b3_ref[...], 0.0)
    logits = jnp.dot(h, w4_ref[...], preferred_element_type=jnp.float32)
    logits = logits + b4_ref[...]
    # softmax over the action dimension (exact division for parity with torch)
    z = logits - jnp.max(logits, axis=-1, keepdims=True)
    e = jnp.exp(z)
    o_ref[...] = (e / jnp.sum(e, axis=-1, keepdims=True)).astype(o_ref.dtype)


def mlp_softmax_head(x, w1, b1, w2, b2, w3, b3, w4, b4):
    # Single block: batch and weights are small enough to live in VMEM here.
    # TODO(synk): for production Atari sizes (flat ~14k-29k, batch >= 64), grid
    # the M and K dims with 128-aligned tiles and a VMEM budget of 64 MiB (v7x).
    M, K1 = x.shape
    H1, H2, H3, A = w1.shape[1], w2.shape[1], w3.shape[1], w4.shape[1]
    flops = 2 * M * (K1 * H1 + H1 * H2 + H2 * H3 + H3 * A)
    bytes_accessed = 4 * (M * K1 + K1 * H1 + H1 * H2 + H2 * H3 + H3 * A
                          + H1 + H2 + H3 + A + M * A)
    vmem = pl.BlockSpec(memory_space=pltpu.MemorySpace.VMEM)
    return pl.pallas_call(
        _mlp_softmax_kernel,
        out_shape=jax.ShapeDtypeStruct((M, A), jnp.float32),
        in_specs=[vmem] * 9,
        out_specs=vmem,
        cost_estimate=pl.CostEstimate(
            flops=flops, transcendentals=M * A, bytes_accessed=bytes_accessed),
    )(x, w1, b1, w2, b2, w3, b3, w4, b4)


# ---------------------------------------------------------------------------
# Actor_discrete_image forward
# ---------------------------------------------------------------------------
def actor_discrete_image_forward(params, obs_nchw):
    # obs_nchw: (N, C, H, W) float32, identical to the PyTorch call convention.
    x = jnp.transpose(obs_nchw, (0, 2, 3, 1))                    # NCHW -> NHWC
    x = conv_stages(x,
                    params["conv1_w"], params["conv1_b"],
                    params["conv2_w"], params["conv2_b"])
    # Flatten in HWC order (contiguous, free); the CHW->HWC permutation torch
    # implies was folded into l1_w's rows at param-prep time.
    x = x.reshape(x.shape[0], -1)
    return mlp_softmax_head(
        x,
        params["l1_w"], params["l1_b"],
        params["l2_w"], params["l2_b"],
        params["l3_w"], params["l3_b"],
        params["l4_w"], params["l4_b"],
    )


# ---------------------------------------------------------------------------
# Parameters: torch-layout init + one-time conversion to kernel layout
# ---------------------------------------------------------------------------
def init_torch_params(key, obs_dim, action_dim,
                      hidden_1=512, hidden_2=256, hidden_3=128):
    c, h, w = obs_dim
    conv_h, conv_w = h // 4, w // 4
    flat = 32 * conv_h * conv_w
    keys = jax.random.split(key, 12)

    def u(k, shape, fan_in):
        bound = 1.0 / jnp.sqrt(jnp.float32(fan_in))
        return jax.random.uniform(k, shape, jnp.float32, -bound, bound)

    return {
        "conv1_w": u(keys[0], (16, c, 3, 3), c * 9),
        "conv1_b": u(keys[1], (16,), c * 9),
        "conv2_w": u(keys[2], (32, 16, 3, 3), 16 * 9),
        "conv2_b": u(keys[3], (32,), 16 * 9),
        "l1_w": u(keys[4], (hidden_1, flat), flat),
        "l1_b": u(keys[5], (hidden_1,), flat),
        "l2_w": u(keys[6], (hidden_2, hidden_1), hidden_1),
        "l2_b": u(keys[7], (hidden_2,), hidden_1),
        "l3_w": u(keys[8], (hidden_3, hidden_2), hidden_2),
        "l3_b": u(keys[9], (hidden_3,), hidden_2),
        "l4_w": u(keys[10], (action_dim, hidden_3), hidden_3),
        "l4_b": u(keys[11], (action_dim,), hidden_3),
    }


def prepare_params(tp, obs_dim):
    """One-time conversion of torch-layout params into kernel-friendly layout."""
    c, h, w = obs_dim
    conv_h, conv_w = h // 4, w // 4
    p = {}
    # Conv weights (O, I, KH, KW) -> (KH, KW, I, O); biases -> (1, O).
    p["conv1_w"] = jnp.transpose(tp["conv1_w"], (2, 3, 1, 0))
    p["conv1_b"] = tp["conv1_b"].reshape(1, -1)
    p["conv2_w"] = jnp.transpose(tp["conv2_w"], (2, 3, 1, 0))
    p["conv2_b"] = tp["conv2_b"].reshape(1, -1)
    # l1: torch weight (hidden1, 32*conv_h*conv_w) acts on CHW-flattened
    # features; our activations are HWC-flattened. Permute the input axis
    # accordingly and transpose to (in, out) so no runtime permute is needed.
    w1 = tp["l1_w"].reshape(-1, 32, conv_h, conv_w)      # (hid1, C, H, W)
    w1 = jnp.transpose(w1, (2, 3, 1, 0))                 # (H, W, C, hid1)
    p["l1_w"] = w1.reshape(32 * conv_h * conv_w, -1)
    p["l1_b"] = tp["l1_b"].reshape(1, -1)
    for name in ("l2", "l3", "l4"):
        p[f"{name}_w"] = jnp.transpose(tp[f"{name}_w"], (1, 0))   # (in, out)
        p[f"{name}_b"] = tp[f"{name}_b"].reshape(1, -1)
    return p


if __name__ == "__main__":
    key = jax.random.PRNGKey(0)
    k_param, k_obs = jax.random.split(key)

    obs_dim = (1, 16, 16)          # (c, h, w) — small, divisible by 4
    action_dim = 4
    batch = 2

    torch_params = init_torch_params(k_param, obs_dim, action_dim)
    params = prepare_params(torch_params, obs_dim)
    obs = jax.random.normal(k_obs, (batch,) + obs_dim, dtype=jnp.float32)

    fwd = jax.jit(actor_discrete_image_forward)
    a_prob = fwd(params, obs)
    jax.block_until_ready(a_prob)

    assert a_prob.shape == (batch, action_dim)
    assert a_prob.dtype == jnp.float32
    assert bool(jnp.all(a_prob >= 0.0)), "softmax probabilities must be non-negative"
    row_sums = jnp.sum(a_prob, axis=-1)
    assert bool(jnp.all(jnp.abs(row_sums - 1.0) < 1e-4)), "softmax rows must sum to 1"
    print("KERNEL_OK")
</pallas_src>

<mosaic_0001>
module attributes {stable_mosaic.version = 11 : i64} {
  func.func @_two_stage_conv_kernel(%arg0: i32, %arg1: memref<1x16x16x1xf32, #tpu.memory_space<vmem>>, %arg2: memref<3x3x1x16xf32, #tpu.memory_space<vmem>>, %arg3: memref<1x16xf32, #tpu.memory_space<vmem>>, %arg4: memref<3x3x16x32xf32, #tpu.memory_space<vmem>>, %arg5: memref<1x32xf32, #tpu.memory_space<vmem>>, %arg6: memref<1x4x4x32xf32, #tpu.memory_space<vmem>>, %arg7: memref<18x18x1xf32, #tpu.memory_space<vmem>>, %arg8: memref<16x16x16xf32, #tpu.memory_space<vmem>>, %arg9: memref<16x8x16xf32, #tpu.memory_space<vmem>>, %arg10: memref<10x10x16xf32, #tpu.memory_space<vmem>>, %arg11: memref<8x8x32xf32, #tpu.memory_space<vmem>>, %arg12: memref<8x4x32xf32, #tpu.memory_space<vmem>>) attributes {dimension_semantics = [#tpu.dimension_semantics<parallel>], iteration_bounds = array<i64: 2>, scalar_prefetch = 0 : i64, scratch_operands = 6 : i64, tpu.core_type = #tpu.core_type<tc>, window_params = [{transform_indices = @transform_0, window_bounds = array<i64: 1, 16, 16, 1>}, {pipeline_mode = #tpu.pipeline_mode<synchronous>, transform_indices = @transform_1, window_bounds = array<i64: 3, 3, 1, 16>}, {pipeline_mode = #tpu.pipeline_mode<synchronous>, transform_indices = @transform_2, window_bounds = array<i64: 1, 16>}, {pipeline_mode = #tpu.pipeline_mode<synchronous>, transform_indices = @transform_3, window_bounds = array<i64: 3, 3, 16, 32>}, {pipeline_mode = #tpu.pipeline_mode<synchronous>, transform_indices = @transform_4, window_bounds = array<i64: 1, 32>}, {transform_indices = @transform_5, window_bounds = array<i64: 1, 4, 4, 32>}]} {
    %cst = arith.constant 0.000000e+00 : f32
    %0 = vector.broadcast %cst : f32 to vector<18x18x1xf32>
    %c0 = arith.constant 0 : index
    %c0_0 = arith.constant 0 : index
    %c0_1 = arith.constant 0 : index
    %1 = vector.load %arg7[%c0, %c0_0, %c0_1] : memref<18x18x1xf32, #tpu.memory_space<vmem>>, vector<18x18x1xf32>
    tpu.vector_store %arg7[%c0, %c0_0, %c0_1], %0 {strides = array<i32>} : memref<18x18x1xf32, #tpu.memory_space<vmem>>, vector<18x18x1xf32>,
    %c0_2 = arith.constant 0 : index
    %c0_3 = arith.constant 0 : index
    %c0_4 = arith.constant 0 : index
    %c0_5 = arith.constant 0 : index
    %2 = vector.load %arg1[%c0_2, %c0_3, %c0_4, %c0_5] : memref<1x16x16x1xf32, #tpu.memory_space<vmem>>, vector<1x16x16x1xf32>
    %3 = vector.shape_cast %2 : vector<1x16x16x1xf32> to vector<16x16x1xf32>
    %c1 = arith.constant 1 : index
    %c1_6 = arith.constant 1 : index
    %c0_7 = arith.constant 0 : index
    %4 = vector.load %arg7[%c1, %c1_6, %c0_7] : memref<18x18x1xf32, #tpu.memory_space<vmem>>, vector<16x16x1xf32>
    tpu.vector_store %arg7[%c1, %c1_6, %c0_7], %3 {strides = array<i32>} : memref<18x18x1xf32, #tpu.memory_space<vmem>>, vector<16x16x1xf32>,
    %cst_8 = arith.constant 0.000000e+00 : f32
    %5 = vector.broadcast %cst_8 : f32 to vector<256x16xf32>
    %c0_9 = arith.constant 0 : index
    %c0_10 = arith.constant 0 : index
    %c0_11 = arith.constant 0 : index
    %6 = vector.load %arg7[%c0_9, %c0_10, %c0_11] : memref<18x18x1xf32, #tpu.memory_space<vmem>>, vector<16x16x1xf32>
    %7 = vector.shape_cast %6 : vector<16x16x1xf32> to vector<256x1xf32>
    %c0_12 = arith.constant 0 : index
    %c0_13 = arith.constant 0 : index
    %c0_14 = arith.constant 0 : index
    %c0_15 = arith.constant 0 : index
    %8 = vector.load %arg2[%c0_12, %c0_13, %c0_14, %c0_15] : memref<3x3x1x16xf32, #tpu.memory_space<vmem>>, vector<1x1x1x16xf32>
    %9 = vector.shape_cast %8 : vector<1x1x1x16xf32> to vector<1x16xf32>
    %10 = vector.broadcast %7 : vector<256x1xf32> to vector<256x16xf32>
    %11 = vector.broadcast %9 : vector<1x16xf32> to vector<256x16xf32>
    %12 = arith.mulf %10, %11 : vector<256x16xf32>
    %13 = arith.addf %5, %12 : vector<256x16xf32>
    %c0_16 = arith.constant 0 : index
    %c1_17 = arith.constant 1 : index
    %c0_18 = arith.constant 0 : index
    %14 = vector.load %arg7[%c0_16, %c1_17, %c0_18] : memref<18x18x1xf32, #tpu.memory_space<vmem>>, vector<16x16x1xf32>
    %15 = vector.shape_cast %14 : vector<16x16x1xf32> to vector<256x1xf32>
    %c0_19 = arith.constant 0 : index
    %c1_20 = arith.constant 1 : index
    %c0_21 = arith.constant 0 : index
    %c0_22 = arith.constant 0 : index
    %16 = vector.load %arg2[%c0_19, %c1_20, %c0_21, %c0_22] : memref<3x3x1x16xf32, #tpu.memory_space<vmem>>, vector<1x1x1x16xf32>
    %17 = vector.shape_cast %16 : vector<1x1x1x16xf32> to vector<1x16xf32>
    %18 = vector.broadcast %15 : vector<256x1xf32> to vector<256x16xf32>
    %19 = vector.broadcast %17 : vector<1x16xf32> to vector<256x16xf32>
    %20 = arith.mulf %18, %19 : vector<256x16xf32>
    %21 = arith.addf %13, %20 : vector<256x16xf32>
    %c0_23 = arith.constant 0 : index
    %c2 = arith.constant 2 : index
    %c0_24 = arith.constant 0 : index
    %22 = vector.load %arg7[%c0_23, %c2, %c0_24] : memref<18x18x1xf32, #tpu.memory_space<vmem>>, vector<16x16x1xf32>
    %23 = vector.shape_cast %22 : vector<16x16x1xf32> to vector<256x1xf32>
    %c0_25 = arith.constant 0 : index
    %c2_26 = arith.constant 2 : index
    %c0_27 = arith.constant 0 : index
    %c0_28 = arith.constant 0 : index
    %24 = vector.load %arg2[%c0_25, %c2_26, %c0_27, %c0_28] : memref<3x3x1x16xf32, #tpu.memory_space<vmem>>, vector<1x1x1x16xf32>
    %25 = vector.shape_cast %24 : vector<1x1x1x16xf32> to vector<1x16xf32>
    %26 = vector.broadcast %23 : vector<256x1xf32> to vector<256x16xf32>
    %27 = vector.broadcast %25 : vector<1x16xf32> to vector<256x16xf32>
    %28 = arith.mulf %26, %27 : vector<256x16xf32>
    %29 = arith.addf %21, %28 : vector<256x16xf32>
    %c1_29 = arith.constant 1 : index
    %c0_30 = arith.constant 0 : index
    %c0_31 = arith.constant 0 : index
    %30 = vector.load %arg7[%c1_29, %c0_30, %c0_31] : memref<18x18x1xf32, #tpu.memory_space<vmem>>, vector<16x16x1xf32>
    %31 = vector.shape_cast %30 : vector<16x16x1xf32> to vector<256x1xf32>
    %c1_32 = arith.constant 1 : index
    %c0_33 = arith.constant 0 : index
    %c0_34 = arith.constant 0 : index
    %c0_35 = arith.constant 0 : index
    %32 = vector.load %arg2[%c1_32, %c0_33, %c0_34, %c0_35] : memref<3x3x1x16xf32, #tpu.memory_space<vmem>>, vector<1x1x1x16xf32>
    %33 = vector.shape_cast %32 : vector<1x1x1x16xf32> to vector<1x16xf32>
    %34 = vector.broadcast %31 : vector<256x1xf32> to vector<256x16xf32>
    %35 = vector.broadcast %33 : vector<1x16xf32> to vector<256x16xf32>
    %36 = arith.mulf %34, %35 : vector<256x16xf32>
    %37 = arith.addf %29, %36 : vector<256x16xf32>
    %c1_36 = arith.constant 1 : index
    %c1_37 = arith.constant 1 : index
    %c0_38 = arith.constant 0 : index
    %38 = vector.load %arg7[%c1_36, %c1_37, %c0_38] : memref<18x18x1xf32, #tpu.memory_space<vmem>>, vector<16x16x1xf32>
    %39 = vector.shape_cast %38 : vector<16x16x1xf32> to vector<256x1xf32>
    %c1_39 = arith.constant 1 : index
    %c1_40 = arith.constant 1 : index
    %c0_41 = arith.constant 0 : index
    %c0_42 = arith.constant 0 : index
    %40 = vector.load %arg2[%c1_39, %c1_40, %c0_41, %c0_42] : memref<3x3x1x16xf32, #tpu.memory_space<vmem>>, vector<1x1x1x16xf32>
    %41 = vector.shape_cast %40 : vector<1x1x1x16xf32> to vector<1x16xf32>
    %42 = vector.broadcast %39 : vector<256x1xf32> to vector<256x16xf32>
    %43 = vector.broadcast %41 : vector<1x16xf32> to vector<256x16xf32>
    %44 = arith.mulf %42, %43 : vector<256x16xf32>
    %45 = arith.addf %37, %44 : vector<256x16xf32>
    %c1_43 = arith.constant 1 : index
    %c2_44 = arith.constant 2 : index
    %c0_45 = arith.constant 0 : index
    %46 = vector.load %arg7[%c1_43, %c2_44, %c0_45] : memref<18x18x1xf32, #tpu.memory_space<vmem>>, vector<16x16x1xf32>
    %47 = vector.shape_cast %46 : vector<16x16x1xf32> to vector<256x1xf32>
    %c1_46 = arith.constant 1 : index
    %c2_47 = arith.constant 2 : index
    %c0_48 = arith.constant 0 : index
    %c0_49 = arith.constant 0 : index
    %48 = vector.load %arg2[%c1_46, %c2_47, %c0_48, %c0_49] : memref<3x3x1x16xf32, #tpu.memory_space<vmem>>, vector<1x1x1x16xf32>
    %49 = vector.shape_cast %48 : vector<1x1x1x16xf32> to vector<1x16xf32>
    %50 = vector.broadcast %47 : vector<256x1xf32> to vector<256x16xf32>
    %51 = vector.broadcast %49 : vector<1x16xf32> to vector<256x16xf32>
    %52 = arith.mulf %50, %51 : vector<256x16xf32>
    %53 = arith.addf %45, %52 : vector<256x16xf32>
    %c2_50 = arith.constant 2 : index
    %c0_51 = arith.constant 0 : index
    %c0_52 = arith.constant 0 : index
    %54 = vector.load %arg7[%c2_50, %c0_51, %c0_52] : memref<18x18x1xf32, #tpu.memory_space<vmem>>, vector<16x16x1xf32>
    %55 = vector.shape_cast %54 : vector<16x16x1xf32> to vector<256x1xf32>
    %c2_53 = arith.constant 2 : index
    %c0_54 = arith.constant 0 : index
    %c0_55 = arith.constant 0 : index
    %c0_56 = arith.constant 0 : index
    %56 = vector.load %arg2[%c2_53, %c0_54, %c0_55, %c0_56] : memref<3x3x1x16xf32, #tpu.memory_space<vmem>>, vector<1x1x1x16xf32>
    %57 = vector.shape_cast %56 : vector<1x1x1x16xf32> to vector<1x16xf32>
    %58 = vector.broadcast %55 : vector<256x1xf32> to vector<256x16xf32>
    %59 = vector.broadcast %57 : vector<1x16xf32> to vector<256x16xf32>
    %60 = arith.mulf %58, %59 : vector<256x16xf32>
    %61 = arith.addf %53, %60 : vector<256x16xf32>
    %c2_57 = arith.constant 2 : index
    %c1_58 = arith.constant 1 : index
    %c0_59 = arith.constant 0 : index
    %62 = vector.load %arg7[%c2_57, %c1_58, %c0_59] : memref<18x18x1xf32, #tpu.memory_space<vmem>>, vector<16x16x1xf32>
    %63 = vector.shape_cast %62 : vector<16x16x1xf32> to vector<256x1xf32>
    %c2_60 = arith.constant 2 : index
    %c1_61 = arith.constant 1 : index
    %c0_62 = arith.constant 0 : index
    %c0_63 = arith.constant 0 : index
    %64 = vector.load %arg2[%c2_60, %c1_61, %c0_62, %c0_63] : memref<3x3x1x16xf32, #tpu.memory_space<vmem>>, vector<1x1x1x16xf32>
    %65 = vector.shape_cast %64 : vector<1x1x1x16xf32> to vector<1x16xf32>
    %66 = vector.broadcast %63 : vector<256x1xf32> to vector<256x16xf32>
    %67 = vector.broadcast %65 : vector<1x16xf32> to vector<256x16xf32>
    %68 = arith.mulf %66, %67 : vector<256x16xf32>
    %69 = arith.addf %61, %68 : vector<256x16xf32>
    %c2_64 = arith.constant 2 : index
    %c2_65 = arith.constant 2 : index
    %c0_66 = arith.constant 0 : index
    %70 = vector.load %arg7[%c2_64, %c2_65, %c0_66] : memref<18x18x1xf32, #tpu.memory_space<vmem>>, vector<16x16x1xf32>
    %71 = vector.shape_cast %70 : vector<16x16x1xf32> to vector<256x1xf32>
    %c2_67 = arith.constant 2 : index
    %c2_68 = arith.constant 2 : index
    %c0_69 = arith.constant 0 : index
    %c0_70 = arith.constant 0 : index
    %72 = vector.load %arg2[%c2_67, %c2_68, %c0_69, %c0_70] : memref<3x3x1x16xf32, #tpu.memory_space<vmem>>, vector<1x1x1x16xf32>
    %73 = vector.shape_cast %72 : vector<1x1x1x16xf32> to vector<1x16xf32>
    %74 = vector.broadcast %71 : vector<256x1xf32> to vector<256x16xf32>
    %75 = vector.broadcast %73 : vector<1x16xf32> to vector<256x16xf32>
    %76 = arith.mulf %74, %75 : vector<256x16xf32>
    %77 = arith.addf %69, %76 : vector<256x16xf32>
    %c0_71 = arith.constant 0 : index
    %c0_72 = arith.constant 0 : index
    %78 = vector.load %arg3[%c0_71, %c0_72] : memref<1x16xf32, #tpu.memory_space<vmem>>, vector<1x16xf32>
    %79 = vector.broadcast %78 : vector<1x16xf32> to vector<256x16xf32>
    %80 = arith.addf %77, %79 : vector<256x16xf32>
    %cst_73 = arith.constant 0.000000e+00 : f32
    %81 = vector.broadcast %cst_73 : f32 to vector<256x16xf32>
    %82 = arith.maximumf %80, %81 : vector<256x16xf32>
    %83 = vector.shape_cast %82 : vector<256x16xf32> to vector<16x16x16xf32>
    %c0_74 = arith.constant 0 : index
    %c0_75 = arith.constant 0 : index
    %c0_76 = arith.constant 0 : index
    %84 = vector.load %arg8[%c0_74, %c0_75, %c0_76] : memref<16x16x16xf32, #tpu.memory_space<vmem>>, vector<16x16x16xf32>
    tpu.vector_store %arg8[%c0_74, %c0_75, %c0_76], %83 {strides = array<i32>} : memref<16x16x16xf32, #tpu.memory_space<vmem>>, vector<16x16x16xf32>,
    %c0_77 = arith.constant 0 : index
    %c0_78 = arith.constant 0 : index
    %c0_79 = arith.constant 0 : index
    %85 = tpu.strided_load %arg8[%c0_77, %c0_78, %c0_79] {strides = array<i32: 1, 2, 1>} : memref<16x16x16xf32, #tpu.memory_space<vmem>>, vector<16x8x16xf32>
    %c0_80 = arith.constant 0 : index
    %c1_81 = arith.constant 1 : index
    %c0_82 = arith.constant 0 : index
    %86 = tpu.strided_load %arg8[%c0_80, %c1_81, %c0_82] {strides = array<i32: 1, 2, 1>} : memref<16x16x16xf32, #tpu.memory_space<vmem>>, vector<16x8x16xf32>
    %87 = arith.maximumf %85, %86 : vector<16x8x16xf32>
    %c0_83 = arith.constant 0 : index
    %c0_84 = arith.constant 0 : index
    %c0_85 = arith.constant 0 : index
    %88 = vector.load %arg9[%c0_83, %c0_84, %c0_85] : memref<16x8x16xf32, #tpu.memory_space<vmem>>, vector<16x8x16xf32>
    tpu.vector_store %arg9[%c0_83, %c0_84, %c0_85], %87 {strides = array<i32>} : memref<16x8x16xf32, #tpu.memory_space<vmem>>, vector<16x8x16xf32>,
    %cst_86 = arith.constant 0.000000e+00 : f32
    %89 = vector.broadcast %cst_86 : f32 to vector<10x10x16xf32>
    %c0_87 = arith.constant 0 : index
    %c0_88 = arith.constant 0 : index
    %c0_89 = arith.constant 0 : index
    %90 = vector.load %arg10[%c0_87, %c0_88, %c0_89] : memref<10x10x16xf32, #tpu.memory_space<vmem>>, vector<10x10x16xf32>
    tpu.vector_store %arg10[%c0_87, %c0_88, %c0_89], %89 {strides = array<i32>} : memref<10x10x16xf32, #tpu.memory_space<vmem>>, vector<10x10x16xf32>,
    %c0_90 = arith.constant 0 : index
    %c0_91 = arith.constant 0 : index
    %c0_92 = arith.constant 0 : index
    %91 = tpu.strided_load %arg9[%c0_90, %c0_91, %c0_92] {strides = array<i32: 2, 1, 1>} : memref<16x8x16xf32, #tpu.memory_space<vmem>>, vector<8x8x16xf32>
    %c1_93 = arith.constant 1 : index
    %c0_94 = arith.constant 0 : index
    %c0_95 = arith.constant 0 : index
    %92 = tpu.strided_load %arg9[%c1_93, %c0_94, %c0_95] {strides = array<i32: 2, 1, 1>} : memref<16x8x16xf32, #tpu.memory_space<vmem>>, vector<8x8x16xf32>
    %93 = arith.maximumf %91, %92 : vector<8x8x16xf32>
    %c1_96 = arith.constant 1 : index
    %c1_97 = arith.constant 1 : index
    %c0_98 = arith.constant 0 : index
    %94 = vector.load %arg10[%c1_96, %c1_97, %c0_98] : memref<10x10x16xf32, #tpu.memory_space<vmem>>, vector<8x8x16xf32>
    tpu.vector_store %arg10[%c1_96, %c1_97, %c0_98], %93 {strides = array<i32>} : memref<10x10x16xf32, #tpu.memory_space<vmem>>, vector<8x8x16xf32>,
    %cst_99 = arith.constant 0.000000e+00 : f32
    %95 = vector.broadcast %cst_99 : f32 to vector<64x32xf32>
    %c0_100 = arith.constant 0 : index
    %c0_101 = arith.constant 0 : index
    %c0_102 = arith.constant 0 : index
    %96 = vector.load %arg10[%c0_100, %c0_101, %c0_102] : memref<10x10x16xf32, #tpu.memory_space<vmem>>, vector<8x8x16xf32>
    %97 = vector.shape_cast %96 : vector<8x8x16xf32> to vector<64x16xf32>
    %c0_103 = arith.constant 0 : index
    %c0_104 = arith.constant 0 : index
    %c0_105 = arith.constant 0 : index
    %c0_106 = arith.constant 0 : index
    %98 = vector.load %arg4[%c0_103, %c0_104, %c0_105, %c0_106] : memref<3x3x16x32xf32, #tpu.memory_space<vmem>>, vector<1x1x16x32xf32>
    %99 = vector.shape_cast %98 : vector<1x1x16x32xf32> to vector<16x32xf32>
    %cst_107 = arith.constant dense<0.000000e+00> : vector<64x32xf32>
    %100 = tpu.matmul %97, %99, %cst_107 {dimension_numbers = #tpu.dot_dimension_numbers<[1], [0], [0], [1], [0, 0, 1, 1], [], []>} : vector<64x16xf32>, vector<16x32xf32>, vector<64x32xf32> -> vector<64x32xf32>
    %101 = arith.addf %95, %100 : vector<64x32xf32>
    %c0_108 = arith.constant 0 : index
    %c1_109 = arith.constant 1 : index
    %c0_110 = arith.constant 0 : index
    %102 = vector.load %arg10[%c0_108, %c1_109, %c0_110] : memref<10x10x16xf32, #tpu.memory_space<vmem>>, vector<8x8x16xf32>
    %103 = vector.shape_cast %102 : vector<8x8x16xf32> to vector<64x16xf32>
    %c0_111 = arith.constant 0 : index
    %c1_112 = arith.constant 1 : index
    %c0_113 = arith.constant 0 : index
    %c0_114 = arith.constant 0 : index
    %104 = vector.load %arg4[%c0_111, %c1_112, %c0_113, %c0_114] : memref<3x3x16x32xf32, #tpu.memory_space<vmem>>, vector<1x1x16x32xf32>
    %105 = vector.shape_cast %104 : vector<1x1x16x32xf32> to vector<16x32xf32>
    %cst_115 = arith.constant dense<0.000000e+00> : vector<64x32xf32>
    %106 = tpu.matmul %103, %105, %cst_115 {dimension_numbers = #tpu.dot_dimension_numbers<[1], [0], [0], [1], [0, 0, 1, 1], [], []>} : vector<64x16xf32>, vector<16x32xf32>, vector<64x32xf32> -> vector<64x32xf32>
    %107 = arith.addf %101, %106 : vector<64x32xf32>
    %c0_116 = arith.constant 0 : index
    %c2_117 = arith.constant 2 : index
    %c0_118 = arith.constant 0 : index
    %108 = vector.load %arg10[%c0_116, %c2_117, %c0_118] : memref<10x10x16xf32, #tpu.memory_space<vmem>>, vector<8x8x16xf32>
    %109 = vector.shape_cast %108 : vector<8x8x16xf32> to vector<64x16xf32>
    %c0_119 = arith.constant 0 : index
    %c2_120 = arith.constant 2 : index
    %c0_121 = arith.constant 0 : index
    %c0_122 = arith.constant 0 : index
    %110 = vector.load %arg4[%c0_119, %c2_120, %c0_121, %c0_122] : memref<3x3x16x32xf32, #tpu.memory_space<vmem>>, vector<1x1x16x32xf32>
    %111 = vector.shape_cast %110 : vector<1x1x16x32xf32> to vector<16x32xf32>
    %cst_123 = arith.constant dense<0.000000e+00> : vector<64x32xf32>
    %112 = tpu.matmul %109, %111, %cst_123 {dimension_numbers = #tpu.dot_dimension_numbers<[1], [0], [0], [1], [0, 0, 1, 1], [], []>} : vector<64x16xf32>, vector<16x32xf32>, vector<64x32xf32> -> vector<64x32xf32>
    %113 = arith.addf %107, %112 : vector<64x32xf32>
    %c1_124 = arith.constant 1 : index
    %c0_125 = arith.constant 0 : index
    %c0_126 = arith.constant 0 : index
    %114 = vector.load %arg10[%c1_124, %c0_125, %c0_126] : memref<10x10x16xf32, #tpu.memory_space<vmem>>, vector<8x8x16xf32>
    %115 = vector.shape_cast %114 : vector<8x8x16xf32> to vector<64x16xf32>
    %c1_127 = arith.constant 1 : index
    %c0_128 = arith.constant 0 : index
    %c0_129 = arith.constant 0 : index
    %c0_130 = arith.constant 0 : index
    %116 = vector.load %arg4[%c1_127, %c0_128, %c0_129, %c0_130] : memref<3x3x16x32xf32, #tpu.memory_space<vmem>>, vector<1x1x16x32xf32>
    %117 = vector.shape_cast %116 : vector<1x1x16x32xf32> to vector<16x32xf32>
    %cst_131 = arith.constant dense<0.000000e+00> : vector<64x32xf32>
    %118 = tpu.matmul %115, %117, %cst_131 {dimension_numbers = #tpu.dot_dimension_numbers<[1], [0], [0], [1], [0, 0, 1, 1], [], []>} : vector<64x16xf32>, vector<16x32xf32>, vector<64x32xf32> -> vector<64x32xf32>
    %119 = arith.addf %113, %118 : vector<64x32xf32>
    %c1_132 = arith.constant 1 : index
    %c1_133 = arith.constant 1 : index
    %c0_134 = arith.constant 0 : index
    %120 = vector.load %arg10[%c1_132, %c1_133, %c0_134] : memref<10x10x16xf32, #tpu.memory_space<vmem>>, vector<8x8x16xf32>
    %121 = vector.shape_cast %120 : vector<8x8x16xf32> to vector<64x16xf32>
    %c1_135 = arith.constant 1 : index
    %c1_136 = arith.constant 1 : index
    %c0_137 = arith.constant 0 : index
    %c0_138 = arith.constant 0 : index
    %122 = vector.load %arg4[%c1_135, %c1_136, %c0_137, %c0_138] : memref<3x3x16x32xf32, #tpu.memory_space<vmem>>, vector<1x1x16x32xf32>
    %123 = vector.shape_cast %122 : vector<1x1x16x32xf32> to vector<16x32xf32>
    %cst_139 = arith.constant dense<0.000000e+00> : vector<64x32xf32>
    %124 = tpu.matmul %121, %123, %cst_139 {dimension_numbers = #tpu.dot_dimension_numbers<[1], [0], [0], [1], [0, 0, 1, 1], [], []>} : vector<64x16xf32>, vector<16x32xf32>, vector<64x32xf32> -> vector<64x32xf32>
    %125 = arith.addf %119, %124 : vector<64x32xf32>
    %c1_140 = arith.constant 1 : index
    %c2_141 = arith.constant 2 : index
    %c0_142 = arith.constant 0 : index
    %126 = vector.load %arg10[%c1_140, %c2_141, %c0_142] : memref<10x10x16xf32, #tpu.memory_space<vmem>>, vector<8x8x16xf32>
    %127 = vector.shape_cast %126 : vector<8x8x16xf32> to vector<64x16xf32>
    %c1_143 = arith.constant 1 : index
    %c2_144 = arith.constant 2 : index
    %c0_145 = arith.constant 0 : index
    %c0_146 = arith.constant 0 : index
    %128 = vector.load %arg4[%c1_143, %c2_144, %c0_145, %c0_146] : memref<3x3x16x32xf32, #tpu.memory_space<vmem>>, vector<1x1x16x32xf32>
    %129 = vector.shape_cast %128 : vector<1x1x16x32xf32> to vector<16x32xf32>
    %cst_147 = arith.constant dense<0.000000e+00> : vector<64x32xf32>
    %130 = tpu.matmul %127, %129, %cst_147 {dimension_numbers = #tpu.dot_dimension_numbers<[1], [0], [0], [1], [0, 0, 1, 1], [], []>} : vector<64x16xf32>, vector<16x32xf32>, vector<64x32xf32> -> vector<64x32xf32>
    %131 = arith.addf %125, %130 : vector<64x32xf32>
    %c2_148 = arith.constant 2 : index
    %c0_149 = arith.constant 0 : index
    %c0_150 = arith.constant 0 : index
    %132 = vector.load %arg10[%c2_148, %c0_149, %c0_150] : memref<10x10x16xf32, #tpu.memory_space<vmem>>, vector<8x8x16xf32>
    %133 = vector.shape_cast %132 : vector<8x8x16xf32> to vector<64x16xf32>
    %c2_151 = arith.constant 2 : index
    %c0_152 = arith.constant 0 : index
    %c0_153 = arith.constant 0 : index
    %c0_154 = arith.constant 0 : index
    %134 = vector.load %arg4[%c2_151, %c0_152, %c0_153, %c0_154] : memref<3x3x16x32xf32, #tpu.memory_space<vmem>>, vector<1x1x16x32xf32>
    %135 = vector.shape_cast %134 : vector<1x1x16x32xf32> to vector<16x32xf32>
    %cst_155 = arith.constant dense<0.000000e+00> : vector<64x32xf32>
    %136 = tpu.matmul %133, %135, %cst_155 {dimension_numbers = #tpu.dot_dimension_numbers<[1], [0], [0], [1], [0, 0, 1, 1], [], []>} : vector<64x16xf32>, vector<16x32xf32>, vector<64x32xf32> -> vector<64x32xf32>
    %137 = arith.addf %131, %136 : vector<64x32xf32>
    %c2_156 = arith.constant 2 : index
    %c1_157 = arith.constant 1 : index
    %c0_158 = arith.constant 0 : index
    %138 = vector.load %arg10[%c2_156, %c1_157, %c0_158] : memref<10x10x16xf32, #tpu.memory_space<vmem>>, vector<8x8x16xf32>
    %139 = vector.shape_cast %138 : vector<8x8x16xf32> to vector<64x16xf32>
    %c2_159 = arith.constant 2 : index
    %c1_160 = arith.constant 1 : index
    %c0_161 = arith.constant 0 : index
    %c0_162 = arith.constant 0 : index
    %140 = vector.load %arg4[%c2_159, %c1_160, %c0_161, %c0_162] : memref<3x3x16x32xf32, #tpu.memory_space<vmem>>, vector<1x1x16x32xf32>
    %141 = vector.shape_cast %140 : vector<1x1x16x32xf32> to vector<16x32xf32>
    %cst_163 = arith.constant dense<0.000000e+00> : vector<64x32xf32>
    %142 = tpu.matmul %139, %141, %cst_163 {dimension_numbers = #tpu.dot_dimension_numbers<[1], [0], [0], [1], [0, 0, 1, 1], [], []>} : vector<64x16xf32>, vector<16x32xf32>, vector<64x32xf32> -> vector<64x32xf32>
    %143 = arith.addf %137, %142 : vector<64x32xf32>
    %c2_164 = arith.constant 2 : index
    %c2_165 = arith.constant 2 : index
    %c0_166 = arith.constant 0 : index
    %144 = vector.load %arg10[%c2_164, %c2_165, %c0_166] : memref<10x10x16xf32, #tpu.memory_space<vmem>>, vector<8x8x16xf32>
    %145 = vector.shape_cast %144 : vector<8x8x16xf32> to vector<64x16xf32>
    %c2_167 = arith.constant 2 : index
    %c2_168 = arith.constant 2 : index
    %c0_169 = arith.constant 0 : index
    %c0_170 = arith.constant 0 : index
    %146 = vector.load %arg4[%c2_167, %c2_168, %c0_169, %c0_170] : memref<3x3x16x32xf32, #tpu.memory_space<vmem>>, vector<1x1x16x32xf32>
    %147 = vector.shape_cast %146 : vector<1x1x16x32xf32> to vector<16x32xf32>
    %cst_171 = arith.constant dense<0.000000e+00> : vector<64x32xf32>
    %148 = tpu.matmul %145, %147, %cst_171 {dimension_numbers = #tpu.dot_dimension_numbers<[1], [0], [0], [1], [0, 0, 1, 1], [], []>} : vector<64x16xf32>, vector<16x32xf32>, vector<64x32xf32> -> vector<64x32xf32>
    %149 = arith.addf %143, %148 : vector<64x32xf32>
    %c0_172 = arith.constant 0 : index
    %c0_173 = arith.constant 0 : index
    %150 = vector.load %arg5[%c0_172, %c0_173] : memref<1x32xf32, #tpu.memory_space<vmem>>, vector<1x32xf32>
    %151 = vector.broadcast %150 : vector<1x32xf32> to vector<64x32xf32>
    %152 = arith.addf %149, %151 : vector<64x32xf32>
    %cst_174 = arith.constant 0.000000e+00 : f32
    %153 = vector.broadcast %cst_174 : f32 to vector<64x32xf32>
    %154 = arith.maximumf %152, %153 : vector<64x32xf32>
    %155 = vector.shape_cast %154 : vector<64x32xf32> to vector<8x8x32xf32>
    %c0_175 = arith.constant 0 : index
    %c0_176 = arith.constant 0 : index
    %c0_177 = arith.constant 0 : index
    %156 = vector.load %arg11[%c0_175, %c0_176, %c0_177] : memref<8x8x32xf32, #tpu.memory_space<vmem>>, vector<8x8x32xf32>
    tpu.vector_store %arg11[%c0_175, %c0_176, %c0_177], %155 {strides = array<i32>} : memref<8x8x32xf32, #tpu.memory_space<vmem>>, vector<8x8x32xf32>,
    %c0_178 = arith.constant 0 : index
    %c0_179 = arith.constant 0 : index
    %c0_180 = arith.constant 0 : index
    %157 = tpu.strided_load %arg11[%c0_178, %c0_179, %c0_180] {strides = array<i32: 1, 2, 1>} : memref<8x8x32xf32, #tpu.memory_space<vmem>>, vector<8x4x32xf32>
    %c0_181 = arith.constant 0 : index
    %c1_182 = arith.constant 1 : index
    %c0_183 = arith.constant 0 : index
    %158 = tpu.strided_load %arg11[%c0_181, %c1_182, %c0_183] {strides = array<i32: 1, 2, 1>} : memref<8x8x32xf32, #tpu.memory_space<vmem>>, vector<8x4x32xf32>
    %159 = arith.maximumf %157, %158 : vector<8x4x32xf32>
    %c0_184 = arith.constant 0 : index
    %c0_185 = arith.constant 0 : index
    %c0_186 = arith.constant 0 : index
    %160 = vector.load %arg12[%c0_184, %c0_185, %c0_186] : memref<8x4x32xf32, #tpu.memory_space<vmem>>, vector<8x4x32xf32>
    tpu.vector_store %arg12[%c0_184, %c0_185, %c0_186], %159 {strides = array<i32>} : memref<8x4x32xf32, #tpu.memory_space<vmem>>, vector<8x4x32xf32>,
    %c0_187 = arith.constant 0 : index
    %c0_188 = arith.constant 0 : index
    %c0_189 = arith.constant 0 : index
    %161 = tpu.strided_load %arg12[%c0_187, %c0_188, %c0_189] {strides = array<i32: 2, 1, 1>} : memref<8x4x32xf32, #tpu.memory_space<vmem>>, vector<4x4x32xf32>
    %c1_190 = arith.constant 1 : index
    %c0_191 = arith.constant 0 : index
    %c0_192 = arith.constant 0 : index
    %162 = tpu.strided_load %arg12[%c1_190, %c0_191, %c0_192] {strides = array<i32: 2, 1, 1>} : memref<8x4x32xf32, #tpu.memory_space<vmem>>, vector<4x4x32xf32>
    %163 = arith.maximumf %161, %162 : vector<4x4x32xf32>
    %c0_193 = arith.constant 0 : index
    %c0_194 = arith.constant 0 : index
    %c0_195 = arith.constant 0 : index
    %c0_196 = arith.constant 0 : index
    %164 = vector.load %arg6[%c0_193, %c0_194, %c0_195, %c0_196] : memref<1x4x4x32xf32, #tpu.memory_space<vmem>>, vector<1x4x4x32xf32>
    %165 = vector.shape_cast %164 : vector<1x4x4x32xf32> to vector<4x4x32xf32>
    %166 = vector.shape_cast %163 : vector<4x4x32xf32> to vector<1x4x4x32xf32>
    tpu.vector_store %arg6[%c0_193, %c0_194, %c0_195, %c0_196], %166 {strides = array<i32>} : memref<1x4x4x32xf32, #tpu.memory_space<vmem>>, vector<1x4x4x32xf32>,
    return
  }
  func.func @transform_0(%arg0: i32) -> (i32, i32, i32, i32) {
    %c0_i32 = arith.constant 0 : i32
    %c0_i32_0 = arith.constant 0 : i32
    %c0_i32_1 = arith.constant 0 : i32
    %c0_i32_2 = arith.constant 0 : i32
    return %arg0, %c0_i32, %c0_i32_0, %c0_i32_1 : i32, i32, i32, i32
  }
  func.func @transform_1(%arg0: i32) -> (i32, i32, i32, i32) {
    %c0_i32 = arith.constant 0 : i32
    %c0_i32_0 = arith.constant 0 : i32
    %c0_i32_1 = arith.constant 0 : i32
    %c0_i32_2 = arith.constant 0 : i32
    %c0_i32_3 = arith.constant 0 : i32
    return %c0_i32, %c0_i32_0, %c0_i32_1, %c0_i32_2 : i32, i32, i32, i32
  }
  func.func @transform_2(%arg0: i32) -> (i32, i32) {
    %c0_i32 = arith.constant 0 : i32
    %c0_i32_0 = arith.constant 0 : i32
    %c0_i32_1 = arith.constant 0 : i32
    return %c0_i32, %c0_i32_0 : i32, i32
  }
  func.func @transform_3(%arg0: i32) -> (i32, i32, i32, i32) {
    %c0_i32 = arith.constant 0 : i32
    %c0_i32_0 = arith.constant 0 : i32
    %c0_i32_1 = arith.constant 0 : i32
    %c0_i32_2 = arith.constant 0 : i32
    %c0_i32_3 = arith.constant 0 : i32
    return %c0_i32, %c0_i32_0, %c0_i32_1, %c0_i32_2 : i32, i32, i32, i32
  }
  func.func @transform_4(%arg0: i32) -> (i32, i32) {
    %c0_i32 = arith.constant 0 : i32
    %c0_i32_0 = arith.constant 0 : i32
    %c0_i32_1 = arith.constant 0 : i32
    return %c0_i32, %c0_i32_0 : i32, i32
  }
  func.func @transform_5(%arg0: i32) -> (i32, i32, i32, i32) {
    %c0_i32 = arith.constant 0 : i32
    %c0_i32_0 = arith.constant 0 : i32
    %c0_i32_1 = arith.constant 0 : i32
    %c0_i32_2 = arith.constant 0 : i32
    return %arg0, %c0_i32, %c0_i32_0, %c0_i32_1 : i32, i32, i32, i32
  }
}

module attributes {stable_mosaic.version = 11 : i64} {
  func.func @_mlp_softmax_kernel(%arg0: memref<2x512xf32, #tpu.memory_space<vmem>>, %arg1: memref<512x512xf32, #tpu.memory_space<vmem>>, %arg2: memref<1x512xf32, #tpu.memory_space<vmem>>, %arg3: memref<512x256xf32, #tpu.memory_space<vmem>>, %arg4: memref<1x256xf32, #tpu.memory_space<vmem>>, %arg5: memref<256x128xf32, #tpu.memory_space<vmem>>, %arg6: memref<1x128xf32, #tpu.memory_space<vmem>>, %arg7: memref<128x4xf32, #tpu.memory_space<vmem>>, %arg8: memref<1x4xf32, #tpu.memory_space<vmem>>, %arg9: memref<2x4xf32, #tpu.memory_space<vmem>>) attributes {dimension_semantics = [], scalar_prefetch = 0 : i64, scratch_operands = 0 : i64, tpu.core_type = #tpu.core_type<tc>} {
    %c0 = arith.constant 0 : index
    %c0_0 = arith.constant 0 : index
    %0 = vector.load %arg0[%c0, %c0_0] : memref<2x512xf32, #tpu.memory_space<vmem>>, vector<2x512xf32>
    %c0_1 = arith.constant 0 : index
    %c0_2 = arith.constant 0 : index
    %1 = vector.load %arg1[%c0_1, %c0_2] : memref<512x512xf32, #tpu.memory_space<vmem>>, vector<512x512xf32>
    %cst = arith.constant dense<0.000000e+00> : vector<2x512xf32>
    %2 = tpu.matmul %0, %1, %cst {dimension_numbers = #tpu.dot_dimension_numbers<[1], [0], [0], [1], [0, 0, 1, 1], [], []>} : vector<2x512xf32>, vector<512x512xf32>, vector<2x512xf32> -> vector<2x512xf32>
    %c0_3 = arith.constant 0 : index
    %c0_4 = arith.constant 0 : index
    %3 = vector.load %arg2[%c0_3, %c0_4] : memref<1x512xf32, #tpu.memory_space<vmem>>, vector<1x512xf32>
    %4 = vector.broadcast %3 : vector<1x512xf32> to vector<2x512xf32>
    %5 = arith.addf %2, %4 : vector<2x512xf32>
    %cst_5 = arith.constant 0.000000e+00 : f32
    %6 = vector.broadcast %cst_5 : f32 to vector<2x512xf32>
    %7 = arith.maximumf %5, %6 : vector<2x512xf32>
    %c0_6 = arith.constant 0 : index
    %c0_7 = arith.constant 0 : index
    %8 = vector.load %arg3[%c0_6, %c0_7] : memref<512x256xf32, #tpu.memory_space<vmem>>, vector<512x256xf32>
    %cst_8 = arith.constant dense<0.000000e+00> : vector<2x256xf32>
    %9 = tpu.matmul %7, %8, %cst_8 {dimension_numbers = #tpu.dot_dimension_numbers<[1], [0], [0], [1], [0, 0, 1, 1], [], []>} : vector<2x512xf32>, vector<512x256xf32>, vector<2x256xf32> -> vector<2x256xf32>
    %c0_9 = arith.constant 0 : index
    %c0_10 = arith.constant 0 : index
    %10 = vector.load %arg4[%c0_9, %c0_10] : memref<1x256xf32, #tpu.memory_space<vmem>>, vector<1x256xf32>
    %11 = vector.broadcast %10 : vector<1x256xf32> to vector<2x256xf32>
    %12 = arith.addf %9, %11 : vector<2x256xf32>
    %cst_11 = arith.constant 0.000000e+00 : f32
    %13 = vector.broadcast %cst_11 : f32 to vector<2x256xf32>
    %14 = arith.maximumf %12, %13 : vector<2x256xf32>
    %c0_12 = arith.constant 0 : index
    %c0_13 = arith.constant 0 : index
    %15 = vector.load %arg5[%c0_12, %c0_13] : memref<256x128xf32, #tpu.memory_space<vmem>>, vector<256x128xf32>
    %cst_14 = arith.constant dense<0.000000e+00> : vector<2x128xf32>
    %16 = tpu.matmul %14, %15, %cst_14 {dimension_numbers = #tpu.dot_dimension_numbers<[1], [0], [0], [1], [0, 0, 1, 1], [], []>} : vector<2x256xf32>, vector<256x128xf32>, vector<2x128xf32> -> vector<2x128xf32>
    %c0_15 = arith.constant 0 : index
    %c0_16 = arith.constant 0 : index
    %17 = vector.load %arg6[%c0_15, %c0_16] : memref<1x128xf32, #tpu.memory_space<vmem>>, vector<1x128xf32>
    %18 = vector.broadcast %17 : vector<1x128xf32> to vector<2x128xf32>
    %19 = arith.addf %16, %18 : vector<2x128xf32>
    %cst_17 = arith.constant 0.000000e+00 : f32
    %20 = vector.broadcast %cst_17 : f32 to vector<2x128xf32>
    %21 = arith.maximumf %19, %20 : vector<2x128xf32>
    %c0_18 = arith.constant 0 : index
    %c0_19 = arith.constant 0 : index
    %22 = vector.load %arg7[%c0_18, %c0_19] : memref<128x4xf32, #tpu.memory_space<vmem>>, vector<128x4xf32>
    %cst_20 = arith.constant dense<0.000000e+00> : vector<2x4xf32>
    %23 = tpu.matmul %21, %22, %cst_20 {dimension_numbers = #tpu.dot_dimension_numbers<[1], [0], [0], [1], [0, 0, 1, 1], [], []>} : vector<2x128xf32>, vector<128x4xf32>, vector<2x4xf32> -> vector<2x4xf32>
    %c0_21 = arith.constant 0 : index
    %c0_22 = arith.constant 0 : index
    %24 = vector.load %arg8[%c0_21, %c0_22] : memref<1x4xf32, #tpu.memory_space<vmem>>, vector<1x4xf32>
    %25 = vector.broadcast %24 : vector<1x4xf32> to vector<2x4xf32>
    %26 = arith.addf %23, %25 : vector<2x4xf32>
    %cst_23 = arith.constant dense<0xFF800000> : vector<2xf32>
    %27 = vector.multi_reduction <maximumf>, %26, %cst_23 [1] : vector<2x4xf32> to vector<2xf32>
    %28 = vector.shape_cast %27 : vector<2xf32> to vector<2x1xf32>
    %29 = vector.broadcast %28 : vector<2x1xf32> to vector<2x4xf32>
    %30 = arith.subf %26, %29 : vector<2x4xf32>
    %31 = math.exp %30 : vector<2x4xf32>
    %cst_24 = arith.constant dense<0.000000e+00> : vector<2xf32>
    %32 = vector.multi_reduction <add>, %31, %cst_24 [1] : vector<2x4xf32> to vector<2xf32>
    %33 = vector.shape_cast %32 : vector<2xf32> to vector<2x1xf32>
    %34 = vector.broadcast %33 : vector<2x1xf32> to vector<2x4xf32>
    %35 = arith.divf %31, %34 : vector<2x4xf32>
    %c0_25 = arith.constant 0 : index
    %c0_26 = arith.constant 0 : index
    %36 = vector.load %arg9[%c0_25, %c0_26] : memref<2x4xf32, #tpu.memory_space<vmem>>, vector<2x4xf32>
    tpu.vector_store %arg9[%c0_25, %c0_26], %35 {strides = array<i32>} : memref<2x4xf32, #tpu.memory_space<vmem>>, vector<2x4xf32>,
    return
  }
}

</mosaic_0001>

<llo_original>
// kernel: actor_discrete_image_forward.3
$region0: #{actor_discrete_image_forward.3}
  #allocation0 [shape = 'u32[]', space=smem, size = 0x4, offset = 0x4, fixed_abs, tag = 'smem constant byte address 0x4 - core index']
  #allocation1 [shape = 'u32[144,128]{1,0:T(1,128)}', space=vmem, size = 0x12000, scoped, tag = 'internal scratch']
  %s0 = inlined_call_operand.vmem [shape: f32[2,512], index: 0, kind: input, shape index: {}]
  %s1 = inlined_call_operand.hbm [shape: f32[512,512], index: 1, kind: input, shape index: {}]
  %s2 = inlined_call_operand.vmem [shape: f32[1,512], index: 2, kind: input, shape index: {}]
  %s3 = inlined_call_operand.vmem [shape: f32[512,256], index: 3, kind: input, shape index: {}]
  %s4 = inlined_call_operand.hbm [shape: f32[1,256], index: 4, kind: input, shape index: {}]
  %s5 = inlined_call_operand.vmem [shape: f32[256,128], index: 5, kind: input, shape index: {}]
  %s6 = inlined_call_operand.hbm [shape: f32[1,128], index: 6, kind: input, shape index: {}]
  %s7 = inlined_call_operand.vmem [shape: f32[128,4], index: 7, kind: input, shape index: {}]
  %s8 = inlined_call_operand.hbm [shape: f32[1,4], index: 8, kind: input, shape index: {}]
  %s9 = inlined_call_operand.hbm [shape: f32[2,4], index: 9, kind: output, shape index: {}]
  %s10 = sld [smem:[#allocation0]]
  $region62: #{actor_discrete_image_forward.3} parent=0
    _
  %s12 = ssub.s32 1, %s10
  %s13 = scalar_select 0, %s12, %s10
  $region1: #{actor_discrete_image_forward.3} parent=0
    #allocation2 [shape = 'u8[1048576]{0}', space=vmem, size = 0x100000, scoped, tag = 'input window, operand 1, single buffered']
    #allocation3 [shape = 's32[1]{0}', space=sflag, size = 0x4, scoped, tag = 'scoped memory for actor_discrete_image_forward.3']
    #allocation4 [shape = 's32[1]{0}', space=sflag, size = 0x4, scoped, tag = 'scoped memory for actor_discrete_image_forward.3']
    #allocation5 [shape = 'u8[1024]{0}', space=vmem, size = 0x400, scoped, tag = 'input window, operand 4, single buffered']
    #allocation6 [shape = 's32[1]{0}', space=sflag, size = 0x4, scoped, tag = 'scoped memory for actor_discrete_image_forward.3']
    #allocation7 [shape = 'u8[512]{0}', space=vmem, size = 0x400, scoped, tag = 'input window, operand 6, single buffered']
    #allocation8 [shape = 'u8[512]{0}', space=vmem, size = 0x400, scoped, tag = 'input window, operand 8, single buffered']
    #allocation9 [shape = 's32[1]{0}', space=sflag, size = 0x4, scoped, tag = 'scoped memory for actor_discrete_image_forward.3']
    #allocation10 [shape = 'u8[1024]{0}', space=vmem, size = 0x400, scoped, tag = 'output window, operand 0, single buffered']
    %14 = vsyncpa [#allocation3], 0
    %15 = vsyncpa [#allocation6], 0
    %16 = vsyncpa [#allocation9], 0
    %17 = vsyncpa [#allocation4], 0
    // Predicated region
    $region2: #{actor_discrete_image_forward.3} parent=1 // pred_check
      _
    $region3: #{actor_discrete_image_forward.3} parent=1 // pred_check_branch
      %19 = sbr.rel (0) target = $region5
    $region4: #{actor_discrete_image_forward.3} parent=1 // pred_region
      _
    $region5: #{actor_discrete_image_forward.3} parent=1 // pred_fallthru
      _
    // Predicated region
    $region6: #{actor_discrete_image_forward.3} parent=1 // pred_check
      _
    $region7: #{actor_discrete_image_forward.3} parent=1 // pred_check_branch
      %21 = sbr.rel (0) target = $region9
    $region8: #{actor_discrete_image_forward.3} parent=1 // pred_region
      %s23 = ssub.s32 32768, 32768
      %24 = vsyncadd [#allocation3], %s23
      %s25 = sshll.u32 [#allocation2], 4
      %s26 = int_to_ptr.vmem [resolvable:$true] %s25
      %31 = dma.hbm_to_vmem [thread:$0]  %s1, 32768, %s26, [#allocation3], 512, 512, 32
    $region9: #{actor_discrete_image_forward.3} parent=1 // pred_fallthru
      _
    // Predicated region
    $region10: #{actor_discrete_image_forward.3} parent=1 // pred_check
      _
    $region11: #{actor_discrete_image_forward.3} parent=1 // pred_check_branch
      %33 = sbr.rel (0) target = $region13
    $region12: #{actor_discrete_image_forward.3} parent=1 // pred_region
      _
    $region13: #{actor_discrete_image_forward.3} parent=1 // pred_fallthru
      _
    // Predicated region
    $region14: #{actor_discrete_image_forward.3} parent=1 // pred_check
      _
    $region15: #{actor_discrete_image_forward.3} parent=1 // pred_check_branch
      %35 = sbr.rel (0) target = $region17
    $region16: #{actor_discrete_image_forward.3} parent=1 // pred_region
      _
    $region17: #{actor_discrete_image_forward.3} parent=1 // pred_fallthru
      _
    // Predicated region
    $region18: #{actor_discrete_image_forward.3} parent=1 // pred_check
      _
    $region19: #{actor_discrete_image_forward.3} parent=1 // pred_check_branch
      %37 = sbr.rel (0) target = $region21
    $region20: #{actor_discrete_image_forward.3} parent=1 // pred_region
      %s39 = ssub.s32 32, 32
      %40 = vsyncadd [#allocation6], %s39
      %s42 = sshll.u32 [#allocation5], 4
      %s43 = int_to_ptr.vmem [resolvable:$true] %s42
      %45 = dma.hbm_to_vmem [thread:$0]  %s4, 32, %s43, [#allocation6]
    $region21: #{actor_discrete_image_forward.3} parent=1 // pred_fallthru
      _
    // Predicated region
    $region22: #{actor_discrete_image_forward.3} parent=1 // pred_check
      _
    $region23: #{actor_discrete_image_forward.3} parent=1 // pred_check_branch
      %47 = sbr.rel (0) target = $region25
    $region24: #{actor_discrete_image_forward.3} parent=1 // pred_region
      _
    $region25: #{actor_discrete_image_forward.3} parent=1 // pred_fallthru
      _
    // Predicated region
    $region26: #{actor_discrete_image_forward.3} parent=1 // pred_check
      _
    $region27: #{actor_discrete_image_forward.3} parent=1 // pred_check_branch
      %49 = sbr.rel (0) target = $region29
    $region28: #{actor_discrete_image_forward.3} parent=1 // pred_region
      %s51 = ssub.s32 16, 16
      %52 = vsyncadd [#allocation6], %s51
      %s54 = sshll.u32 [#allocation7], 4
      %s55 = int_to_ptr.vmem [resolvable:$true] %s54
      %57 = dma.hbm_to_vmem [thread:$0]  %s6, 16, %s55, [#allocation6]
    $region29: #{actor_discrete_image_forward.3} parent=1 // pred_fallthru
      _
    // Predicated region
    $region30: #{actor_discrete_image_forward.3} parent=1 // pred_check
      _
    $region31: #{actor_discrete_image_forward.3} parent=1 // pred_check_branch
      %59 = sbr.rel (0) target = $region33
    $region32: #{actor_discrete_image_forward.3} parent=1 // pred_region
      _
    $region33: #{actor_discrete_image_forward.3} parent=1 // pred_fallthru
      _
    // Predicated region
    $region34: #{actor_discrete_image_forward.3} parent=1 // pred_check
      _
    $region35: #{actor_discrete_image_forward.3} parent=1 // pred_check_branch
      %61 = sbr.rel (0) target = $region37
    $region36: #{actor_discrete_image_forward.3} parent=1 // pred_region
      %s63 = ssub.s32 16, 16
      %64 = vsyncadd [#allocation9], %s63
      %s66 = sshll.u32 [#allocation8], 4
      %s67 = int_to_ptr.vmem [resolvable:$true] %s66
      %69 = dma.hbm_to_vmem [thread:$0]  %s8, 16, %s67, [#allocation9]
    $region37: #{actor_discrete_image_forward.3} parent=1 // pred_fallthru
      _
    // Predicated region
    $region38: #{actor_discrete_image_forward.3} parent=1 // pred_check
      _
    $region39: #{actor_discrete_image_forward.3} parent=1 // pred_check_branch
      %71 = sbr.rel (0) target = $region41
    $region40: #{actor_discrete_image_forward.3} parent=1 // pred_region
      %72 = dma.done [#allocation3], 32768
    $region41: #{actor_discrete_image_forward.3} parent=1 // pred_fallthru
      _
    // Predicated region
    $region42: #{actor_discrete_image_forward.3} parent=1 // pred_check
      _
    $region43: #{actor_discrete_image_forward.3} parent=1 // pred_check_branch
      %74 = sbr.rel (0) target = $region45
    $region44: #{actor_discrete_image_forward.3} parent=1 // pred_region
      %75 = dma.done [#allocation6], 32
    $region45: #{actor_discrete_image_forward.3} parent=1 // pred_fallthru
      _
    // Predicated region
    $region46: #{actor_discrete_image_forward.3} parent=1 // pred_check
      _
    $region47: #{actor_discrete_image_forward.3} parent=1 // pred_check_branch
      %77 = sbr.rel (0) target = $region49
    $region48: #{actor_discrete_image_forward.3} parent=1 // pred_region
      %78 = dma.done [#allocation6], 16
    $region49: #{actor_discrete_image_forward.3} parent=1 // pred_fallthru
      _
    // Predicated region
    $region50: #{actor_discrete_image_forward.3} parent=1 // pred_check
      _
    $region51: #{actor_discrete_image_forward.3} parent=1 // pred_check_branch
      %80 = sbr.rel (0) target = $region53
    $region52: #{actor_discrete_image_forward.3} parent=1 // pred_region
      %81 = dma.done [#allocation9], 16
    $region53: #{actor_discrete_image_forward.3} parent=1 // pred_fallthru
      _
    %v82 = vld [vmem:[%s0] sm:$0xff]
    %v83 = vld [vmem:[#allocation2] sm:$0xff]
    %v84 = vld [vmem:[#allocation2 + $0x8] sm:$0xff]
    %v85 = vld [vmem:[#allocation2 + $0x10] sm:$0xff]
    %v86 = vld [vmem:[#allocation2 + $0x18] sm:$0xff]
    %v87 = vld [vmem:[#allocation2 + $0x20] sm:$0xff]
    %v88 = vld [vmem:[#allocation2 + $0x28] sm:$0xff]
    %v89 = vld [vmem:[#allocation2 + $0x30] sm:$0xff]
    %v90 = vld [vmem:[#allocation2 + $0x38] sm:$0xff]
    %v91 = vld [vmem:[#allocation2 + $0x40] sm:$0xff]
    %v92 = vld [vmem:[#allocation2 + $0x48] sm:$0xff]
    %v93 = vld [vmem:[#allocation2 + $0x50] sm:$0xff]
    %v94 = vld [vmem:[#allocation2 + $0x58] sm:$0xff]
    %v95 = vld [vmem:[#allocation2 + $0x60] sm:$0xff]
    %v96 = vld [vmem:[#allocation2 + $0x68] sm:$0xff]
    %v97 = vld [vmem:[#allocation2 + $0x70] sm:$0xff]
    %v98 = vld [vmem:[#allocation2 + $0x78] sm:$0xff]
    %v99 = vld [vmem:[#allocation2 + $0x80] sm:$0xff]
    %v100 = vld [vmem:[#allocation2 + $0x88] sm:$0xff]
    %v101 = vld [vmem:[#allocation2 + $0x90] sm:$0xff]
    %v102 = vld [vmem:[#allocation2 + $0x98] sm:$0xff]
    %v103 = vld [vmem:[#allocation2 + $0xa0] sm:$0xff]
    %v104 = vld [vmem:[#allocation2 + $0xa8] sm:$0xff]
    %v105 = vld [vmem:[#allocation2 + $0xb0] sm:$0xff]
    %v106 = vld [vmem:[#allocation2 + $0xb8] sm:$0xff]
    %v107 = vld [vmem:[#allocation2 + $0xc0] sm:$0xff]
    %v108 = vld [vmem:[#allocation2 + $0xc8] sm:$0xff]
    %v109 = vld [vmem:[#allocation2 + $0xd0] sm:$0xff]
    %v110 = vld [vmem:[#allocation2 + $0xd8] sm:$0xff]
    %v111 = vld [vmem:[#allocation2 + $0xe0] sm:$0xff]
    %v112 = vld [vmem:[#allocation2 + $0xe8] sm:$0xff]
    %v113 = vld [vmem:[#allocation2 + $0xf0] sm:$0xff]
    %v114 = vld [vmem:[#allocation2 + $0xf8] sm:$0xff]
    %v115 = vld [vmem:[#allocation2 + $0x100] sm:$0xff]
    %v116 = vld [vmem:[#allocation2 + $0x108] sm:$0xff]
    %v117 = vld [vmem:[#allocation2 + $0x110] sm:$0xff]
    %v118 = vld [vmem:[#allocation2 + $0x118] sm:$0xff]
    %v119 = vld [vmem:[#allocation2 + $0x120] sm:$0xff]
    %v120 = vld [vmem:[#allocation2 + $0x128] sm:$0xff]
    %v121 = vld [vmem:[#allocation2 + $0x130] sm:$0xff]
    %v122 = vld [vmem:[#allocation2 + $0x138] sm:$0xff]
    %v123 = vld [vmem:[#allocation2 + $0x140] sm:$0xff]
    %v124 = vld [vmem:[#allocation2 + $0x148] sm:$0xff]
    %v125 = vld [vmem:[#allocation2 + $0x150] sm:$0xff]
    %v126 = vld [vmem:[#allocation2 + $0x158] sm:$0xff]
    %v127 = vld [vmem:[#allocation2 + $0x160] sm:$0xff]
    %v128 = vld [vmem:[#allocation2 + $0x168] sm:$0xff]
    %v129 = vld [vmem:[#allocation2 + $0x170] sm:$0xff]
    %v130 = vld [vmem:[#allocation2 + $0x178] sm:$0xff]
    %v131 = vld [vmem:[#allocation2 + $0x180] sm:$0xff]
    %v132 = vld [vmem:[#allocation2 + $0x188] sm:$0xff]
    %v133 = vld [vmem:[#allocation2 + $0x190] sm:$0xff]
    %v134 = vld [vmem:[#allocation2 + $0x198] sm:$0xff]
    %v135 = vld [vmem:[#allocation2 + $0x1a0] sm:$0xff]
    %v136 = vld [vmem:[#allocation2 + $0x1a8] sm:$0xff]
    %v137 = vld [vmem:[#allocation2 + $0x1b0] sm:$0xff]
    %v138 = vld [vmem:[#allocation2 + $0x1b8] sm:$0xff]
    %v139 = vld [vmem:[#allocation2 + $0x1c0] sm:$0xff]
    %v140 = vld [vmem:[#allocation2 + $0x1c8] sm:$0xff]
    %v141 = vld [vmem:[#allocation2 + $0x1d0] sm:$0xff]
    %v142 = vld [vmem:[#allocation2 + $0x1d8] sm:$0xff]
    %v143 = vld [vmem:[#allocation2 + $0x1e0] sm:$0xff]
    %v144 = vld [vmem:[#allocation2 + $0x1e8] sm:$0xff]
    %v145 = vld [vmem:[#allocation2 + $0x1f0] sm:$0xff]
    %v146 = vld [vmem:[#allocation2 + $0x1f8] sm:$0xff]
    %v147 = vld [vmem:[#allocation2 + $0x200] sm:$0xff]
    %v148 = vld [vmem:[#allocation2 + $0x208] sm:$0xff]
    %v149 = vld [vmem:[#allocation2 + $0x210] sm:$0xff]
    %v150 = vld [vmem:[#allocation2 + $0x218] sm:$0xff]
    %v151 = vld [vmem:[#allocation2 + $0x220] sm:$0xff]
    %v152 = vld [vmem:[#allocation2 + $0x228] sm:$0xff]
    %v153 = vld [vmem:[#allocation2 + $0x230] sm:$0xff]
    %v154 = vld [vmem:[#allocation2 + $0x238] sm:$0xff]
    %v155 = vld [vmem:[#allocation2 + $0x240] sm:$0xff]
    %v156 = vld [vmem:[#allocation2 + $0x248] sm:$0xff]
    %v157 = vld [vmem:[#allocation2 + $0x250] sm:$0xff]
    %v158 = vld [vmem:[#allocation2 + $0x258] sm:$0xff]
    %v159 = vld [vmem:[#allocation2 + $0x260] sm:$0xff]
    %v160 = vld [vmem:[#allocation2 + $0x268] sm:$0xff]
    %v161 = vld [vmem:[#allocation2 + $0x270] sm:$0xff]
    %v162 = vld [vmem:[#allocation2 + $0x278] sm:$0xff]
    %v163 = vld [vmem:[#allocation2 + $0x280] sm:$0xff]
    %v164 = vld [vmem:[#allocation2 + $0x288] sm:$0xff]
    %v165 = vld [vmem:[#allocation2 + $0x290] sm:$0xff]
    %v166 = vld [vmem:[#allocation2 + $0x298] sm:$0xff]
    %v167 = vld [vmem:[#allocation2 + $0x2a0] sm:$0xff]
    %v168 = vld [vmem:[#allocation2 + $0x2a8] sm:$0xff]
    %v169 = vld [vmem:[#allocation2 + $0x2b0] sm:$0xff]
    %v170 = vld [vmem:[#allocation2 + $0x2b8] sm:$0xff]
    %v171 = vld [vmem:[#allocation2 + $0x2c0] sm:$0xff]
    %v172 = vld [vmem:[#allocation2 + $0x2c8] sm:$0xff]
    %v173 = vld [vmem:[#allocation2 + $0x2d0] sm:$0xff]
    %v174 = vld [vmem:[#allocation2 + $0x2d8] sm:$0xff]
    %v175 = vld [vmem:[#allocation2 + $0x2e0] sm:$0xff]
    %v176 = vld [vmem:[#allocation2 + $0x2e8] sm:$0xff]
    %v177 = vld [vmem:[#allocation2 + $0x2f0] sm:$0xff]
    %v178 = vld [vmem:[#allocation2 + $0x2f8] sm:$0xff]
    %v179 = vld [vmem:[#allocation2 + $0x300] sm:$0xff]
    %v180 = vld [vmem:[#allocation2 + $0x308] sm:$0xff]
    %v181 = vld [vmem:[#allocation2 + $0x310] sm:$0xff]
    %v182 = vld [vmem:[#allocation2 + $0x318] sm:$0xff]
    %v183 = vld [vmem:[#allocation2 + $0x320] sm:$0xff]
    %v184 = vld [vmem:[#allocation2 + $0x328] sm:$0xff]
    %v185 = vld [vmem:[#allocation2 + $0x330] sm:$0xff]
    %v186 = vld [vmem:[#allocation2 + $0x338] sm:$0xff]
    %v187 = vld [vmem:[#allocation2 + $0x340] sm:$0xff]
    %v188 = vld [vmem:[#allocation2 + $0x348] sm:$0xff]
    %v189 = vld [vmem:[#allocation2 + $0x350] sm:$0xff]
    %v190 = vld [vmem:[#allocation2 + $0x358] sm:$0xff]
    %v191 = vld [vmem:[#allocation2 + $0x360] sm:$0xff]
    %v192 = vld [vmem:[#allocation2 + $0x368] sm:$0xff]
    %v193 = vld [vmem:[#allocation2 + $0x370] sm:$0xff]
    %v194 = vld [vmem:[#allocation2 + $0x378] sm:$0xff]
    %v195 = vld [vmem:[#allocation2 + $0x380] sm:$0xff]
    %v196 = vld [vmem:[#allocation2 + $0x388] sm:$0xff]
    %v197 = vld [vmem:[#allocation2 + $0x390] sm:$0xff]
    %v198 = vld [vmem:[#allocation2 + $0x398] sm:$0xff]
    %v199 = vld [vmem:[#allocation2 + $0x3a0] sm:$0xff]
    %v200 = vld [vmem:[#allocation2 + $0x3a8] sm:$0xff]
    %v201 = vld [vmem:[#allocation2 + $0x3b0] sm:$0xff]
    %v202 = vld [vmem:[#allocation2 + $0x3b8] sm:$0xff]
    %v203 = vld [vmem:[#allocation2 + $0x3c0] sm:$0xff]
    %v204 = vld [vmem:[#allocation2 + $0x3c8] sm:$0xff]
    %v205 = vld [vmem:[#allocation2 + $0x3d0] sm:$0xff]
    %v206 = vld [vmem:[#allocation2 + $0x3d8] sm:$0xff]
    %v207 = vld [vmem:[#allocation2 + $0x3e0] sm:$0xff]
    %v208 = vld [vmem:[#allocation2 + $0x3e8] sm:$0xff]
    %v209 = vld [vmem:[#allocation2 + $0x3f0] sm:$0xff]
    %v210 = vld [vmem:[#allocation2 + $0x3f8] sm:$0xff]
    %v211 = vld [vmem:[#allocation2 + $0x400] sm:$0xff]
    %v212 = vld [vmem:[#allocation2 + $0x408] sm:$0xff]
    %v213 = vld [vmem:[#allocation2 + $0x410] sm:$0xff]
    %v214 = vld [vmem:[#allocation2 + $0x418] sm:$0xff]
    %v215 = vld [vmem:[#allocation2 + $0x420] sm:$0xff]
    %v216 = vld [vmem:[#allocation2 + $0x428] sm:$0xff]
    %v217 = vld [vmem:[#allocation2 + $0x430] sm:$0xff]
    %v218 = vld [vmem:[#allocation2 + $0x438] sm:$0xff]
    %v219 = vld [vmem:[#allocation2 + $0x440] sm:$0xff]
    %v220 = vld [vmem:[#allocation2 + $0x448] sm:$0xff]
    %v221 = vld [vmem:[#allocation2 + $0x450] sm:$0xff]
    %v222 = vld [vmem:[#allocation2 + $0x458] sm:$0xff]
    %v223 = vld [vmem:[#allocation2 + $0x460] sm:$0xff]
    %v224 = vld [vmem:[#allocation2 + $0x468] sm:$0xff]
    %v225 = vld [vmem:[#allocation2 + $0x470] sm:$0xff]
    %v226 = vld [vmem:[#allocation2 + $0x478] sm:$0xff]
    %v227 = vld [vmem:[#allocation2 + $0x480] sm:$0xff]
    %v228 = vld [vmem:[#allocation2 + $0x488] sm:$0xff]
    %v229 = vld [vmem:[#allocation2 + $0x490] sm:$0xff]
    %v230 = vld [vmem:[#allocation2 + $0x498] sm:$0xff]
    %v231 = vld [vmem:[#allocation2 + $0x4a0] sm:$0xff]
    %v232 = vld [vmem:[#allocation2 + $0x4a8] sm:$0xff]
    %v233 = vld [vmem:[#allocation2 + $0x4b0] sm:$0xff]
    %v234 = vld [vmem:[#allocation2 + $0x4b8] sm:$0xff]
    %v235 = vld [vmem:[#allocation2 + $0x4c0] sm:$0xff]
    %v236 = vld [vmem:[#allocation2 + $0x4c8] sm:$0xff]
    %v237 = vld [vmem:[#allocation2 + $0x4d0] sm:$0xff]
    %v238 = vld [vmem:[#allocation2 + $0x4d8] sm:$0xff]
    %v239 = vld [vmem:[#allocation2 + $0x4e0] sm:$0xff]
    %v240 = vld [vmem:[#allocation2 + $0x4e8] sm:$0xff]
    %v241 = vld [vmem:[#allocation2 + $0x4f0] sm:$0xff]
    %v242 = vld [vmem:[#allocation2 + $0x4f8] sm:$0xff]
    %v243 = vld [vmem:[#allocation2 + $0x500] sm:$0xff]
    %v244 = vld [vmem:[#allocation2 + $0x508] sm:$0xff]
    %v245 = vld [vmem:[#allocation2 + $0x510] sm:$0xff]
    %v246 = vld [vmem:[#allocation2 + $0x518] sm:$0xff]
    %v247 = vld [vmem:[#allocation2 + $0x520] sm:$0xff]
    %v248 = vld [vmem:[#allocation2 + $0x528] sm:$0xff]
    %v249 = vld [vmem:[#allocation2 + $0x530] sm:$0xff]
    %v250 = vld [vmem:[#allocation2 + $0x538] sm:$0xff]
    %v251 = vld [vmem:[#allocation2 + $0x540] sm:$0xff]
    %v252 = vld [vmem:[#allocation2 + $0x548] sm:$0xff]
    %v253 = vld [vmem:[#allocation2 + $0x550] sm:$0xff]
    %v254 = vld [vmem:[#allocation2 + $0x558] sm:$0xff]
    %v255 = vld [vmem:[#allocation2 + $0x560] sm:$0xff]
    %v256 = vld [vmem:[#allocation2 + $0x568] sm:$0xff]
    %v257 = vld [vmem:[#allocation2 + $0x570] sm:$0xff]
    %v258 = vld [vmem:[#allocation2 + $0x578] sm:$0xff]
    %v259 = vld [vmem:[#allocation2 + $0x580] sm:$0xff]
    %v260 = vld [vmem:[#allocation2 + $0x588] sm:$0xff]
    %v261 = vld [vmem:[#allocation2 + $0x590] sm:$0xff]
    %v262 = vld [vmem:[#allocation2 + $0x598] sm:$0xff]
    %v263 = vld [vmem:[#allocation2 + $0x5a0] sm:$0xff]
    %v264 = vld [vmem:[#allocation2 + $0x5a8] sm:$0xff]
    %v265 = vld [vmem:[#allocation2 + $0x5b0] sm:$0xff]
    %v266 = vld [vmem:[#allocation2 + $0x5b8] sm:$0xff]
    %v267 = vld [vmem:[#allocation2 + $0x5c0] sm:$0xff]
    %v268 = vld [vmem:[#allocation2 + $0x5c8] sm:$0xff]
    %v269 = vld [vmem:[#allocation2 + $0x5d0] sm:$0xff]
    %v270 = vld [vmem:[#allocation2 + $0x5d8] sm:$0xff]
    %v271 = vld [vmem:[#allocation2 + $0x5e0] sm:$0xff]
    %v272 = vld [vmem:[#allocation2 + $0x5e8] sm:$0xff]
    %v273 = vld [vmem:[#allocation2 + $0x5f0] sm:$0xff]
    %v274 = vld [vmem:[#allocation2 + $0x5f8] sm:$0xff]
    %v275 = vld [vmem:[#allocation2 + $0x600] sm:$0xff]
    %v276 = vld [vmem:[#allocation2 + $0x608] sm:$0xff]
    %v277 = vld [vmem:[#allocation2 + $0x610] sm:$0xff]
    %v278 = vld [vmem:[#allocation2 + $0x618] sm:$0xff]
    %v279 = vld [vmem:[#allocation2 + $0x620] sm:$0xff]
    %v280 = vld [vmem:[#allocation2 + $0x628] sm:$0xff]
    %v281 = vld [vmem:[#allocation2 + $0x630] sm:$0xff]
    %v282 = vld [vmem:[#allocation2 + $0x638] sm:$0xff]
    %v283 = vld [vmem:[#allocation2 + $0x640] sm:$0xff]
    %v284 = vld [vmem:[#allocation2 + $0x648] sm:$0xff]
    %v285 = vld [vmem:[#allocation2 + $0x650] sm:$0xff]
    %v286 = vld [vmem:[#allocation2 + $0x658] sm:$0xff]
    %v287 = vld [vmem:[#allocation2 + $0x660] sm:$0xff]
    %v288 = vld [vmem:[#allocation2 + $0x668] sm:$0xff]
    %v289 = vld [vmem:[#allocation2 + $0x670] sm:$0xff]
    %v290 = vld [vmem:[#allocation2 + $0x678] sm:$0xff]
    %v291 = vld [vmem:[#allocation2 + $0x680] sm:$0xff]
    %v292 = vld [vmem:[#allocation2 + $0x688] sm:$0xff]
    %v293 = vld [vmem:[#allocation2 + $0x690] sm:$0xff]
    %v294 = vld [vmem:[#allocation2 + $0x698] sm:$0xff]
    %v295 = vld [vmem:[#allocation2 + $0x6a0] sm:$0xff]
    %v296 = vld [vmem:[#allocation2 + $0x6a8] sm:$0xff]
    %v297 = vld [vmem:[#allocation2 + $0x6b0] sm:$0xff]
    %v298 = vld [vmem:[#allocation2 + $0x6b8] sm:$0xff]
    %v299 = vld [vmem:[#allocation2 + $0x6c0] sm:$0xff]
    %v300 = vld [vmem:[#allocation2 + $0x6c8] sm:$0xff]
    %v301 = vld [vmem:[#allocation2 + $0x6d0] sm:$0xff]
    %v302 = vld [vmem:[#allocation2 + $0x6d8] sm:$0xff]
    %v303 = vld [vmem:[#allocation2 + $0x6e0] sm:$0xff]
    %v304 = vld [vmem:[#allocation2 + $0x6e8] sm:$0xff]
    %v305 = vld [vmem:[#allocation2 + $0x6f0] sm:$0xff]
    %v306 = vld [vmem:[#allocation2 + $0x6f8] sm:$0xff]
    %v307 = vld [vmem:[#allocation2 + $0x700] sm:$0xff]
    %v308 = vld [vmem:[#allocation2 + $0x708] sm:$0xff]
    %v309 = vld [vmem:[#allocation2 + $0x710] sm:$0xff]
    %v310 = vld [vmem:[#allocation2 + $0x718] sm:$0xff]
    %v311 = vld [vmem:[#allocation2 + $0x720] sm:$0xff]
    %v312 = vld [vmem:[#allocation2 + $0x728] sm:$0xff]
    %v313 = vld [vmem:[#allocation2 + $0x730] sm:$0xff]
    %v314 = vld [vmem:[#allocation2 + $0x738] sm:$0xff]
    %v315 = vld [vmem:[#allocation2 + $0x740] sm:$0xff]
    %v316 = vld [vmem:[#allocation2 + $0x748] sm:$0xff]
    %v317 = vld [vmem:[#allocation2 + $0x750] sm:$0xff]
    %v318 = vld [vmem:[#allocation2 + $0x758] sm:$0xff]
    %v319 = vld [vmem:[#allocation2 + $0x760] sm:$0xff]
    %v320 = vld [vmem:[#allocation2 + $0x768] sm:$0xff]
    %v321 = vld [vmem:[#allocation2 + $0x770] sm:$0xff]
    %v322 = vld [vmem:[#allocation2 + $0x778] sm:$0xff]
    %v323 = vld [vmem:[#allocation2 + $0x780] sm:$0xff]
    %v324 = vld [vmem:[#allocation2 + $0x788] sm:$0xff]
    %v325 = vld [vmem:[#allocation2 + $0x790] sm:$0xff]
    %v326 = vld [vmem:[#allocation2 + $0x798] sm:$0xff]
    %v327 = vld [vmem:[#allocation2 + $0x7a0] sm:$0xff]
    %v328 = vld [vmem:[#allocation2 + $0x7a8] sm:$0xff]
    %v329 = vld [vmem:[#allocation2 + $0x7b0] sm:$0xff]
    %v330 = vld [vmem:[#allocation2 + $0x7b8] sm:$0xff]
    %v331 = vld [vmem:[#allocation2 + $0x7c0] sm:$0xff]
    %v332 = vld [vmem:[#allocation2 + $0x7c8] sm:$0xff]
    %v333 = vld [vmem:[#allocation2 + $0x7d0] sm:$0xff]
    %v334 = vld [vmem:[#allocation2 + $0x7d8] sm:$0xff]
    %v335 = vld [vmem:[#allocation2 + $0x7e0] sm:$0xff]
    %v336 = vld [vmem:[#allocation2 + $0x7e8] sm:$0xff]
    %v337 = vld [vmem:[#allocation2 + $0x7f0] sm:$0xff]
    %v338 = vld [vmem:[#allocation2 + $0x7f8] sm:$0xff]
    %v339 = vld [vmem:[%s2] sm:$0xf]
    %v341 = vlaneseq
    %v342 = vshrl.u32 %v341, 7
    %v343 = vsub.s32 0, %v342
    %v344 = vrot.slane %v339, %v343
    %v345 = vlaneseq
    %v346 = vshrl.u32 %v345, 7
    %v347 = vsub.s32 1, %v346
    %v348 = vrot.slane %v339, %v347
    %v349 = vlaneseq
    %v350 = vshrl.u32 %v349, 7
    %v351 = vsub.s32 2, %v350
    %v352 = vrot.slane %v339, %v351
    %v353 = vlaneseq
    %v354 = vshrl.u32 %v353, 7
    %v355 = vsub.s32 3, %v354
    %v356 = vrot.slane %v339, %v355
    %v362 = vcombine.high %v82, %v82
    %v364 = vunpack.c.l.s4 1983009808
    %v365 = vunpack.c.0.s8 %v364
    %v366 = vlaneseq
    %v367 = vshrl.u32 %v366, 7
    %v368 = vsub.s32 %v365, %v367
    %v369 = vrot.slane %v82, %v368
    %v371 = vunpack.c.l.s4 1983009808
    %v372 = vunpack.c.0.s8 %v371
    %v373 = vlaneseq
    %v374 = vshrl.u32 %v373, 7
    %v375 = vsub.s32 %v372, %v374
    %v376 = vrot.slane %v362, %v375
    %v377 = vcombine.high %v369, %v369
    %v378 = vcombine.high %v376, %v376
    %383 = vmatprep.subr.mxu0 %v84
    %384 = vmatpush1.msra.mxu0 %v83
    %385 = vmatprep.subr.mxu0 %v88
    %386 = vmatpush1.msra.mxu0 %v87
    %387 = vmatprep.subr.mxu0 %v92
    %388 = vmatpush1.msra.mxu0 %v91
    %389 = vmatprep.subr.mxu0 %v96
    %390 = vmatpush1.msra.mxu0 %v95
    %391 = vmatprep.subr.mxu0 %v100
    %392 = vmatpush1.msra.mxu0 %v99
    %393 = vmatprep.subr.mxu0 %v104
    %394 = vmatpush1.msra.mxu0 %v103
    %395 = vmatprep.subr.mxu0 %v108
    %396 = vmatpush1.msra.mxu0 %v107
    %397 = vmatprep.subr.mxu0 %v112
    %398 = vmatpush1.msra.mxu0 %v111
    %399 = vmatprep.subr.mxu0 %v116
    %400 = vmatpush1.msra.mxu0 %v115
    %401 = vmatprep.subr.mxu0 %v120
    %402 = vmatpush1.msra.mxu0 %v119
    %403 = vmatprep.subr.mxu0 %v124
    %404 = vmatpush1.msra.mxu0 %v123
    %405 = vmatprep.subr.mxu0 %v128
    %406 = vmatpush1.msra.mxu0 %v127
    %407 = vmatprep.subr.mxu0 %v132
    %408 = vmatpush1.msra.mxu0 %v131
    %409 = vmatprep.subr.mxu0 %v136
    %410 = vmatpush1.msra.mxu0 %v135
    %411 = vmatprep.subr.mxu0 %v140
    %412 = vmatpush1.msra.mxu0 %v139
    %413 = vmatprep.subr.mxu0 %v144
    %414 = vmatpush1.msra.mxu0 %v143
    %415 = vmatprep.subr.mxu0 %v148
    %416 = vmatpush1.msra.mxu0 %v147
    %417 = vmatprep.subr.mxu0 %v152
    %418 = vmatpush1.msra.mxu0 %v151
    %419 = vmatprep.subr.mxu0 %v156
    %420 = vmatpush1.msra.mxu0 %v155
    %421 = vmatprep.subr.mxu0 %v160
    %422 = vmatpush1.msra.mxu0 %v159
    %423 = vmatprep.subr.mxu0 %v164
    %424 = vmatpush1.msra.mxu0 %v163
    %425 = vmatprep.subr.mxu0 %v168
    %426 = vmatpush1.msra.mxu0 %v167
    %427 = vmatprep.subr.mxu0 %v172
    %428 = vmatpush1.msra.mxu0 %v171
    %429 = vmatprep.subr.mxu0 %v176
    %430 = vmatpush1.msra.mxu0 %v175
    %431 = vmatprep.subr.mxu0 %v180
    %432 = vmatpush1.msra.mxu0 %v179
    %433 = vmatprep.subr.mxu0 %v184
    %434 = vmatpush1.msra.mxu0 %v183
    %435 = vmatprep.subr.mxu0 %v188
    %436 = vmatpush1.msra.mxu0 %v187
    %437 = vmatprep.subr.mxu0 %v192
    %438 = vmatpush1.msra.mxu0 %v191
    %439 = vmatprep.subr.mxu0 %v196
    %440 = vmatpush1.msra.mxu0 %v195
    %441 = vmatprep.subr.mxu0 %v200
    %442 = vmatpush1.msra.mxu0 %v199
    %443 = vmatprep.subr.mxu0 %v204
    %444 = vmatpush1.msra.mxu0 %v203
    %445 = vmatprep.subr.mxu0 %v208
    %446 = vmatpush1.msra.mxu0 %v207
    %447 = vmatprep.mubr.f32.mxu0 %v377
    %448 = vmatmul.mubr.f32.gmra.mrb[0].mxu0 %v369
    %v449 = vpop.f32.mrb[0].mxu0
    %v450 = vadd.f32 %v344, %v449
    %v451 = vpop.f32.mrb[0].mxu0
    %v452 = vadd.f32 %v348, %v451
    %453 = vdwg.mxu0
    %454 = vmatprep.subr.mxu0 %v212
    %455 = vmatpush1.msra.mxu0 %v211
    %456 = vmatprep.subr.mxu0 %v216
    %457 = vmatpush1.msra.mxu0 %v215
    %458 = vmatprep.subr.mxu0 %v220
    %459 = vmatpush1.msra.mxu0 %v219
    %460 = vmatprep.subr.mxu0 %v224
    %461 = vmatpush1.msra.mxu0 %v223
    %462 = vmatprep.subr.mxu0 %v228
    %463 = vmatpush1.msra.mxu0 %v227
    %464 = vmatprep.subr.mxu0 %v232
    %465 = vmatpush1.msra.mxu0 %v231
    %466 = vmatprep.subr.mxu0 %v236
    %467 = vmatpush1.msra.mxu0 %v235
    %468 = vmatprep.subr.mxu0 %v240
    %469 = vmatpush1.msra.mxu0 %v239
    %470 = vmatprep.subr.mxu0 %v244
    %471 = vmatpush1.msra.mxu0 %v243
    %472 = vmatprep.subr.mxu0 %v248
    %473 = vmatpush1.msra.mxu0 %v247
    %474 = vmatprep.subr.mxu0 %v252
    %475 = vmatpush1.msra.mxu0 %v251
    %476 = vmatprep.subr.mxu0 %v256
    %477 = vmatpush1.msra.mxu0 %v255
    %478 = vmatprep.subr.mxu0 %v260
    %479 = vmatpush1.msra.mxu0 %v259
    %480 = vmatprep.subr.mxu0 %v264
    %481 = vmatpush1.msra.mxu0 %v263
    %482 = vmatprep.subr.mxu0 %v268
    %483 = vmatpush1.msra.mxu0 %v267
    %484 = vmatprep.subr.mxu0 %v272
    %485 = vmatpush1.msra.mxu0 %v271
    %486 = vmatprep.subr.mxu0 %v276
    %487 = vmatpush1.msra.mxu0 %v275
    %488 = vmatprep.subr.mxu0 %v280
    %489 = vmatpush1.msra.mxu0 %v279
    %490 = vmatprep.subr.mxu0 %v284
    %491 = vmatpush1.msra.mxu0 %v283
    %492 = vmatprep.subr.mxu0 %v288
    %493 = vmatpush1.msra.mxu0 %v287
    %494 = vmatprep.subr.mxu0 %v292
    %495 = vmatpush1.msra.mxu0 %v291
    %496 = vmatprep.subr.mxu0 %v296
    %497 = vmatpush1.msra.mxu0 %v295
    %498 = vmatprep.subr.mxu0 %v300
    %499 = vmatpush1.msra.mxu0 %v299
    %500 = vmatprep.subr.mxu0 %v304
    %501 = vmatpush1.msra.mxu0 %v303
    %502 = vmatprep.subr.mxu0 %v308
    %503 = vmatpush1.msra.mxu0 %v307
    %504 = vmatprep.subr.mxu0 %v312
    %505 = vmatpush1.msra.mxu0 %v311
    %506 = vmatprep.subr.mxu0 %v316
    %507 = vmatpush1.msra.mxu0 %v315
    %508 = vmatprep.subr.mxu0 %v320
    %509 = vmatpush1.msra.mxu0 %v319
    %510 = vmatprep.subr.mxu0 %v324
    %511 = vmatpush1.msra.mxu0 %v323
    %512 = vmatprep.subr.mxu0 %v328
    %513 = vmatpush1.msra.mxu0 %v327
    %514 = vmatprep.subr.mxu0 %v332
    %515 = vmatpush1.msra.mxu0 %v331
    %516 = vmatprep.subr.mxu0 %v336
    %517 = vmatpush1.msra.mxu0 %v335
    %518 = vmatprep.mubr.f32.mxu0 %v378
    %519 = vmatmul.mubr.f32.gmra.mrb[0].mxu0 %v376
    %v520 = vpop.f32.mrb[0].mxu0
    %v521 = vadd.f32 %v450, %v520
    %v522 = vpop.f32.mrb[0].mxu0
    %v523 = vadd.f32 %v452, %v522
    %524 = vdwg.mxu0
    %525 = vmatprep.subr.mxu0 %v86
    %526 = vmatpush1.msra.mxu0 %v85
    %527 = vmatprep.subr.mxu0 %v90
    %528 = vmatpush1.msra.mxu0 %v89
    %529 = vmatprep.subr.mxu0 %v94
    %530 = vmatpush1.msra.mxu0 %v93
    %531 = vmatprep.subr.mxu0 %v98
    %532 = vmatpush1.msra.mxu0 %v97
    %533 = vmatprep.subr.mxu0 %v102
    %534 = vmatpush1.msra.mxu0 %v101
    %535 = vmatprep.subr.mxu0 %v106
    %536 = vmatpush1.msra.mxu0 %v105
    %537 = vmatprep.subr.mxu0 %v110
    %538 = vmatpush1.msra.mxu0 %v109
    %539 = vmatprep.subr.mxu0 %v114
    %540 = vmatpush1.msra.mxu0 %v113
    %541 = vmatprep.subr.mxu0 %v118
    %542 = vmatpush1.msra.mxu0 %v117
    %543 = vmatprep.subr.mxu0 %v122
    %544 = vmatpush1.msra.mxu0 %v121
    %545 = vmatprep.subr.mxu0 %v126
    %546 = vmatpush1.msra.mxu0 %v125
    %547 = vmatprep.subr.mxu0 %v130
    %548 = vmatpush1.msra.mxu0 %v129
    %549 = vmatprep.subr.mxu0 %v134
    %550 = vmatpush1.msra.mxu0 %v133
    %551 = vmatprep.subr.mxu0 %v138
    %552 = vmatpush1.msra.mxu0 %v137
    %553 = vmatprep.subr.mxu0 %v142
    %554 = vmatpush1.msra.mxu0 %v141
    %555 = vmatprep.subr.mxu0 %v146
    %556 = vmatpush1.msra.mxu0 %v145
    %557 = vmatprep.subr.mxu0 %v150
    %558 = vmatpush1.msra.mxu0 %v149
    %559 = vmatprep.subr.mxu0 %v154
    %560 = vmatpush1.msra.mxu0 %v153
    %561 = vmatprep.subr.mxu0 %v158
    %562 = vmatpush1.msra.mxu0 %v157
    %563 = vmatprep.subr.mxu0 %v162
    %564 = vmatpush1.msra.mxu0 %v161
    %565 = vmatprep.subr.mxu0 %v166
    %566 = vmatpush1.msra.mxu0 %v165
    %567 = vmatprep.subr.mxu0 %v170
    %568 = vmatpush1.msra.mxu0 %v169
    %569 = vmatprep.subr.mxu0 %v174
    %570 = vmatpush1.msra.mxu0 %v173
    %571 = vmatprep.subr.mxu0 %v178
    %572 = vmatpush1.msra.mxu0 %v177
    %573 = vmatprep.subr.mxu0 %v182
    %574 = vmatpush1.msra.mxu0 %v181
    %575 = vmatprep.subr.mxu0 %v186
    %576 = vmatpush1.msra.mxu0 %v185
    %577 = vmatprep.subr.mxu0 %v190
    %578 = vmatpush1.msra.mxu0 %v189
    %579 = vmatprep.subr.mxu0 %v194
    %580 = vmatpush1.msra.mxu0 %v193
    %581 = vmatprep.subr.mxu0 %v198
    %582 = vmatpush1.msra.mxu0 %v197
    %583 = vmatprep.subr.mxu0 %v202
    %584 = vmatpush1.msra.mxu0 %v201
    %585 = vmatprep.subr.mxu0 %v206
    %586 = vmatpush1.msra.mxu0 %v205
    %587 = vmatprep.subr.mxu0 %v210
    %588 = vmatpush1.msra.mxu0 %v209
    %589 = vmatprep.mubr.f32.mxu0 %v377
    %590 = vmatmul.mubr.f32.gmra.mrb[0].mxu0 %v369
    %v591 = vpop.f32.mrb[0].mxu0
    %v592 = vadd.f32 %v352, %v591
    %v593 = vpop.f32.mrb[0].mxu0
    %v594 = vadd.f32 %v356, %v593
    %595 = vdwg.mxu0
    %596 = vmatprep.subr.mxu0 %v214
    %597 = vmatpush1.msra.mxu0 %v213
    %598 = vmatprep.subr.mxu0 %v218
    %599 = vmatpush1.msra.mxu0 %v217
    %600 = vmatprep.subr.mxu0 %v222
    %601 = vmatpush1.msra.mxu0 %v221
    %602 = vmatprep.subr.mxu0 %v226
    %603 = vmatpush1.msra.mxu0 %v225
    %604 = vmatprep.subr.mxu0 %v230
    %605 = vmatpush1.msra.mxu0 %v229
    %606 = vmatprep.subr.mxu0 %v234
    %607 = vmatpush1.msra.mxu0 %v233
    %608 = vmatprep.subr.mxu0 %v238
    %609 = vmatpush1.msra.mxu0 %v237
    %610 = vmatprep.subr.mxu0 %v242
    %611 = vmatpush1.msra.mxu0 %v241
    %612 = vmatprep.subr.mxu0 %v246
    %613 = vmatpush1.msra.mxu0 %v245
    %614 = vmatprep.subr.mxu0 %v250
    %615 = vmatpush1.msra.mxu0 %v249
    %616 = vmatprep.subr.mxu0 %v254
    %617 = vmatpush1.msra.mxu0 %v253
    %618 = vmatprep.subr.mxu0 %v258
    %619 = vmatpush1.msra.mxu0 %v257
    %620 = vmatprep.subr.mxu0 %v262
    %621 = vmatpush1.msra.mxu0 %v261
    %622 = vmatprep.subr.mxu0 %v266
    %623 = vmatpush1.msra.mxu0 %v265
    %624 = vmatprep.subr.mxu0 %v270
    %625 = vmatpush1.msra.mxu0 %v269
    %626 = vmatprep.subr.mxu0 %v274
    %627 = vmatpush1.msra.mxu0 %v273
    %628 = vmatprep.subr.mxu0 %v278
    %629 = vmatpush1.msra.mxu0 %v277
    %630 = vmatprep.subr.mxu0 %v282
    %631 = vmatpush1.msra.mxu0 %v281
    %632 = vmatprep.subr.mxu0 %v286
    %633 = vmatpush1.msra.mxu0 %v285
    %634 = vmatprep.subr.mxu0 %v290
    %635 = vmatpush1.msra.mxu0 %v289
    %636 = vmatprep.subr.mxu0 %v294
    %637 = vmatpush1.msra.mxu0 %v293
    %638 = vmatprep.subr.mxu0 %v298
    %639 = vmatpush1.msra.mxu0 %v297
    %640 = vmatprep.subr.mxu0 %v302
    %641 = vmatpush1.msra.mxu0 %v301
    %642 = vmatprep.subr.mxu0 %v306
    %643 = vmatpush1.msra.mxu0 %v305
    %644 = vmatprep.subr.mxu0 %v310
    %645 = vmatpush1.msra.mxu0 %v309
    %646 = vmatprep.subr.mxu0 %v314
    %647 = vmatpush1.msra.mxu0 %v313
    %648 = vmatprep.subr.mxu0 %v318
    %649 = vmatpush1.msra.mxu0 %v317
    %650 = vmatprep.subr.mxu0 %v322
    %651 = vmatpush1.msra.mxu0 %v321
    %652 = vmatprep.subr.mxu0 %v326
    %653 = vmatpush1.msra.mxu0 %v325
    %654 = vmatprep.subr.mxu0 %v330
    %655 = vmatpush1.msra.mxu0 %v329
    %656 = vmatprep.subr.mxu0 %v334
    %657 = vmatpush1.msra.mxu0 %v333
    %658 = vmatprep.subr.mxu0 %v338
    %659 = vmatpush1.msra.mxu0 %v337
    %660 = vmatprep.mubr.f32.mxu0 %v378
    %661 = vmatmul.mubr.f32.gmra.mrb[0].mxu0 %v376
    %v662 = vpop.f32.mrb[0].mxu0
    %v663 = vadd.f32 %v592, %v662
    %v664 = vpop.f32.mrb[0].mxu0
    %v665 = vadd.f32 %v594, %v664
    %666 = vdwg.mxu0
    %v667 = vmax.f32 %v521, 0.0
    %v668 = vmax.f32 %v523, 0.0
    %v669 = vmax.f32 %v663, 0.0
    %v670 = vmax.f32 %v665, 0.0
    %v671 = vld [vmem:[%s3] sm:$0xff]
    %v672 = vld [vmem:[%s3 + $0x8] sm:$0xff]
    %v673 = vld [vmem:[%s3 + $0x10] sm:$0xff]
    %v674 = vld [vmem:[%s3 + $0x18] sm:$0xff]
    %v675 = vld [vmem:[%s3 + $0x20] sm:$0xff]
    %v676 = vld [vmem:[%s3 + $0x28] sm:$0xff]
    %v677 = vld [vmem:[%s3 + $0x30] sm:$0xff]
    %v678 = vld [vmem:[%s3 + $0x38] sm:$0xff]
    %v679 = vld [vmem:[%s3 + $0x40] sm:$0xff]
    %v680 = vld [vmem:[%s3 + $0x48] sm:$0xff]
    %v681 = vld [vmem:[%s3 + $0x50] sm:$0xff]
    %v682 = vld [vmem:[%s3 + $0x58] sm:$0xff]
    %v683 = vld [vmem:[%s3 + $0x60] sm:$0xff]
    %v684 = vld [vmem:[%s3 + $0x68] sm:$0xff]
    %v685 = vld [vmem:[%s3 + $0x70] sm:$0xff]
    %v686 = vld [vmem:[%s3 + $0x78] sm:$0xff]
    %v687 = vld [vmem:[%s3 + $0x80] sm:$0xff]
    %v688 = vld [vmem:[%s3 + $0x88] sm:$0xff]
    %v689 = vld [vmem:[%s3 + $0x90] sm:$0xff]
    %v690 = vld [vmem:[%s3 + $0x98] sm:$0xff]
    %v691 = vld [vmem:[%s3 + $0xa0] sm:$0xff]
    %v692 = vld [vmem:[%s3 + $0xa8] sm:$0xff]
    %v693 = vld [vmem:[%s3 + $0xb0] sm:$0xff]
    %v694 = vld [vmem:[%s3 + $0xb8] sm:$0xff]
    %v695 = vld [vmem:[%s3 + $0xc0] sm:$0xff]
    %v696 = vld [vmem:[%s3 + $0xc8] sm:$0xff]
    %v697 = vld [vmem:[%s3 + $0xd0] sm:$0xff]
    %v698 = vld [vmem:[%s3 + $0xd8] sm:$0xff]
    %v699 = vld [vmem:[%s3 + $0xe0] sm:$0xff]
    %v700 = vld [vmem:[%s3 + $0xe8] sm:$0xff]
    %v701 = vld [vmem:[%s3 + $0xf0] sm:$0xff]
    %v702 = vld [vmem:[%s3 + $0xf8] sm:$0xff]
    %v703 = vld [vmem:[%s3 + $0x100] sm:$0xff]
    %v704 = vld [vmem:[%s3 + $0x108] sm:$0xff]
    %v705 = vld [vmem:[%s3 + $0x110] sm:$0xff]
    %v706 = vld [vmem:[%s3 + $0x118] sm:$0xff]
    %v707 = vld [vmem:[%s3 + $0x120] sm:$0xff]
    %v708 = vld [vmem:[%s3 + $0x128] sm:$0xff]
    %v709 = vld [vmem:[%s3 + $0x130] sm:$0xff]
    %v710 = vld [vmem:[%s3 + $0x138] sm:$0xff]
    %v711 = vld [vmem:[%s3 + $0x140] sm:$0xff]
    %v712 = vld [vmem:[%s3 + $0x148] sm:$0xff]
    %v713 = vld [vmem:[%s3 + $0x150] sm:$0xff]
    %v714 = vld [vmem:[%s3 + $0x158] sm:$0xff]
    %v715 = vld [vmem:[%s3 + $0x160] sm:$0xff]
    %v716 = vld [vmem:[%s3 + $0x168] sm:$0xff]
    %v717 = vld [vmem:[%s3 + $0x170] sm:$0xff]
    %v718 = vld [vmem:[%s3 + $0x178] sm:$0xff]
    %v719 = vld [vmem:[%s3 + $0x180] sm:$0xff]
    %v720 = vld [vmem:[%s3 + $0x188] sm:$0xff]
    %v721 = vld [vmem:[%s3 + $0x190] sm:$0xff]
    %v722 = vld [vmem:[%s3 + $0x198] sm:$0xff]
    %v723 = vld [vmem:[%s3 + $0x1a0] sm:$0xff]
    %v724 = vld [vmem:[%s3 + $0x1a8] sm:$0xff]
    %v725 = vld [vmem:[%s3 + $0x1b0] sm:$0xff]
    %v726 = vld [vmem:[%s3 + $0x1b8] sm:$0xff]
    %v727 = vld [vmem:[%s3 + $0x1c0] sm:$0xff]
    %v728 = vld [vmem:[%s3 + $0x1c8] sm:$0xff]
    %v729 = vld [vmem:[%s3 + $0x1d0] sm:$0xff]
    %v730 = vld [vmem:[%s3 + $0x1d8] sm:$0xff]
    %v731 = vld [vmem:[%s3 + $0x1e0] sm:$0xff]
    %v732 = vld [vmem:[%s3 + $0x1e8] sm:$0xff]
    %v733 = vld [vmem:[%s3 + $0x1f0] sm:$0xff]
    %v734 = vld [vmem:[%s3 + $0x1f8] sm:$0xff]
    %v735 = vld [vmem:[%s3 + $0x200] sm:$0xff]
    %v736 = vld [vmem:[%s3 + $0x208] sm:$0xff]
    %v737 = vld [vmem:[%s3 + $0x210] sm:$0xff]
    %v738 = vld [vmem:[%s3 + $0x218] sm:$0xff]
    %v739 = vld [vmem:[%s3 + $0x220] sm:$0xff]
    %v740 = vld [vmem:[%s3 + $0x228] sm:$0xff]
    %v741 = vld [vmem:[%s3 + $0x230] sm:$0xff]
    %v742 = vld [vmem:[%s3 + $0x238] sm:$0xff]
    %v743 = vld [vmem:[%s3 + $0x240] sm:$0xff]
    %v744 = vld [vmem:[%s3 + $0x248] sm:$0xff]
    %v745 = vld [vmem:[%s3 + $0x250] sm:$0xff]
    %v746 = vld [vmem:[%s3 + $0x258] sm:$0xff]
    %v747 = vld [vmem:[%s3 + $0x260] sm:$0xff]
    %v748 = vld [vmem:[%s3 + $0x268] sm:$0xff]
    %v749 = vld [vmem:[%s3 + $0x270] sm:$0xff]
    %v750 = vld [vmem:[%s3 + $0x278] sm:$0xff]
    %v751 = vld [vmem:[%s3 + $0x280] sm:$0xff]
    %v752 = vld [vmem:[%s3 + $0x288] sm:$0xff]
    %v753 = vld [vmem:[%s3 + $0x290] sm:$0xff]
    %v754 = vld [vmem:[%s3 + $0x298] sm:$0xff]
    %v755 = vld [vmem:[%s3 + $0x2a0] sm:$0xff]
    %v756 = vld [vmem:[%s3 + $0x2a8] sm:$0xff]
    %v757 = vld [vmem:[%s3 + $0x2b0] sm:$0xff]
    %v758 = vld [vmem:[%s3 + $0x2b8] sm:$0xff]
    %v759 = vld [vmem:[%s3 + $0x2c0] sm:$0xff]
    %v760 = vld [vmem:[%s3 + $0x2c8] sm:$0xff]
    %v761 = vld [vmem:[%s3 + $0x2d0] sm:$0xff]
    %v762 = vld [vmem:[%s3 + $0x2d8] sm:$0xff]
    %v763 = vld [vmem:[%s3 + $0x2e0] sm:$0xff]
    %v764 = vld [vmem:[%s3 + $0x2e8] sm:$0xff]
    %v765 = vld [vmem:[%s3 + $0x2f0] sm:$0xff]
    %v766 = vld [vmem:[%s3 + $0x2f8] sm:$0xff]
    %v767 = vld [vmem:[%s3 + $0x300] sm:$0xff]
    %v768 = vld [vmem:[%s3 + $0x308] sm:$0xff]
    %v769 = vld [vmem:[%s3 + $0x310] sm:$0xff]
    %v770 = vld [vmem:[%s3 + $0x318] sm:$0xff]
    %v771 = vld [vmem:[%s3 + $0x320] sm:$0xff]
    %v772 = vld [vmem:[%s3 + $0x328] sm:$0xff]
    %v773 = vld [vmem:[%s3 + $0x330] sm:$0xff]
    %v774 = vld [vmem:[%s3 + $0x338] sm:$0xff]
    %v775 = vld [vmem:[%s3 + $0x340] sm:$0xff]
    %v776 = vld [vmem:[%s3 + $0x348] sm:$0xff]
    %v777 = vld [vmem:[%s3 + $0x350] sm:$0xff]
    %v778 = vld [vmem:[%s3 + $0x358] sm:$0xff]
    %v779 = vld [vmem:[%s3 + $0x360] sm:$0xff]
    %v780 = vld [vmem:[%s3 + $0x368] sm:$0xff]
    %v781 = vld [vmem:[%s3 + $0x370] sm:$0xff]
    %v782 = vld [vmem:[%s3 + $0x378] sm:$0xff]
    %v783 = vld [vmem:[%s3 + $0x380] sm:$0xff]
    %v784 = vld [vmem:[%s3 + $0x388] sm:$0xff]
    %v785 = vld [vmem:[%s3 + $0x390] sm:$0xff]
    %v786 = vld [vmem:[%s3 + $0x398] sm:$0xff]
    %v787 = vld [vmem:[%s3 + $0x3a0] sm:$0xff]
    %v788 = vld [vmem:[%s3 + $0x3a8] sm:$0xff]
    %v789 = vld [vmem:[%s3 + $0x3b0] sm:$0xff]
    %v790 = vld [vmem:[%s3 + $0x3b8] sm:$0xff]
    %v791 = vld [vmem:[%s3 + $0x3c0] sm:$0xff]
    %v792 = vld [vmem:[%s3 + $0x3c8] sm:$0xff]
    %v793 = vld [vmem:[%s3 + $0x3d0] sm:$0xff]
    %v794 = vld [vmem:[%s3 + $0x3d8] sm:$0xff]
    %v795 = vld [vmem:[%s3 + $0x3e0] sm:$0xff]
    %v796 = vld [vmem:[%s3 + $0x3e8] sm:$0xff]
    %v797 = vld [vmem:[%s3 + $0x3f0] sm:$0xff]
    %v798 = vld [vmem:[%s3 + $0x3f8] sm:$0xff]
    %v799 = vld [vmem:[#allocation5] sm:$0x3]
    %v801 = vlaneseq
    %v802 = vshrl.u32 %v801, 7
    %v803 = vsub.s32 0, %v802
    %v804 = vrot.slane %v799, %v803
    %v805 = vlaneseq
    %v806 = vshrl.u32 %v805, 7
    %v807 = vsub.s32 1, %v806
    %v808 = vrot.slane %v799, %v807
    %811 = vmatprep.subr.mxu0 %v672
    %812 = vmatpush1.msra.mxu0 %v671
    %813 = vmatprep.subr.mxu0 %v674
    %814 = vmatpush1.msra.mxu0 %v673
    %815 = vmatprep.subr.mxu0 %v676
    %816 = vmatpush1.msra.mxu0 %v675
    %817 = vmatprep.subr.mxu0 %v678
    %818 = vmatpush1.msra.mxu0 %v677
    %819 = vmatprep.subr.mxu0 %v680
    %820 = vmatpush1.msra.mxu0 %v679
    %821 = vmatprep.subr.mxu0 %v682
    %822 = vmatpush1.msra.mxu0 %v681
    %823 = vmatprep.subr.mxu0 %v684
    %824 = vmatpush1.msra.mxu0 %v683
    %825 = vmatprep.subr.mxu0 %v686
    %826 = vmatpush1.msra.mxu0 %v685
    %827 = vmatprep.subr.mxu0 %v688
    %828 = vmatpush1.msra.mxu0 %v687
    %829 = vmatprep.subr.mxu0 %v690
    %830 = vmatpush1.msra.mxu0 %v689
    %831 = vmatprep.subr.mxu0 %v692
    %832 = vmatpush1.msra.mxu0 %v691
    %833 = vmatprep.subr.mxu0 %v694
    %834 = vmatpush1.msra.mxu0 %v693
    %835 = vmatprep.subr.mxu0 %v696
    %836 = vmatpush1.msra.mxu0 %v695
    %837 = vmatprep.subr.mxu0 %v698
    %838 = vmatpush1.msra.mxu0 %v697
    %839 = vmatprep.subr.mxu0 %v700
    %840 = vmatpush1.msra.mxu0 %v699
    %841 = vmatprep.subr.mxu0 %v702
    %842 = vmatpush1.msra.mxu0 %v701
    %843 = vmatprep.subr.mxu0 %v704
    %844 = vmatpush1.msra.mxu0 %v703
    %845 = vmatprep.subr.mxu0 %v706
    %846 = vmatpush1.msra.mxu0 %v705
    %847 = vmatprep.subr.mxu0 %v708
    %848 = vmatpush1.msra.mxu0 %v707
    %849 = vmatprep.subr.mxu0 %v710
    %850 = vmatpush1.msra.mxu0 %v709
    %851 = vmatprep.subr.mxu0 %v712
    %852 = vmatpush1.msra.mxu0 %v711
    %853 = vmatprep.subr.mxu0 %v714
    %854 = vmatpush1.msra.mxu0 %v713
    %855 = vmatprep.subr.mxu0 %v716
    %856 = vmatpush1.msra.mxu0 %v715
    %857 = vmatprep.subr.mxu0 %v718
    %858 = vmatpush1.msra.mxu0 %v717
    %859 = vmatprep.subr.mxu0 %v720
    %860 = vmatpush1.msra.mxu0 %v719
    %861 = vmatprep.subr.mxu0 %v722
    %862 = vmatpush1.msra.mxu0 %v721
    %863 = vmatprep.subr.mxu0 %v724
    %864 = vmatpush1.msra.mxu0 %v723
    %865 = vmatprep.subr.mxu0 %v726
    %866 = vmatpush1.msra.mxu0 %v725
    %867 = vmatprep.subr.mxu0 %v728
    %868 = vmatpush1.msra.mxu0 %v727
    %869 = vmatprep.subr.mxu0 %v730
    %870 = vmatpush1.msra.mxu0 %v729
    %871 = vmatprep.subr.mxu0 %v732
    %872 = vmatpush1.msra.mxu0 %v731
    %873 = vmatprep.subr.mxu0 %v734
    %874 = vmatpush1.msra.mxu0 %v733
    %875 = vmatprep.mubr.f32.mxu0 %v668
    %876 = vmatmul.mubr.f32.gmra.mrb[0].mxu0 %v667
    %v877 = vpop.f32.mrb[0].mxu0
    %v878 = vadd.f32 %v804, %v877
    %v879 = vpop.f32.mrb[0].mxu0
    %v880 = vadd.f32 %v808, %v879
    %881 = vdwg.mxu0
    %882 = vmatprep.subr.mxu0 %v736
    %883 = vmatpush1.msra.mxu0 %v735
    %884 = vmatprep.subr.mxu0 %v738
    %885 = vmatpush1.msra.mxu0 %v737
    %886 = vmatprep.subr.mxu0 %v740
    %887 = vmatpush1.msra.mxu0 %v739
    %888 = vmatprep.subr.mxu0 %v742
    %889 = vmatpush1.msra.mxu0 %v741
    %890 = vmatprep.subr.mxu0 %v744
    %891 = vmatpush1.msra.mxu0 %v743
    %892 = vmatprep.subr.mxu0 %v746
    %893 = vmatpush1.msra.mxu0 %v745
    %894 = vmatprep.subr.mxu0 %v748
    %895 = vmatpush1.msra.mxu0 %v747
    %896 = vmatprep.subr.mxu0 %v750
    %897 = vmatpush1.msra.mxu0 %v749
    %898 = vmatprep.subr.mxu0 %v752
    %899 = vmatpush1.msra.mxu0 %v751
    %900 = vmatprep.subr.mxu0 %v754
    %901 = vmatpush1.msra.mxu0 %v753
    %902 = vmatprep.subr.mxu0 %v756
    %903 = vmatpush1.msra.mxu0 %v755
    %904 = vmatprep.subr.mxu0 %v758
    %905 = vmatpush1.msra.mxu0 %v757
    %906 = vmatprep.subr.mxu0 %v760
    %907 = vmatpush1.msra.mxu0 %v759
    %908 = vmatprep.subr.mxu0 %v762
    %909 = vmatpush1.msra.mxu0 %v761
    %910 = vmatprep.subr.mxu0 %v764
    %911 = vmatpush1.msra.mxu0 %v763
    %912 = vmatprep.subr.mxu0 %v766
    %913 = vmatpush1.msra.mxu0 %v765
    %914 = vmatprep.subr.mxu0 %v768
    %915 = vmatpush1.msra.mxu0 %v767
    %916 = vmatprep.subr.mxu0 %v770
    %917 = vmatpush1.msra.mxu0 %v769
    %918 = vmatprep.subr.mxu0 %v772
    %919 = vmatpush1.msra.mxu0 %v771
    %920 = vmatprep.subr.mxu0 %v774
    %921 = vmatpush1.msra.mxu0 %v773
    %922 = vmatprep.subr.mxu0 %v776
    %923 = vmatpush1.msra.mxu0 %v775
    %924 = vmatprep.subr.mxu0 %v778
    %925 = vmatpush1.msra.mxu0 %v777
    %926 = vmatprep.subr.mxu0 %v780
    %927 = vmatpush1.msra.mxu0 %v779
    %928 = vmatprep.subr.mxu0 %v782
    %929 = vmatpush1.msra.mxu0 %v781
    %930 = vmatprep.subr.mxu0 %v784
    %931 = vmatpush1.msra.mxu0 %v783
    %932 = vmatprep.subr.mxu0 %v786
    %933 = vmatpush1.msra.mxu0 %v785
    %934 = vmatprep.subr.mxu0 %v788
    %935 = vmatpush1.msra.mxu0 %v787
    %936 = vmatprep.subr.mxu0 %v790
    %937 = vmatpush1.msra.mxu0 %v789
    %938 = vmatprep.subr.mxu0 %v792
    %939 = vmatpush1.msra.mxu0 %v791
    %940 = vmatprep.subr.mxu0 %v794
    %941 = vmatpush1.msra.mxu0 %v793
    %942 = vmatprep.subr.mxu0 %v796
    %943 = vmatpush1.msra.mxu0 %v795
    %944 = vmatprep.subr.mxu0 %v798
    %945 = vmatpush1.msra.mxu0 %v797
    %946 = vmatprep.mubr.f32.mxu0 %v670
    %947 = vmatmul.mubr.f32.gmra.mrb[0].mxu0 %v669
    %v948 = vpop.f32.mrb[0].mxu0
    %v949 = vadd.f32 %v878, %v948
    %v950 = vpop.f32.mrb[0].mxu0
    %v951 = vadd.f32 %v880, %v950
    %952 = vdwg.mxu0
    %v953 = vmax.f32 %v949, 0.0
    %v954 = vmax.f32 %v951, 0.0
    %v955 = vld [vmem:[%s5] sm:$0xff]
    %v956 = vld [vmem:[%s5 + $0x8] sm:$0xff]
    %v957 = vld [vmem:[%s5 + $0x10] sm:$0xff]
    %v958 = vld [vmem:[%s5 + $0x18] sm:$0xff]
    %v959 = vld [vmem:[%s5 + $0x20] sm:$0xff]
    %v960 = vld [vmem:[%s5 + $0x28] sm:$0xff]
    %v961 = vld [vmem:[%s5 + $0x30] sm:$0xff]
    %v962 = vld [vmem:[%s5 + $0x38] sm:$0xff]
    %v963 = vld [vmem:[%s5 + $0x40] sm:$0xff]
    %v964 = vld [vmem:[%s5 + $0x48] sm:$0xff]
    %v965 = vld [vmem:[%s5 + $0x50] sm:$0xff]
    %v966 = vld [vmem:[%s5 + $0x58] sm:$0xff]
    %v967 = vld [vmem:[%s5 + $0x60] sm:$0xff]
    %v968 = vld [vmem:[%s5 + $0x68] sm:$0xff]
    %v969 = vld [vmem:[%s5 + $0x70] sm:$0xff]
    %v970 = vld [vmem:[%s5 + $0x78] sm:$0xff]
    %v971 = vld [vmem:[%s5 + $0x80] sm:$0xff]
    %v972 = vld [vmem:[%s5 + $0x88] sm:$0xff]
    %v973 = vld [vmem:[%s5 + $0x90] sm:$0xff]
    %v974 = vld [vmem:[%s5 + $0x98] sm:$0xff]
    %v975 = vld [vmem:[%s5 + $0xa0] sm:$0xff]
    %v976 = vld [vmem:[%s5 + $0xa8] sm:$0xff]
    %v977 = vld [vmem:[%s5 + $0xb0] sm:$0xff]
    %v978 = vld [vmem:[%s5 + $0xb8] sm:$0xff]
    %v979 = vld [vmem:[%s5 + $0xc0] sm:$0xff]
    %v980 = vld [vmem:[%s5 + $0xc8] sm:$0xff]
    %v981 = vld [vmem:[%s5 + $0xd0] sm:$0xff]
    %v982 = vld [vmem:[%s5 + $0xd8] sm:$0xff]
    %v983 = vld [vmem:[%s5 + $0xe0] sm:$0xff]
    %v984 = vld [vmem:[%s5 + $0xe8] sm:$0xff]
    %v985 = vld [vmem:[%s5 + $0xf0] sm:$0xff]
    %v986 = vld [vmem:[%s5 + $0xf8] sm:$0xff]
    %v987 = vld [vmem:[#allocation7] sm:$0x1]
    %v989 = vlaneseq
    %v990 = vshrl.u32 %v989, 7
    %v991 = vsub.s32 0, %v990
    %v992 = vrot.slane %v987, %v991
    %994 = vmatprep.subr.mxu0 0.0
    %995 = vmatpush1.msra.mxu0 %v955
    %996 = vmatprep.subr.mxu0 0.0
    %997 = vmatpush1.msra.mxu0 %v956
    %998 = vmatprep.subr.mxu0 0.0
    %999 = vmatpush1.msra.mxu0 %v957
    %1000 = vmatprep.subr.mxu0 0.0
    %1001 = vmatpush1.msra.mxu0 %v958
    %1002 = vmatprep.subr.mxu0 0.0
    %1003 = vmatpush1.msra.mxu0 %v959
    %1004 = vmatprep.subr.mxu0 0.0
    %1005 = vmatpush1.msra.mxu0 %v960
    %1006 = vmatprep.subr.mxu0 0.0
    %1007 = vmatpush1.msra.mxu0 %v961
    %1008 = vmatprep.subr.mxu0 0.0
    %1009 = vmatpush1.msra.mxu0 %v962
    %1010 = vmatprep.subr.mxu0 0.0
    %1011 = vmatpush1.msra.mxu0 %v963
    %1012 = vmatprep.subr.mxu0 0.0
    %1013 = vmatpush1.msra.mxu0 %v964
    %1014 = vmatprep.subr.mxu0 0.0
    %1015 = vmatpush1.msra.mxu0 %v965
    %1016 = vmatprep.subr.mxu0 0.0
    %1017 = vmatpush1.msra.mxu0 %v966
    %1018 = vmatprep.subr.mxu0 0.0
    %1019 = vmatpush1.msra.mxu0 %v967
    %1020 = vmatprep.subr.mxu0 0.0
    %1021 = vmatpush1.msra.mxu0 %v968
    %1022 = vmatprep.subr.mxu0 0.0
    %1023 = vmatpush1.msra.mxu0 %v969
    %1024 = vmatprep.subr.mxu0 0.0
    %1025 = vmatpush1.msra.mxu0 %v970
    %1026 = vmatprep.subr.mxu0 0.0
    %1027 = vmatpush1.msra.mxu0 %v971
    %1028 = vmatprep.subr.mxu0 0.0
    %1029 = vmatpush1.msra.mxu0 %v972
    %1030 = vmatprep.subr.mxu0 0.0
    %1031 = vmatpush1.msra.mxu0 %v973
    %1032 = vmatprep.subr.mxu0 0.0
    %1033 = vmatpush1.msra.mxu0 %v974
    %1034 = vmatprep.subr.mxu0 0.0
    %1035 = vmatpush1.msra.mxu0 %v975
    %1036 = vmatprep.subr.mxu0 0.0
    %1037 = vmatpush1.msra.mxu0 %v976
    %1038 = vmatprep.subr.mxu0 0.0
    %1039 = vmatpush1.msra.mxu0 %v977
    %1040 = vmatprep.subr.mxu0 0.0
    %1041 = vmatpush1.msra.mxu0 %v978
    %1042 = vmatprep.subr.mxu0 0.0
    %1043 = vmatpush1.msra.mxu0 %v979
    %1044 = vmatprep.subr.mxu0 0.0
    %1045 = vmatpush1.msra.mxu0 %v980
    %1046 = vmatprep.subr.mxu0 0.0
    %1047 = vmatpush1.msra.mxu0 %v981
    %1048 = vmatprep.subr.mxu0 0.0
    %1049 = vmatpush1.msra.mxu0 %v982
    %1050 = vmatprep.subr.mxu0 0.0
    %1051 = vmatpush1.msra.mxu0 %v983
    %1052 = vmatprep.subr.mxu0 0.0
    %1053 = vmatpush1.msra.mxu0 %v984
    %1054 = vmatprep.subr.mxu0 0.0
    %1055 = vmatpush1.msra.mxu0 %v985
    %1056 = vmatprep.subr.mxu0 0.0
    %1057 = vmatpush1.msra.mxu0 %v986
    %1058 = vmatprep.mubr.f32.mxu0 %v954
    %1059 = vmatmul.mubr.f32.gmra.mrb[0].mxu0 %v953
    %v1060 = vpop.f32.mrb[0].mxu0
    %v1061 = vadd.f32 %v992, %v1060
    %v1062 = vpop.f32.mrb[0].mxu0
    %1063 = vdwg.mxu0
    %v1064 = vmax.f32 %v1061, 0.0
    %v1065 = vld [vmem:[%s7] sm:$0xff]
    %v1066 = vld [vmem:[%s7 + $0x8] sm:$0xff]
    %v1067 = vld [vmem:[%s7 + $0x10] sm:$0xff]
    %v1068 = vld [vmem:[%s7 + $0x18] sm:$0xff]
    %v1069 = vld [vmem:[%s7 + $0x20] sm:$0xff]
    %v1070 = vld [vmem:[%s7 + $0x28] sm:$0xff]
    %v1071 = vld [vmem:[%s7 + $0x30] sm:$0xff]
    %v1072 = vld [vmem:[%s7 + $0x38] sm:$0xff]
    %v1073 = vld [vmem:[%s7 + $0x40] sm:$0xff]
    %v1074 = vld [vmem:[%s7 + $0x48] sm:$0xff]
    %v1075 = vld [vmem:[%s7 + $0x50] sm:$0xff]
    %v1076 = vld [vmem:[%s7 + $0x58] sm:$0xff]
    %v1077 = vld [vmem:[%s7 + $0x60] sm:$0xff]
    %v1078 = vld [vmem:[%s7 + $0x68] sm:$0xff]
    %v1079 = vld [vmem:[%s7 + $0x70] sm:$0xff]
    %v1080 = vld [vmem:[%s7 + $0x78] sm:$0xff]
    %v1081 = vld [vmem:[#allocation8] sm:$0x1]
    %v1083 = vlaneseq
    %v1084 = vshrl.u32 %v1083, 7
    %v1085 = vsub.s32 0, %v1084
    %v1086 = vrot.slane %v1081, %v1085
    %1088 = vmatprep.subr.mxu0 0.0
    %1089 = vmatpush1.msra.mxu0 %v1065
    %1090 = vmatprep.subr.mxu0 0.0
    %1091 = vmatpush1.msra.mxu0 %v1066
    %1092 = vmatprep.subr.mxu0 0.0
    %1093 = vmatpush1.msra.mxu0 %v1067
    %1094 = vmatprep.subr.mxu0 0.0
    %1095 = vmatpush1.msra.mxu0 %v1068
    %1096 = vmatprep.subr.mxu0 0.0
    %1097 = vmatpush1.msra.mxu0 %v1069
    %1098 = vmatprep.subr.mxu0 0.0
    %1099 = vmatpush1.msra.mxu0 %v1070
    %1100 = vmatprep.subr.mxu0 0.0
    %1101 = vmatpush1.msra.mxu0 %v1071
    %1102 = vmatprep.subr.mxu0 0.0
    %1103 = vmatpush1.msra.mxu0 %v1072
    %1104 = vmatprep.subr.mxu0 0.0
    %1105 = vmatpush1.msra.mxu0 %v1073
    %1106 = vmatprep.subr.mxu0 0.0
    %1107 = vmatpush1.msra.mxu0 %v1074
    %1108 = vmatprep.subr.mxu0 0.0
    %1109 = vmatpush1.msra.mxu0 %v1075
    %1110 = vmatprep.subr.mxu0 0.0
    %1111 = vmatpush1.msra.mxu0 %v1076
    %1112 = vmatprep.subr.mxu0 0.0
    %1113 = vmatpush1.msra.mxu0 %v1077
    %1114 = vmatprep.subr.mxu0 0.0
    %1115 = vmatpush1.msra.mxu0 %v1078
    %1116 = vmatprep.subr.mxu0 0.0
    %1117 = vmatpush1.msra.mxu0 %v1079
    %1118 = vmatprep.subr.mxu0 0.0
    %1119 = vmatpush1.msra.mxu0 %v1080
    %1120 = vmatprep.subr.mxu0 0.0
    %1121 = vmatpush1.msra.mxu0 0.0
    %1122 = vmatprep.subr.mxu0 0.0
    %1123 = vmatpush1.msra.mxu0 0.0
    %1124 = vmatprep.subr.mxu0 0.0
    %1125 = vmatpush1.msra.mxu0 0.0
    %1126 = vmatprep.subr.mxu0 0.0
    %1127 = vmatpush1.msra.mxu0 0.0
    %1128 = vmatprep.subr.mxu0 0.0
    %1129 = vmatpush1.msra.mxu0 0.0
    %1130 = vmatprep.subr.mxu0 0.0
    %1131 = vmatpush1.msra.mxu0 0.0
    %1132 = vmatprep.subr.mxu0 0.0
    %1133 = vmatpush1.msra.mxu0 0.0
    %1134 = vmatprep.subr.mxu0 0.0
    %1135 = vmatpush1.msra.mxu0 0.0
    %1136 = vmatprep.subr.mxu0 0.0
    %1137 = vmatpush1.msra.mxu0 0.0
    %1138 = vmatprep.subr.mxu0 0.0
    %1139 = vmatpush1.msra.mxu0 0.0
    %1140 = vmatprep.subr.mxu0 0.0
    %1141 = vmatpush1.msra.mxu0 0.0
    %1142 = vmatprep.subr.mxu0 0.0
    %1143 = vmatpush1.msra.mxu0 0.0
    %1144 = vmatprep.subr.mxu0 0.0
    %1145 = vmatpush1.msra.mxu0 0.0
    %1146 = vmatprep.subr.mxu0 0.0
    %1147 = vmatpush1.msra.mxu0 0.0
    %1148 = vmatprep.subr.mxu0 0.0
    %1149 = vmatpush1.msra.mxu0 0.0
    %1150 = vmatprep.subr.mxu0 0.0
    %1151 = vmatpush1.msra.mxu0 0.0
    %1152 = vmatprep.mubr.f32.mxu0 0.0
    %1153 = vmatmul.mubr.f32.gmra.mrb[0].mxu0 %v1064
    %v1154 = vpop.f32.mrb[0].mxu0
    %v1155 = vadd.f32 %v1086, %v1154
    %v1156 = vpop.f32.mrb[0].mxu0
    %1157 = vdwg.mxu0
    %vm1158 = vcmask 25600
    %v1159 = vsel %vm1158, %v1155, -inf
    %1160 = vmax.xlane.f32.xlu0 %v1159
    %v1161 = vpop.xlane.xlu0 %1160
    %v1162 = vsub.f32 %v1155, %v1161
    %v1163 = vmul.f32 %v1162, 1.442695
    %v1164 = vpow.pop %v1163
    %v1165 = vsel %vm1158, %v1164, 0.0
    %1166 = vadd.xlane.f32.xlu0 %v1165
    %v1167 = vpop.xlane.xlu0 %1166
    %v1168 = vrcp.pop %v1167
    %v1169 = vmul.f32 %v1164, %v1168
    %1170 = vst.msk [vmem:[#allocation10] sm:$0x3] %vm1158, %v1169
    // Predicated region
    $region54: #{actor_discrete_image_forward.3} parent=1 // pred_check
      _
    $region55: #{actor_discrete_image_forward.3} parent=1 // pred_check_branch
      %1172 = sbr.rel (0) target = $region57
    $region56: #{actor_discrete_image_forward.3} parent=1 // pred_region
      %s1174 = ssub.s32 32, 32
      %1175 = vsyncadd [#allocation4], %s1174
      %s1177 = sshll.u32 [#allocation10], 4
      %s1178 = int_to_ptr.vmem [resolvable:$true] %s1177
      %1180 = dma.vmem_to_hbm [thread:$0]  %s1178, 32, %s9, [#allocation4]
    $region57: #{actor_discrete_image_forward.3} parent=1 // pred_fallthru
      _
    // Predicated region
    $region58: #{actor_discrete_image_forward.3} parent=1 // pred_check
      _
    $region59: #{actor_discrete_image_forward.3} parent=1 // pred_check_branch
      %1182 = sbr.rel (0) target = $region61
    $region60: #{actor_discrete_image_forward.3} parent=1 // pred_region
      %1183 = dma.done [#allocation4], 32
    $region61: #{actor_discrete_image_forward.3} parent=1 // pred_fallthru
      _
    %1184 = vsyncpa [#allocation3], 1
    %1185 = vsyncpa [#allocation6], 1
    %1186 = vsyncpa [#allocation9], 1
    %1187 = vsyncpa [#allocation4], 1

// kernel: actor_discrete_image_forward.2
$region0: #{actor_discrete_image_forward.2}
  #allocation0 [shape = 'u32[]', space=smem, size = 0x4, offset = 0x4, fixed_abs, tag = 'smem constant byte address 0x4 - core index']
  #allocation1 [shape = 'u32[144,128]{1,0:T(1,128)}', space=vmem, size = 0x12000, scoped, tag = 'internal scratch']
  #allocation2 [shape = 'f32[18,18,1]{2,1,0:T(8,128)}', space=vmem, size = 0x36000, scoped, tag = 'scratch operand']
  #allocation3 [shape = 'f32[16,16,16]{2,1,0:T(8,128)}', space=vmem, size = 0x20000, scoped, tag = 'scratch operand']
  #allocation4 [shape = 'f32[16,8,16]{2,1,0:T(8,128)}', space=vmem, size = 0x10000, scoped, tag = 'scratch operand']
  #allocation5 [shape = 'f32[10,10,16]{2,1,0:T(8,128)}', space=vmem, size = 0x14000, scoped, tag = 'scratch operand']
  #allocation6 [shape = 'f32[8,8,32]{2,1,0:T(8,128)}', space=vmem, size = 0x8000, scoped, tag = 'scratch operand']
  #allocation7 [shape = 'f32[8,4,32]{2,1,0:T(4,128)}', space=vmem, size = 0x4000, scoped, tag = 'scratch operand']
  %s0 = inlined_call_operand.vmem [shape: f32[2,16,16,1], index: 0, kind: input, shape index: {}]
  %s1 = inlined_call_operand.hbm [shape: f32[3,3,1,16], index: 1, kind: input, shape index: {}]
  %s2 = inlined_call_operand.hbm [shape: f32[1,16], index: 2, kind: input, shape index: {}]
  %s3 = inlined_call_operand.vmem [shape: f32[3,3,16,32], index: 3, kind: input, shape index: {}]
  %s4 = inlined_call_operand.hbm [shape: f32[1,32], index: 4, kind: input, shape index: {}]
  %s5 = inlined_call_operand.vmem [shape: f32[2,4,4,32], index: 5, kind: output, shape index: {}]
  %s6 = sld [smem:[#allocation0]]
  $region65: #{actor_discrete_image_forward.2} parent=0
    _
  %s8 = ssub.s32 1, %s6
  %s9 = scalar_select 0, %s8, %s6
  $region1: #{actor_discrete_image_forward.2} parent=0
    #allocation8 [shape = 'u8[4608]{0}', space=vmem, size = 0x1400, scoped, tag = 'input window, operand 1, single buffered']
    #allocation9 [shape = 's32[2]{0}', space=sflag, size = 0x8, scoped, tag = 'scoped memory for actor_discrete_image_forward.2']
    #allocation10 [shape = 'u8[512]{0}', space=vmem, size = 0x400, scoped, tag = 'input window, operand 2, single buffered']
    #allocation11 [shape = 's32[1]{0}', space=sflag, size = 0x4, scoped, tag = 'scoped memory for actor_discrete_image_forward.2']
    #allocation12 [shape = 'u8[512]{0}', space=vmem, size = 0x400, scoped, tag = 'input window, operand 4, single buffered']
    %10 = vsyncpa [#allocation9], 0
    %11 = vsyncpa [#allocation11], 0
    loop: start=0, step=1, limit=4
    $region2: #{actor_discrete_image_forward.2} parent=1 // loop_pre_header
      _
    $region3: #{actor_discrete_image_forward.2} parent=1 // loop_header
      %s13 = sphi 0, %s17
      %p14 = scmp.ge.s32.totalorder %s13, 4
      %s23 = sphi 0, %s25
      %s26 = sphi 0, %s23
      %s27 = sphi 0, %s26
      %s43 = sphi 0, %s27
      %s47 = sphi 0, %s47
      %s49 = sphi 0, %s47
      %s50 = sphi 0, %s49
      %s64 = sphi 0, %s50
      %s68 = sphi 0, %s68
      %s70 = sphi 0, %s68
      %s71 = sphi 0, %s70
      %s85 = sphi 0, %s71
      %s89 = sphi 0, %s89
      %s91 = sphi 0, %s89
      %s92 = sphi 0, %s91
      %s106 = sphi 0, %s92
      %s110 = sphi 0, %s110
      %s112 = sphi 0, %s110
      %s113 = sphi 0, %s112
      %s127 = sphi 0, %s113
      %s133 = sphi 0, %s135
      %s136 = sphi 0, %s133
      %s137 = sphi 0, %s136
      %s153 = sphi 0, %s137
    $region4: #{actor_discrete_image_forward.2} parent=1 // loop_header_branch
      %16 = sbr.rel (%p14) target = $region8
    $region5: #{actor_discrete_image_forward.2} parent=1 // loop_body
      %s18 = ssub.s32 %s13, 1
      %s19 = ssub.s32 %s13, 2
      %s20 = sadd.s32 %s13, 1
      %s21 = ssub.s32 %s13, %s20
      %p22 = scmp.eq.s32.totalorder %s21, 0
      %s24 = sadd.s32 %s23, 1
      %s25 = scalar_select %p22, %s23, %s24
      %p28 = pneg %p22
      %p29 = scmp.eq.s32.totalorder %s13, 1
      %p30 = por %p28, %p29
      %p31 = scmp.ne.s32.totalorder %s23, %s26
      %p32 = scmp.eq.s32.totalorder %s13, 0
      %p33 = por %p31, %p32
      %p34 = scmp.ne.s32.totalorder %s23, %s26
      %p35 = scmp.eq.s32.totalorder %s18, 1
      %p36 = por %p34, %p35
      %p37 = scmp.ne.s32.totalorder %s26, %s27
      %p38 = scmp.eq.s32.totalorder %s18, 0
      %p39 = por %p37, %p38
      %p40 = scmp.ne.s32.totalorder %s26, %s27
      %p41 = scmp.eq.s32.totalorder %s19, 1
      %p42 = por %p40, %p41
      %p44 = scmp.ne.s32.totalorder %s27, %s43
      %p45 = scmp.eq.s32.totalorder %s19, 0
      %p46 = por %p44, %p45
      %s48 = sadd.s32 %s47, 1
      %p51 = scmp.eq.s32.totalorder %s13, 1
      %p52 = scmp.ne.s32.totalorder %s47, %s49
      %p53 = scmp.eq.s32.totalorder %s13, 0
      %p54 = por %p52, %p53
      %p55 = scmp.ne.s32.totalorder %s47, %s49
      %p56 = scmp.eq.s32.totalorder %s18, 1
      %p57 = por %p55, %p56
      %p58 = scmp.ne.s32.totalorder %s49, %s50
      %p59 = scmp.eq.s32.totalorder %s18, 0
      %p60 = por %p58, %p59
      %p61 = scmp.ne.s32.totalorder %s49, %s50
      %p62 = scmp.eq.s32.totalorder %s19, 1
      %p63 = por %p61, %p62
      %p65 = scmp.ne.s32.totalorder %s50, %s64
      %p66 = scmp.eq.s32.totalorder %s19, 0
      %p67 = por %p65, %p66
      %s69 = sadd.s32 %s68, 1
      %p72 = scmp.eq.s32.totalorder %s13, 1
      %p73 = scmp.ne.s32.totalorder %s68, %s70
      %p74 = scmp.eq.s32.totalorder %s13, 0
      %p75 = por %p73, %p74
      %p76 = scmp.ne.s32.totalorder %s68, %s70
      %p77 = scmp.eq.s32.totalorder %s18, 1
      %p78 = por %p76, %p77
      %p79 = scmp.ne.s32.totalorder %s70, %s71
      %p80 = scmp.eq.s32.totalorder %s18, 0
      %p81 = por %p79, %p80
      %p82 = scmp.ne.s32.totalorder %s70, %s71
      %p83 = scmp.eq.s32.totalorder %s19, 1
      %p84 = por %p82, %p83
      %p86 = scmp.ne.s32.totalorder %s71, %s85
      %p87 = scmp.eq.s32.totalorder %s19, 0
      %p88 = por %p86, %p87
      %s90 = sadd.s32 %s89, 1
      %p93 = scmp.eq.s32.totalorder %s13, 1
      %p94 = scmp.ne.s32.totalorder %s89, %s91
      %p95 = scmp.eq.s32.totalorder %s13, 0
      %p96 = por %p94, %p95
      %p97 = scmp.ne.s32.totalorder %s89, %s91
      %p98 = scmp.eq.s32.totalorder %s18, 1
      %p99 = por %p97, %p98
      %p100 = scmp.ne.s32.totalorder %s91, %s92
      %p101 = scmp.eq.s32.totalorder %s18, 0
      %p102 = por %p100, %p101
      %p103 = scmp.ne.s32.totalorder %s91, %s92
      %p104 = scmp.eq.s32.totalorder %s19, 1
      %p105 = por %p103, %p104
      %p107 = scmp.ne.s32.totalorder %s92, %s106
      %p108 = scmp.eq.s32.totalorder %s19, 0
      %p109 = por %p107, %p108
      %s111 = sadd.s32 %s110, 1
      %p114 = scmp.eq.s32.totalorder %s13, 1
      %p115 = scmp.ne.s32.totalorder %s110, %s112
      %p116 = scmp.eq.s32.totalorder %s13, 0
      %p117 = por %p115, %p116
      %p118 = scmp.ne.s32.totalorder %s110, %s112
      %p119 = scmp.eq.s32.totalorder %s18, 1
      %p120 = por %p118, %p119
      %p121 = scmp.ne.s32.totalorder %s112, %s113
      %p122 = scmp.eq.s32.totalorder %s18, 0
      %p123 = por %p121, %p122
      %p124 = scmp.ne.s32.totalorder %s112, %s113
      %p125 = scmp.eq.s32.totalorder %s19, 1
      %p126 = por %p124, %p125
      %p128 = scmp.ne.s32.totalorder %s113, %s127
      %p129 = scmp.eq.s32.totalorder %s19, 0
      %p130 = por %p128, %p129
      %s131 = ssub.s32 %s13, %s20
      %p132 = scmp.eq.s32.totalorder %s131, 0
      %s134 = sadd.s32 %s133, 1
      %s135 = scalar_select %p132, %s133, %s134
      %p138 = pneg %p132
      %p139 = scmp.eq.s32.totalorder %s13, 1
      %p140 = por %p138, %p139
      %p141 = scmp.ne.s32.totalorder %s133, %s136
      %p142 = scmp.eq.s32.totalorder %s13, 0
      %p143 = por %p141, %p142
      %p144 = scmp.ne.s32.totalorder %s133, %s136
      %p145 = scmp.eq.s32.totalorder %s18, 1
      %p146 = por %p144, %p145
      %p147 = scmp.ne.s32.totalorder %s136, %s137
      %p148 = scmp.eq.s32.totalorder %s18, 0
      %p149 = por %p147, %p148
      %p150 = scmp.ne.s32.totalorder %s136, %s137
      %p151 = scmp.eq.s32.totalorder %s19, 1
      %p152 = por %p150, %p151
      %p154 = scmp.ne.s32.totalorder %s137, %s153
      %p155 = scmp.eq.s32.totalorder %s19, 0
      %p156 = por %p154, %p155
      %p157 = scmp.le.s32.totalorder 1, %s13
      %p158 = scmp.lt.s32.totalorder %s13, 3
      %p159 = pnand %p157, %p158
      %p160 = pneg %p159
      // Predicated region
      $region9: #{actor_discrete_image_forward.2} parent=5 // pred_check
        _
      $region10: #{actor_discrete_image_forward.2} parent=5 // pred_check_branch
        %162 = sbr.rel (%p159) target = $region12
      $region11: #{actor_discrete_image_forward.2} parent=5 // pred_region
        %s163 = ssub.s32 %s13, 1
        // Predicated region
        $region13: #{actor_discrete_image_forward.2} parent=11 // pred_check
          %p164 = pneg %p60
        $region14: #{actor_discrete_image_forward.2} parent=11 // pred_check_branch
          %166 = sbr.rel (%p164) target = $region16
        $region15: #{actor_discrete_image_forward.2} parent=11 // pred_region
          %s168 = ssub.s32 144, 144
          %169 = vsyncadd [#allocation9], %s168
          %s170 = sshll.u32 [#allocation8], 4
          %s171 = int_to_ptr.vmem [resolvable:$true] %s170
          %176 = dma.hbm_to_vmem [thread:$0]  %s1, 144, %s171, [#allocation9], 16, 16, 1
        $region16: #{actor_discrete_image_forward.2} parent=11 // pred_fallthru
          _
        // Predicated region
        $region17: #{actor_discrete_image_forward.2} parent=11 // pred_check
          %p177 = pneg %p81
        $region18: #{actor_discrete_image_forward.2} parent=11 // pred_check_branch
          %179 = sbr.rel (%p177) target = $region20
        $region19: #{actor_discrete_image_forward.2} parent=11 // pred_region
          %s181 = ssub.s32 16, 16
          %182 = vsyncadd [#allocation11], %s181
          %s184 = sshll.u32 [#allocation10], 4
          %s185 = int_to_ptr.vmem [resolvable:$true] %s184
          %187 = dma.hbm_to_vmem [thread:$0]  %s2, 16, %s185, [#allocation11]
        $region20: #{actor_discrete_image_forward.2} parent=11 // pred_fallthru
          _
        // Predicated region
        $region21: #{actor_discrete_image_forward.2} parent=11 // pred_check
          %p188 = pneg %p102
        $region22: #{actor_discrete_image_forward.2} parent=11 // pred_check_branch
          %190 = sbr.rel (%p188) target = $region24
        $region23: #{actor_discrete_image_forward.2} parent=11 // pred_region
          _
        $region24: #{actor_discrete_image_forward.2} parent=11 // pred_fallthru
          _
        // Predicated region
        $region25: #{actor_discrete_image_forward.2} parent=11 // pred_check
          %p191 = pneg %p123
        $region26: #{actor_discrete_image_forward.2} parent=11 // pred_check_branch
          %193 = sbr.rel (%p191) target = $region28
        $region27: #{actor_discrete_image_forward.2} parent=11 // pred_region
          %s195 = ssub.s32 16, 16
          %196 = vsyncadd [#allocation11], %s195
          %s198 = sshll.u32 [#allocation12], 4
          %s199 = int_to_ptr.vmem [resolvable:$true] %s198
          %201 = dma.hbm_to_vmem [thread:$0]  %s4, 16, %s199, [#allocation11]
        $region28: #{actor_discrete_image_forward.2} parent=11 // pred_fallthru
          _
      $region12: #{actor_discrete_image_forward.2} parent=5 // pred_fallthru
        _
      %p202 = scmp.lt.s32.totalorder %s13, 2
      // Predicated region
      $region29: #{actor_discrete_image_forward.2} parent=5 // pred_check
        %p203 = pneg %p202
      $region30: #{actor_discrete_image_forward.2} parent=5 // pred_check_branch
        %205 = sbr.rel (%p203) target = $region32
      $region31: #{actor_discrete_image_forward.2} parent=5 // pred_region
        // Predicated region
        $region33: #{actor_discrete_image_forward.2} parent=31 // pred_check
          %p206 = pneg %p33
        $region34: #{actor_discrete_image_forward.2} parent=31 // pred_check_branch
          %208 = sbr.rel (%p206) target = $region36
        $region35: #{actor_discrete_image_forward.2} parent=31 // pred_region
          %p209 = scmp.lt.s32.totalorder %s13, 1
          %s210 = scalar_select %p209, %s13, 1
          %s211 = smul.addr %s210, 32
          %s212 = smul.addr %s211, 8
          %s213 = scalar_lea.vmem %s0, %s212
        $region36: #{actor_discrete_image_forward.2} parent=31 // pred_fallthru
          _
      $region32: #{actor_discrete_image_forward.2} parent=5 // pred_fallthru
        _
      %p214 = scmp.le.s32.totalorder 1, %s13
      %p215 = scmp.lt.s32.totalorder %s13, 3
      %p216 = pnand %p214, %p215
      %p217 = pneg %p216
      // Predicated region
      $region37: #{actor_discrete_image_forward.2} parent=5 // pred_check
        _
      $region38: #{actor_discrete_image_forward.2} parent=5 // pred_check_branch
        %219 = sbr.rel (%p216) target = $region40
      $region39: #{actor_discrete_image_forward.2} parent=5 // pred_region
        %s220 = ssub.s32 %s13, 1
        // Predicated region
        $region41: #{actor_discrete_image_forward.2} parent=39 // pred_check
          %p221 = pneg %p60
        $region42: #{actor_discrete_image_forward.2} parent=39 // pred_check_branch
          %223 = sbr.rel (%p221) target = $region44
        $region43: #{actor_discrete_image_forward.2} parent=39 // pred_region
          %224 = dma.done [#allocation9], 144
        $region44: #{actor_discrete_image_forward.2} parent=39 // pred_fallthru
          _
        // Predicated region
        $region45: #{actor_discrete_image_forward.2} parent=39 // pred_check
          %p225 = pneg %p81
        $region46: #{actor_discrete_image_forward.2} parent=39 // pred_check_branch
          %227 = sbr.rel (%p225) target = $region48
        $region47: #{actor_discrete_image_forward.2} parent=39 // pred_region
          %228 = dma.done [#allocation11], 16
        $region48: #{actor_discrete_image_forward.2} parent=39 // pred_fallthru
          _
        // Predicated region
        $region49: #{actor_discrete_image_forward.2} parent=39 // pred_check
          %p229 = pneg %p123
        $region50: #{actor_discrete_image_forward.2} parent=39 // pred_check_branch
          %231 = sbr.rel (%p229) target = $region52
        $region51: #{actor_discrete_image_forward.2} parent=39 // pred_region
          %232 = dma.done [#allocation11], 16
        $region52: #{actor_discrete_image_forward.2} parent=39 // pred_fallthru
          _
        %p233 = scmp.lt.s32.totalorder %s18, 1
        %s234 = scalar_select %p233, %s18, 1
        %s235 = smul.addr %s234, 32
        %s236 = smul.addr %s235, 8
        %s237 = scalar_lea.vmem %s0, %s236
        %p238 = pneg %p39
        %p239 = pneg %p36
        %p240 = pneg %p60
        %p241 = pneg %p57
        %p242 = pneg %p81
        %p243 = pneg %p78
        %p244 = pneg %p102
        %p245 = pneg %p99
        %p246 = pneg %p123
        %p247 = pneg %p120
        %p248 = pneg %p149
        %p249 = pneg %p146
        %p250 = scmp.lt.s32.totalorder %s18, 1
        %s251 = scalar_select %p250, %s18, 1
        %s252 = smul.addr %s251, 4
        %s253 = smul.addr %s252, 4
        %s254 = scalar_lea.vmem %s5, %s253
        %p255 = scmp.lt.s32.totalorder %s18, 1
        %s256 = scalar_select %p255, %s18, 1
        %s257 = smul.addr %s256, 32
        %s258 = smul.addr %s257, 8
        %s259 = scalar_lea.vmem %s0, %s258
        %p260 = scmp.lt.s32.totalorder %s18, 1
        %s261 = scalar_select %p260, %s18, 1
        %s262 = smul.addr %s261, 4
        %s263 = smul.addr %s262, 4
        %s264 = scalar_lea.vmem %s5, %s263
        %vm265 = vcmask 7168
        %266 = vst.msk [vmem:[#allocation2] sm:$0xff] %vm265, 0.0
        %267 = vst.msk [vmem:[#allocation2 + $0x8] sm:$0xff] %vm265, 0.0
        %vm268 = vcmask 1024
        %269 = vst.msk [vmem:[#allocation2 + $0x10] sm:$0x3] %vm268, 0.0
        %270 = vst.msk [vmem:[#allocation2 + $0x18] sm:$0xff] %vm265, 0.0
        %271 = vst.msk [vmem:[#allocation2 + $0x20] sm:$0xff] %vm265, 0.0
        %272 = vst.msk [vmem:[#allocation2 + $0x28] sm:$0x3] %vm268, 0.0
        %273 = vst.msk [vmem:[#allocation2 + $0x30] sm:$0xff] %vm265, 0.0
        %274 = vst.msk [vmem:[#allocation2 + $0x38] sm:$0xff] %vm265, 0.0
        %275 = vst.msk [vmem:[#allocation2 + $0x40] sm:$0x3] %vm268, 0.0
        %276 = vst.msk [vmem:[#allocation2 + $0x48] sm:$0xff] %vm265, 0.0
        %277 = vst.msk [vmem:[#allocation2 + $0x50] sm:$0xff] %vm265, 0.0
        %278 = vst.msk [vmem:[#allocation2 + $0x58] sm:$0x3] %vm268, 0.0
        %279 = vst.msk [vmem:[#allocation2 + $0x60] sm:$0xff] %vm265, 0.0
        %280 = vst.msk [vmem:[#allocation2 + $0x68] sm:$0xff] %vm265, 0.0
        %281 = vst.msk [vmem:[#allocation2 + $0x70] sm:$0x3] %vm268, 0.0
        %282 = vst.msk [vmem:[#allocation2 + $0x78] sm:$0xff] %vm265, 0.0
        %283 = vst.msk [vmem:[#allocation2 + $0x80] sm:$0xff] %vm265, 0.0
        %284 = vst.msk [vmem:[#allocation2 + $0x88] sm:$0x3] %vm268, 0.0
        %285 = vst.msk [vmem:[#allocation2 + $0x90] sm:$0xff] %vm265, 0.0
        %286 = vst.msk [vmem:[#allocation2 + $0x98] sm:$0xff] %vm265, 0.0
        %287 = vst.msk [vmem:[#allocation2 + $0xa0] sm:$0x3] %vm268, 0.0
        %288 = vst.msk [vmem:[#allocation2 + $0xa8] sm:$0xff] %vm265, 0.0
        %289 = vst.msk [vmem:[#allocation2 + $0xb0] sm:$0xff] %vm265, 0.0
        %290 = vst.msk [vmem:[#allocation2 + $0xb8] sm:$0x3] %vm268, 0.0
        %291 = vst.msk [vmem:[#allocation2 + $0xc0] sm:$0xff] %vm265, 0.0
        %292 = vst.msk [vmem:[#allocation2 + $0xc8] sm:$0xff] %vm265, 0.0
        %293 = vst.msk [vmem:[#allocation2 + $0xd0] sm:$0x3] %vm268, 0.0
        %294 = vst.msk [vmem:[#allocation2 + $0xd8] sm:$0xff] %vm265, 0.0
        %295 = vst.msk [vmem:[#allocation2 + $0xe0] sm:$0xff] %vm265, 0.0
        %296 = vst.msk [vmem:[#allocation2 + $0xe8] sm:$0x3] %vm268, 0.0
        %297 = vst.msk [vmem:[#allocation2 + $0xf0] sm:$0xff] %vm265, 0.0
        %298 = vst.msk [vmem:[#allocation2 + $0xf8] sm:$0xff] %vm265, 0.0
        %299 = vst.msk [vmem:[#allocation2 + $0x100] sm:$0x3] %vm268, 0.0
        %300 = vst.msk [vmem:[#allocation2 + $0x108] sm:$0xff] %vm265, 0.0
        %301 = vst.msk [vmem:[#allocation2 + $0x110] sm:$0xff] %vm265, 0.0
        %302 = vst.msk [vmem:[#allocation2 + $0x118] sm:$0x3] %vm268, 0.0
        %303 = vst.msk [vmem:[#allocation2 + $0x120] sm:$0xff] %vm265, 0.0
        %304 = vst.msk [vmem:[#allocation2 + $0x128] sm:$0xff] %vm265, 0.0
        %305 = vst.msk [vmem:[#allocation2 + $0x130] sm:$0x3] %vm268, 0.0
        %306 = vst.msk [vmem:[#allocation2 + $0x138] sm:$0xff] %vm265, 0.0
        %307 = vst.msk [vmem:[#allocation2 + $0x140] sm:$0xff] %vm265, 0.0
        %308 = vst.msk [vmem:[#allocation2 + $0x148] sm:$0x3] %vm268, 0.0
        %309 = vst.msk [vmem:[#allocation2 + $0x150] sm:$0xff] %vm265, 0.0
        %310 = vst.msk [vmem:[#allocation2 + $0x158] sm:$0xff] %vm265, 0.0
        %311 = vst.msk [vmem:[#allocation2 + $0x160] sm:$0x3] %vm268, 0.0
        %312 = vst.msk [vmem:[#allocation2 + $0x168] sm:$0xff] %vm265, 0.0
        %313 = vst.msk [vmem:[#allocation2 + $0x170] sm:$0xff] %vm265, 0.0
        %314 = vst.msk [vmem:[#allocation2 + $0x178] sm:$0x3] %vm268, 0.0
        %315 = vst.msk [vmem:[#allocation2 + $0x180] sm:$0xff] %vm265, 0.0
        %316 = vst.msk [vmem:[#allocation2 + $0x188] sm:$0xff] %vm265, 0.0
        %317 = vst.msk [vmem:[#allocation2 + $0x190] sm:$0x3] %vm268, 0.0
        %318 = vst.msk [vmem:[#allocation2 + $0x198] sm:$0xff] %vm265, 0.0
        %319 = vst.msk [vmem:[#allocation2 + $0x1a0] sm:$0xff] %vm265, 0.0
        %320 = vst.msk [vmem:[#allocation2 + $0x1a8] sm:$0x3] %vm268, 0.0
        %v321 = vld [vmem:[%s259] sm:$0xff]
        %v322 = vld [vmem:[%s259 + $0x8] sm:$0xff]
        %v323 = vld [vmem:[%s259 + $0x10] sm:$0xff]
        %v324 = vld [vmem:[%s259 + $0x18] sm:$0xff]
        %v325 = vld [vmem:[%s259 + $0x20] sm:$0xff]
        %v326 = vld [vmem:[%s259 + $0x28] sm:$0xff]
        %v327 = vld [vmem:[%s259 + $0x30] sm:$0xff]
        %v328 = vld [vmem:[%s259 + $0x38] sm:$0xff]
        %v329 = vld [vmem:[%s259 + $0x40] sm:$0xff]
        %v330 = vld [vmem:[%s259 + $0x48] sm:$0xff]
        %v331 = vld [vmem:[%s259 + $0x50] sm:$0xff]
        %v332 = vld [vmem:[%s259 + $0x58] sm:$0xff]
        %v333 = vld [vmem:[%s259 + $0x60] sm:$0xff]
        %v334 = vld [vmem:[%s259 + $0x68] sm:$0xff]
        %v335 = vld [vmem:[%s259 + $0x70] sm:$0xff]
        %v336 = vld [vmem:[%s259 + $0x78] sm:$0xff]
        %v337 = vld [vmem:[%s259 + $0x80] sm:$0xff]
        %v338 = vld [vmem:[%s259 + $0x88] sm:$0xff]
        %v339 = vld [vmem:[%s259 + $0x90] sm:$0xff]
        %v340 = vld [vmem:[%s259 + $0x98] sm:$0xff]
        %v341 = vld [vmem:[%s259 + $0xa0] sm:$0xff]
        %v342 = vld [vmem:[%s259 + $0xa8] sm:$0xff]
        %v343 = vld [vmem:[%s259 + $0xb0] sm:$0xff]
        %v344 = vld [vmem:[%s259 + $0xb8] sm:$0xff]
        %v345 = vld [vmem:[%s259 + $0xc0] sm:$0xff]
        %v346 = vld [vmem:[%s259 + $0xc8] sm:$0xff]
        %v347 = vld [vmem:[%s259 + $0xd0] sm:$0xff]
        %v348 = vld [vmem:[%s259 + $0xd8] sm:$0xff]
        %v349 = vld [vmem:[%s259 + $0xe0] sm:$0xff]
        %v350 = vld [vmem:[%s259 + $0xe8] sm:$0xff]
        %v351 = vld [vmem:[%s259 + $0xf0] sm:$0xff]
        %v352 = vld [vmem:[%s259 + $0xf8] sm:$0xff]
        %s353 = scalar_lea.vmem [#allocation2], 24
        %354 = vst.msk [vmem:[%s353 + $0x1] sm:$0xff] %vm265, %v321
        %355 = vst.msk [vmem:[%s353 + $0x9] sm:$0xff] %vm265, %v322
        %356 = vst.msk [vmem:[%s353 + $0x19] sm:$0xff] %vm265, %v323
        %357 = vst.msk [vmem:[%s353 + $0x21] sm:$0xff] %vm265, %v324
        %358 = vst.msk [vmem:[%s353 + $0x31] sm:$0xff] %vm265, %v325
        %359 = vst.msk [vmem:[%s353 + $0x39] sm:$0xff] %vm265, %v326
        %360 = vst.msk [vmem:[%s353 + $0x49] sm:$0xff] %vm265, %v327
        %361 = vst.msk [vmem:[%s353 + $0x51] sm:$0xff] %vm265, %v328
        %362 = vst.msk [vmem:[%s353 + $0x61] sm:$0xff] %vm265, %v329
        %363 = vst.msk [vmem:[%s353 + $0x69] sm:$0xff] %vm265, %v330
        %364 = vst.msk [vmem:[%s353 + $0x79] sm:$0xff] %vm265, %v331
        %365 = vst.msk [vmem:[%s353 + $0x81] sm:$0xff] %vm265, %v332
        %366 = vst.msk [vmem:[%s353 + $0x91] sm:$0xff] %vm265, %v333
        %367 = vst.msk [vmem:[%s353 + $0x99] sm:$0xff] %vm265, %v334
        %368 = vst.msk [vmem:[%s353 + $0xa9] sm:$0xff] %vm265, %v335
        %369 = vst.msk [vmem:[%s353 + $0xb1] sm:$0xff] %vm265, %v336
        %370 = vst.msk [vmem:[%s353 + $0xc1] sm:$0xff] %vm265, %v337
        %371 = vst.msk [vmem:[%s353 + $0xc9] sm:$0xff] %vm265, %v338
        %372 = vst.msk [vmem:[%s353 + $0xd9] sm:$0xff] %vm265, %v339
        %373 = vst.msk [vmem:[%s353 + $0xe1] sm:$0xff] %vm265, %v340
        %374 = vst.msk [vmem:[%s353 + $0xf1] sm:$0xff] %vm265, %v341
        %375 = vst.msk [vmem:[%s353 + $0xf9] sm:$0xff] %vm265, %v342
        %376 = vst.msk [vmem:[%s353 + $0x109] sm:$0xff] %vm265, %v343
        %377 = vst.msk [vmem:[%s353 + $0x111] sm:$0xff] %vm265, %v344
        %378 = vst.msk [vmem:[%s353 + $0x121] sm:$0xff] %vm265, %v345
        %379 = vst.msk [vmem:[%s353 + $0x129] sm:$0xff] %vm265, %v346
        %380 = vst.msk [vmem:[%s353 + $0x139] sm:$0xff] %vm265, %v347
        %381 = vst.msk [vmem:[%s353 + $0x141] sm:$0xff] %vm265, %v348
        %382 = vst.msk [vmem:[%s353 + $0x151] sm:$0xff] %vm265, %v349
        %383 = vst.msk [vmem:[%s353 + $0x159] sm:$0xff] %vm265, %v350
        %384 = vst.msk [vmem:[%s353 + $0x169] sm:$0xff] %vm265, %v351
        %385 = vst.msk [vmem:[%s353 + $0x171] sm:$0xff] %vm265, %v352
        %v386 = vld [vmem:[#allocation2] sm:$0xff]
        %v387 = vld [vmem:[#allocation2 + $0x8] sm:$0xff]
        %v388 = vld [vmem:[#allocation2 + $0x18] sm:$0xff]
        %v389 = vld [vmem:[#allocation2 + $0x20] sm:$0xff]
        %v390 = vld [vmem:[#allocation2 + $0x30] sm:$0xff]
        %v391 = vld [vmem:[#allocation2 + $0x38] sm:$0xff]
        %v392 = vld [vmem:[#allocation2 + $0x48] sm:$0xff]
        %v393 = vld [vmem:[#allocation2 + $0x50] sm:$0xff]
        %v394 = vld [vmem:[#allocation2 + $0x60] sm:$0xff]
        %v395 = vld [vmem:[#allocation2 + $0x68] sm:$0xff]
        %v396 = vld [vmem:[#allocation2 + $0x78] sm:$0xff]
        %v397 = vld [vmem:[#allocation2 + $0x80] sm:$0xff]
        %v398 = vld [vmem:[#allocation2 + $0x90] sm:$0xff]
        %v399 = vld [vmem:[#allocation2 + $0x98] sm:$0xff]
        %v400 = vld [vmem:[#allocation2 + $0xa8] sm:$0xff]
        %v401 = vld [vmem:[#allocation2 + $0xb0] sm:$0xff]
        %v402 = vld [vmem:[#allocation2 + $0xc0] sm:$0xff]
        %v403 = vld [vmem:[#allocation2 + $0xc8] sm:$0xff]
        %v404 = vld [vmem:[#allocation2 + $0xd8] sm:$0xff]
        %v405 = vld [vmem:[#allocation2 + $0xe0] sm:$0xff]
        %v406 = vld [vmem:[#allocation2 + $0xf0] sm:$0xff]
        %v407 = vld [vmem:[#allocation2 + $0xf8] sm:$0xff]
        %v408 = vld [vmem:[#allocation2 + $0x108] sm:$0xff]
        %v409 = vld [vmem:[#allocation2 + $0x110] sm:$0xff]
        %v410 = vld [vmem:[#allocation2 + $0x120] sm:$0xff]
        %v411 = vld [vmem:[#allocation2 + $0x128] sm:$0xff]
        %v412 = vld [vmem:[#allocation2 + $0x138] sm:$0xff]
        %v413 = vld [vmem:[#allocation2 + $0x140] sm:$0xff]
        %v414 = vld [vmem:[#allocation2 + $0x150] sm:$0xff]
        %v415 = vld [vmem:[#allocation2 + $0x158] sm:$0xff]
        %v416 = vld [vmem:[#allocation2 + $0x168] sm:$0xff]
        %v417 = vld [vmem:[#allocation2 + $0x170] sm:$0xff]
        %v418 = vld [vmem:[#allocation8] sm:$0x1]
        %420 = vset.pattern.permute.xlu0 0
        %421 = vperm.xlu0 %420, %v386
        %v422 = vpop.permute.xlu0 %421
        %425 = vset.pattern.permute.xlu0 0
        %426 = vperm.xlu0 %425, %v387
        %v427 = vpop.permute.xlu0 %426
        %430 = vset.pattern.permute.xlu0 0
        %431 = vperm.xlu0 %430, %v388
        %v432 = vpop.permute.xlu0 %431
        %435 = vset.pattern.permute.xlu0 0
        %436 = vperm.xlu0 %435, %v389
        %v437 = vpop.permute.xlu0 %436
        %440 = vset.pattern.permute.xlu0 0
        %441 = vperm.xlu0 %440, %v390
        %v442 = vpop.permute.xlu0 %441
        %445 = vset.pattern.permute.xlu0 0
        %446 = vperm.xlu0 %445, %v391
        %v447 = vpop.permute.xlu0 %446
        %450 = vset.pattern.permute.xlu0 0
        %451 = vperm.xlu0 %450, %v392
        %v452 = vpop.permute.xlu0 %451
        %455 = vset.pattern.permute.xlu0 0
        %456 = vperm.xlu0 %455, %v393
        %v457 = vpop.permute.xlu0 %456
        %460 = vset.pattern.permute.xlu0 0
        %461 = vperm.xlu0 %460, %v394
        %v462 = vpop.permute.xlu0 %461
        %465 = vset.pattern.permute.xlu0 0
        %466 = vperm.xlu0 %465, %v395
        %v467 = vpop.permute.xlu0 %466
        %470 = vset.pattern.permute.xlu0 0
        %471 = vperm.xlu0 %470, %v396
        %v472 = vpop.permute.xlu0 %471
        %475 = vset.pattern.permute.xlu0 0
        %476 = vperm.xlu0 %475, %v397
        %v477 = vpop.permute.xlu0 %476
        %480 = vset.pattern.permute.xlu0 0
        %481 = vperm.xlu0 %480, %v398
        %v482 = vpop.permute.xlu0 %481
        %485 = vset.pattern.permute.xlu0 0
        %486 = vperm.xlu0 %485, %v399
        %v487 = vpop.permute.xlu0 %486
        %490 = vset.pattern.permute.xlu0 0
        %491 = vperm.xlu0 %490, %v400
        %v492 = vpop.permute.xlu0 %491
        %495 = vset.pattern.permute.xlu0 0
        %496 = vperm.xlu0 %495, %v401
        %v497 = vpop.permute.xlu0 %496
        %500 = vset.pattern.permute.xlu0 0
        %501 = vperm.xlu0 %500, %v402
        %v502 = vpop.permute.xlu0 %501
        %505 = vset.pattern.permute.xlu0 0
        %506 = vperm.xlu0 %505, %v403
        %v507 = vpop.permute.xlu0 %506
        %510 = vset.pattern.permute.xlu0 0
        %511 = vperm.xlu0 %510, %v404
        %v512 = vpop.permute.xlu0 %511
        %515 = vset.pattern.permute.xlu0 0
        %516 = vperm.xlu0 %515, %v405
        %v517 = vpop.permute.xlu0 %516
        %520 = vset.pattern.permute.xlu0 0
        %521 = vperm.xlu0 %520, %v406
        %v522 = vpop.permute.xlu0 %521
        %525 = vset.pattern.permute.xlu0 0
        %526 = vperm.xlu0 %525, %v407
        %v527 = vpop.permute.xlu0 %526
        %530 = vset.pattern.permute.xlu0 0
        %531 = vperm.xlu0 %530, %v408
        %v532 = vpop.permute.xlu0 %531
        %535 = vset.pattern.permute.xlu0 0
        %536 = vperm.xlu0 %535, %v409
        %v537 = vpop.permute.xlu0 %536
        %540 = vset.pattern.permute.xlu0 0
        %541 = vperm.xlu0 %540, %v410
        %v542 = vpop.permute.xlu0 %541
        %545 = vset.pattern.permute.xlu0 0
        %546 = vperm.xlu0 %545, %v411
        %v547 = vpop.permute.xlu0 %546
        %550 = vset.pattern.permute.xlu0 0
        %551 = vperm.xlu0 %550, %v412
        %v552 = vpop.permute.xlu0 %551
        %555 = vset.pattern.permute.xlu0 0
        %556 = vperm.xlu0 %555, %v413
        %v557 = vpop.permute.xlu0 %556
        %560 = vset.pattern.permute.xlu0 0
        %561 = vperm.xlu0 %560, %v414
        %v562 = vpop.permute.xlu0 %561
        %565 = vset.pattern.permute.xlu0 0
        %566 = vperm.xlu0 %565, %v415
        %v567 = vpop.permute.xlu0 %566
        %570 = vset.pattern.permute.xlu0 0
        %571 = vperm.xlu0 %570, %v416
        %v572 = vpop.permute.xlu0 %571
        %575 = vset.pattern.permute.xlu0 0
        %576 = vperm.xlu0 %575, %v417
        %v577 = vpop.permute.xlu0 %576
        %v580 = vlaneseq
        %v581 = vshrl.u32 %v580, 7
        %v582 = vsub.s32 0, %v581
        %v583 = vrot.slane %v418, %v582
        %v585 = vmul.f32 %v422, %v583
        %v586 = vmul.f32 %v427, %v583
        %v587 = vmul.f32 %v432, %v583
        %v588 = vmul.f32 %v437, %v583
        %v589 = vmul.f32 %v442, %v583
        %v590 = vmul.f32 %v447, %v583
        %v591 = vmul.f32 %v452, %v583
        %v592 = vmul.f32 %v457, %v583
        %v593 = vmul.f32 %v462, %v583
        %v594 = vmul.f32 %v467, %v583
        %v595 = vmul.f32 %v472, %v583
        %v596 = vmul.f32 %v477, %v583
        %v597 = vmul.f32 %v482, %v583
        %v598 = vmul.f32 %v487, %v583
        %v599 = vmul.f32 %v492, %v583
        %v600 = vmul.f32 %v497, %v583
        %v601 = vmul.f32 %v502, %v583
        %v602 = vmul.f32 %v507, %v583
        %v603 = vmul.f32 %v512, %v583
        %v604 = vmul.f32 %v517, %v583
        %v605 = vmul.f32 %v522, %v583
        %v606 = vmul.f32 %v527, %v583
        %v607 = vmul.f32 %v532, %v583
        %v608 = vmul.f32 %v537, %v583
        %v609 = vmul.f32 %v542, %v583
        %v610 = vmul.f32 %v547, %v583
        %v611 = vmul.f32 %v552, %v583
        %v612 = vmul.f32 %v557, %v583
        %v613 = vmul.f32 %v562, %v583
        %v614 = vmul.f32 %v567, %v583
        %v615 = vmul.f32 %v572, %v583
        %v616 = vmul.f32 %v577, %v583
        %v617 = vadd.f32 %v585, 0.0
        %v618 = vadd.f32 %v586, 0.0
        %v619 = vadd.f32 %v587, 0.0
        %v620 = vadd.f32 %v588, 0.0
        %v621 = vadd.f32 %v589, 0.0
        %v622 = vadd.f32 %v590, 0.0
        %v623 = vadd.f32 %v591, 0.0
        %v624 = vadd.f32 %v592, 0.0
        %v625 = vadd.f32 %v593, 0.0
        %v626 = vadd.f32 %v594, 0.0
        %v627 = vadd.f32 %v595, 0.0
        %v628 = vadd.f32 %v596, 0.0
        %v629 = vadd.f32 %v597, 0.0
        %v630 = vadd.f32 %v598, 0.0
        %v631 = vadd.f32 %v599, 0.0
        %v632 = vadd.f32 %v600, 0.0
        %v633 = vadd.f32 %v601, 0.0
        %v634 = vadd.f32 %v602, 0.0
        %v635 = vadd.f32 %v603, 0.0
        %v636 = vadd.f32 %v604, 0.0
        %v637 = vadd.f32 %v605, 0.0
        %v638 = vadd.f32 %v606, 0.0
        %v639 = vadd.f32 %v607, 0.0
        %v640 = vadd.f32 %v608, 0.0
        %v641 = vadd.f32 %v609, 0.0
        %v642 = vadd.f32 %v610, 0.0
        %v643 = vadd.f32 %v611, 0.0
        %v644 = vadd.f32 %v612, 0.0
        %v645 = vadd.f32 %v613, 0.0
        %v646 = vadd.f32 %v614, 0.0
        %v647 = vadd.f32 %v615, 0.0
        %v648 = vadd.f32 %v616, 0.0
        %v649 = vld [vmem:[#allocation2 + $0x1] sm:$0xff]
        %v650 = vld [vmem:[#allocation2 + $0x9] sm:$0xff]
        %v651 = vld [vmem:[#allocation2 + $0x19] sm:$0xff]
        %v652 = vld [vmem:[#allocation2 + $0x21] sm:$0xff]
        %v653 = vld [vmem:[#allocation2 + $0x31] sm:$0xff]
        %v654 = vld [vmem:[#allocation2 + $0x39] sm:$0xff]
        %v655 = vld [vmem:[#allocation2 + $0x49] sm:$0xff]
        %v656 = vld [vmem:[#allocation2 + $0x51] sm:$0xff]
        %v657 = vld [vmem:[#allocation2 + $0x61] sm:$0xff]
        %v658 = vld [vmem:[#allocation2 + $0x69] sm:$0xff]
        %v659 = vld [vmem:[#allocation2 + $0x79] sm:$0xff]
        %v660 = vld [vmem:[#allocation2 + $0x81] sm:$0xff]
        %v661 = vld [vmem:[#allocation2 + $0x91] sm:$0xff]
        %v662 = vld [vmem:[#allocation2 + $0x99] sm:$0xff]
        %v663 = vld [vmem:[#allocation2 + $0xa9] sm:$0xff]
        %v664 = vld [vmem:[#allocation2 + $0xb1] sm:$0xff]
        %v665 = vld [vmem:[#allocation2 + $0xc1] sm:$0xff]
        %v666 = vld [vmem:[#allocation2 + $0xc9] sm:$0xff]
        %v667 = vld [vmem:[#allocation2 + $0xd9] sm:$0xff]
        %v668 = vld [vmem:[#allocation2 + $0xe1] sm:$0xff]
        %v669 = vld [vmem:[#allocation2 + $0xf1] sm:$0xff]
        %v670 = vld [vmem:[#allocation2 + $0xf9] sm:$0xff]
        %v671 = vld [vmem:[#allocation2 + $0x109] sm:$0xff]
        %v672 = vld [vmem:[#allocation2 + $0x111] sm:$0xff]
        %v673 = vld [vmem:[#allocation2 + $0x121] sm:$0xff]
        %v674 = vld [vmem:[#allocation2 + $0x129] sm:$0xff]
        %v675 = vld [vmem:[#allocation2 + $0x139] sm:$0xff]
        %v676 = vld [vmem:[#allocation2 + $0x141] sm:$0xff]
        %v677 = vld [vmem:[#allocation2 + $0x151] sm:$0xff]
        %v678 = vld [vmem:[#allocation2 + $0x159] sm:$0xff]
        %v679 = vld [vmem:[#allocation2 + $0x169] sm:$0xff]
        %v680 = vld [vmem:[#allocation2 + $0x171] sm:$0xff]
        %s681 = scalar_lea.vmem [#allocation8], 1
        %v682 = vld [vmem:[%s681] sm:$0x1]
        %684 = vset.pattern.permute.xlu0 0
        %685 = vperm.xlu0 %684, %v649
        %v686 = vpop.permute.xlu0 %685
        %689 = vset.pattern.permute.xlu0 0
        %690 = vperm.xlu0 %689, %v650
        %v691 = vpop.permute.xlu0 %690
        %694 = vset.pattern.permute.xlu0 0
        %695 = vperm.xlu0 %694, %v651
        %v696 = vpop.permute.xlu0 %695
        %699 = vset.pattern.permute.xlu0 0
        %700 = vperm.xlu0 %699, %v652
        %v701 = vpop.permute.xlu0 %700
        %704 = vset.pattern.permute.xlu0 0
        %705 = vperm.xlu0 %704, %v653
        %v706 = vpop.permute.xlu0 %705
        %709 = vset.pattern.permute.xlu0 0
        %710 = vperm.xlu0 %709, %v654
        %v711 = vpop.permute.xlu0 %710
        %714 = vset.pattern.permute.xlu0 0
        %715 = vperm.xlu0 %714, %v655
        %v716 = vpop.permute.xlu0 %715
        %719 = vset.pattern.permute.xlu0 0
        %720 = vperm.xlu0 %719, %v656
        %v721 = vpop.permute.xlu0 %720
        %724 = vset.pattern.permute.xlu0 0
        %725 = vperm.xlu0 %724, %v657
        %v726 = vpop.permute.xlu0 %725
        %729 = vset.pattern.permute.xlu0 0
        %730 = vperm.xlu0 %729, %v658
        %v731 = vpop.permute.xlu0 %730
        %734 = vset.pattern.permute.xlu0 0
        %735 = vperm.xlu0 %734, %v659
        %v736 = vpop.permute.xlu0 %735
        %739 = vset.pattern.permute.xlu0 0
        %740 = vperm.xlu0 %739, %v660
        %v741 = vpop.permute.xlu0 %740
        %744 = vset.pattern.permute.xlu0 0
        %745 = vperm.xlu0 %744, %v661
        %v746 = vpop.permute.xlu0 %745
        %749 = vset.pattern.permute.xlu0 0
        %750 = vperm.xlu0 %749, %v662
        %v751 = vpop.permute.xlu0 %750
        %754 = vset.pattern.permute.xlu0 0
        %755 = vperm.xlu0 %754, %v663
        %v756 = vpop.permute.xlu0 %755
        %759 = vset.pattern.permute.xlu0 0
        %760 = vperm.xlu0 %759, %v664
        %v761 = vpop.permute.xlu0 %760
        %764 = vset.pattern.permute.xlu0 0
        %765 = vperm.xlu0 %764, %v665
        %v766 = vpop.permute.xlu0 %765
        %769 = vset.pattern.permute.xlu0 0
        %770 = vperm.xlu0 %769, %v666
        %v771 = vpop.permute.xlu0 %770
        %774 = vset.pattern.permute.xlu0 0
        %775 = vperm.xlu0 %774, %v667
        %v776 = vpop.permute.xlu0 %775
        %779 = vset.pattern.permute.xlu0 0
        %780 = vperm.xlu0 %779, %v668
        %v781 = vpop.permute.xlu0 %780
        %784 = vset.pattern.permute.xlu0 0
        %785 = vperm.xlu0 %784, %v669
        %v786 = vpop.permute.xlu0 %785
        %789 = vset.pattern.permute.xlu0 0
        %790 = vperm.xlu0 %789, %v670
        %v791 = vpop.permute.xlu0 %790
        %794 = vset.pattern.permute.xlu0 0
        %795 = vperm.xlu0 %794, %v671
        %v796 = vpop.permute.xlu0 %795
        %799 = vset.pattern.permute.xlu0 0
        %800 = vperm.xlu0 %799, %v672
        %v801 = vpop.permute.xlu0 %800
        %804 = vset.pattern.permute.xlu0 0
        %805 = vperm.xlu0 %804, %v673
        %v806 = vpop.permute.xlu0 %805
        %809 = vset.pattern.permute.xlu0 0
        %810 = vperm.xlu0 %809, %v674
        %v811 = vpop.permute.xlu0 %810
        %814 = vset.pattern.permute.xlu0 0
        %815 = vperm.xlu0 %814, %v675
        %v816 = vpop.permute.xlu0 %815
        %819 = vset.pattern.permute.xlu0 0
        %820 = vperm.xlu0 %819, %v676
        %v821 = vpop.permute.xlu0 %820
        %824 = vset.pattern.permute.xlu0 0
        %825 = vperm.xlu0 %824, %v677
        %v826 = vpop.permute.xlu0 %825
        %829 = vset.pattern.permute.xlu0 0
        %830 = vperm.xlu0 %829, %v678
        %v831 = vpop.permute.xlu0 %830
        %834 = vset.pattern.permute.xlu0 0
        %835 = vperm.xlu0 %834, %v679
        %v836 = vpop.permute.xlu0 %835
        %839 = vset.pattern.permute.xlu0 0
        %840 = vperm.xlu0 %839, %v680
        %v841 = vpop.permute.xlu0 %840
        %v844 = vlaneseq
        %v845 = vshrl.u32 %v844, 7
        %v846 = vsub.s32 0, %v845
        %v847 = vrot.slane %v682, %v846
        %v849 = vmul.f32 %v686, %v847
        %v850 = vmul.f32 %v691, %v847
        %v851 = vmul.f32 %v696, %v847
        %v852 = vmul.f32 %v701, %v847
        %v853 = vmul.f32 %v706, %v847
        %v854 = vmul.f32 %v711, %v847
        %v855 = vmul.f32 %v716, %v847
        %v856 = vmul.f32 %v721, %v847
        %v857 = vmul.f32 %v726, %v847
        %v858 = vmul.f32 %v731, %v847
        %v859 = vmul.f32 %v736, %v847
        %v860 = vmul.f32 %v741, %v847
        %v861 = vmul.f32 %v746, %v847
        %v862 = vmul.f32 %v751, %v847
        %v863 = vmul.f32 %v756, %v847
        %v864 = vmul.f32 %v761, %v847
        %v865 = vmul.f32 %v766, %v847
        %v866 = vmul.f32 %v771, %v847
        %v867 = vmul.f32 %v776, %v847
        %v868 = vmul.f32 %v781, %v847
        %v869 = vmul.f32 %v786, %v847
        %v870 = vmul.f32 %v791, %v847
        %v871 = vmul.f32 %v796, %v847
        %v872 = vmul.f32 %v801, %v847
        %v873 = vmul.f32 %v806, %v847
        %v874 = vmul.f32 %v811, %v847
        %v875 = vmul.f32 %v816, %v847
        %v876 = vmul.f32 %v821, %v847
        %v877 = vmul.f32 %v826, %v847
        %v878 = vmul.f32 %v831, %v847
        %v879 = vmul.f32 %v836, %v847
        %v880 = vmul.f32 %v841, %v847
        %v881 = vadd.f32 %v617, %v849
        %v882 = vadd.f32 %v618, %v850
        %v883 = vadd.f32 %v619, %v851
        %v884 = vadd.f32 %v620, %v852
        %v885 = vadd.f32 %v621, %v853
        %v886 = vadd.f32 %v622, %v854
        %v887 = vadd.f32 %v623, %v855
        %v888 = vadd.f32 %v624, %v856
        %v889 = vadd.f32 %v625, %v857
        %v890 = vadd.f32 %v626, %v858
        %v891 = vadd.f32 %v627, %v859
        %v892 = vadd.f32 %v628, %v860
        %v893 = vadd.f32 %v629, %v861
        %v894 = vadd.f32 %v630, %v862
        %v895 = vadd.f32 %v631, %v863
        %v896 = vadd.f32 %v632, %v864
        %v897 = vadd.f32 %v633, %v865
        %v898 = vadd.f32 %v634, %v866
        %v899 = vadd.f32 %v635, %v867
        %v900 = vadd.f32 %v636, %v868
        %v901 = vadd.f32 %v637, %v869
        %v902 = vadd.f32 %v638, %v870
        %v903 = vadd.f32 %v639, %v871
        %v904 = vadd.f32 %v640, %v872
        %v905 = vadd.f32 %v641, %v873
        %v906 = vadd.f32 %v642, %v874
        %v907 = vadd.f32 %v643, %v875
        %v908 = vadd.f32 %v644, %v876
        %v909 = vadd.f32 %v645, %v877
        %v910 = vadd.f32 %v646, %v878
        %v911 = vadd.f32 %v647, %v879
        %v912 = vadd.f32 %v648, %v880
        %v913 = vld [vmem:[#allocation2 + $0x2] sm:$0xff]
        %v914 = vld [vmem:[#allocation2 + $0xa] sm:$0xff]
        %v915 = vld [vmem:[#allocation2 + $0x1a] sm:$0xff]
        %v916 = vld [vmem:[#allocation2 + $0x22] sm:$0xff]
        %v917 = vld [vmem:[#allocation2 + $0x32] sm:$0xff]
        %v918 = vld [vmem:[#allocation2 + $0x3a] sm:$0xff]
        %v919 = vld [vmem:[#allocation2 + $0x4a] sm:$0xff]
        %v920 = vld [vmem:[#allocation2 + $0x52] sm:$0xff]
        %v921 = vld [vmem:[#allocation2 + $0x62] sm:$0xff]
        %v922 = vld [vmem:[#allocation2 + $0x6a] sm:$0xff]
        %v923 = vld [vmem:[#allocation2 + $0x7a] sm:$0xff]
        %v924 = vld [vmem:[#allocation2 + $0x82] sm:$0xff]
        %v925 = vld [vmem:[#allocation2 + $0x92] sm:$0xff]
        %v926 = vld [vmem:[#allocation2 + $0x9a] sm:$0xff]
        %v927 = vld [vmem:[#allocation2 + $0xaa] sm:$0xff]
        %v928 = vld [vmem:[#allocation2 + $0xb2] sm:$0xff]
        %v929 = vld [vmem:[#allocation2 + $0xc2] sm:$0xff]
        %v930 = vld [vmem:[#allocation2 + $0xca] sm:$0xff]
        %v931 = vld [vmem:[#allocation2 + $0xda] sm:$0xff]
        %v932 = vld [vmem:[#allocation2 + $0xe2] sm:$0xff]
        %v933 = vld [vmem:[#allocation2 + $0xf2] sm:$0xff]
        %v934 = vld [vmem:[#allocation2 + $0xfa] sm:$0xff]
        %v935 = vld [vmem:[#allocation2 + $0x10a] sm:$0xff]
        %v936 = vld [vmem:[#allocation2 + $0x112] sm:$0xff]
        %v937 = vld [vmem:[#allocation2 + $0x122] sm:$0xff]
        %v938 = vld [vmem:[#allocation2 + $0x12a] sm:$0xff]
        %v939 = vld [vmem:[#allocation2 + $0x13a] sm:$0xff]
        %v940 = vld [vmem:[#allocation2 + $0x142] sm:$0xff]
        %v941 = vld [vmem:[#allocation2 + $0x152] sm:$0xff]
        %v942 = vld [vmem:[#allocation2 + $0x15a] sm:$0xff]
        %v943 = vld [vmem:[#allocation2 + $0x16a] sm:$0xff]
        %v944 = vld [vmem:[#allocation2 + $0x172] sm:$0xff]
        %s945 = scalar_lea.vmem [#allocation8], 2
        %v946 = vld [vmem:[%s945] sm:$0x1]
        %948 = vset.pattern.permute.xlu0 0
        %949 = vperm.xlu0 %948, %v913
        %v950 = vpop.permute.xlu0 %949
        %953 = vset.pattern.permute.xlu0 0
        %954 = vperm.xlu0 %953, %v914
        %v955 = vpop.permute.xlu0 %954
        %958 = vset.pattern.permute.xlu0 0
        %959 = vperm.xlu0 %958, %v915
        %v960 = vpop.permute.xlu0 %959
        %963 = vset.pattern.permute.xlu0 0
        %964 = vperm.xlu0 %963, %v916
        %v965 = vpop.permute.xlu0 %964
        %968 = vset.pattern.permute.xlu0 0
        %969 = vperm.xlu0 %968, %v917
        %v970 = vpop.permute.xlu0 %969
        %973 = vset.pattern.permute.xlu0 0
        %974 = vperm.xlu0 %973, %v918
        %v975 = vpop.permute.xlu0 %974
        %978 = vset.pattern.permute.xlu0 0
        %979 = vperm.xlu0 %978, %v919
        %v980 = vpop.permute.xlu0 %979
        %983 = vset.pattern.permute.xlu0 0
        %984 = vperm.xlu0 %983, %v920
        %v985 = vpop.permute.xlu0 %984
        %988 = vset.pattern.permute.xlu0 0
        %989 = vperm.xlu0 %988, %v921
        %v990 = vpop.permute.xlu0 %989
        %993 = vset.pattern.permute.xlu0 0
        %994 = vperm.xlu0 %993, %v922
        %v995 = vpop.permute.xlu0 %994
        %998 = vset.pattern.permute.xlu0 0
        %999 = vperm.xlu0 %998, %v923
        %v1000 = vpop.permute.xlu0 %999
        %1003 = vset.pattern.permute.xlu0 0
        %1004 = vperm.xlu0 %1003, %v924
        %v1005 = vpop.permute.xlu0 %1004
        %1008 = vset.pattern.permute.xlu0 0
        %1009 = vperm.xlu0 %1008, %v925
        %v1010 = vpop.permute.xlu0 %1009
        %1013 = vset.pattern.permute.xlu0 0
        %1014 = vperm.xlu0 %1013, %v926
        %v1015 = vpop.permute.xlu0 %1014
        %1018 = vset.pattern.permute.xlu0 0
        %1019 = vperm.xlu0 %1018, %v927
        %v1020 = vpop.permute.xlu0 %1019
        %1023 = vset.pattern.permute.xlu0 0
        %1024 = vperm.xlu0 %1023, %v928
        %v1025 = vpop.permute.xlu0 %1024
        %1028 = vset.pattern.permute.xlu0 0
        %1029 = vperm.xlu0 %1028, %v929
        %v1030 = vpop.permute.xlu0 %1029
        %1033 = vset.pattern.permute.xlu0 0
        %1034 = vperm.xlu0 %1033, %v930
        %v1035 = vpop.permute.xlu0 %1034
        %1038 = vset.pattern.permute.xlu0 0
        %1039 = vperm.xlu0 %1038, %v931
        %v1040 = vpop.permute.xlu0 %1039
        %1043 = vset.pattern.permute.xlu0 0
        %1044 = vperm.xlu0 %1043, %v932
        %v1045 = vpop.permute.xlu0 %1044
        %1048 = vset.pattern.permute.xlu0 0
        %1049 = vperm.xlu0 %1048, %v933
        %v1050 = vpop.permute.xlu0 %1049
        %1053 = vset.pattern.permute.xlu0 0
        %1054 = vperm.xlu0 %1053, %v934
        %v1055 = vpop.permute.xlu0 %1054
        %1058 = vset.pattern.permute.xlu0 0
        %1059 = vperm.xlu0 %1058, %v935
        %v1060 = vpop.permute.xlu0 %1059
        %1063 = vset.pattern.permute.xlu0 0
        %1064 = vperm.xlu0 %1063, %v936
        %v1065 = vpop.permute.xlu0 %1064
        %1068 = vset.pattern.permute.xlu0 0
        %1069 = vperm.xlu0 %1068, %v937
        %v1070 = vpop.permute.xlu0 %1069
        %1073 = vset.pattern.permute.xlu0 0
        %1074 = vperm.xlu0 %1073, %v938
        %v1075 = vpop.permute.xlu0 %1074
        %1078 = vset.pattern.permute.xlu0 0
        %1079 = vperm.xlu0 %1078, %v939
        %v1080 = vpop.permute.xlu0 %1079
        %1083 = vset.pattern.permute.xlu0 0
        %1084 = vperm.xlu0 %1083, %v940
        %v1085 = vpop.permute.xlu0 %1084
        %1088 = vset.pattern.permute.xlu0 0
        %1089 = vperm.xlu0 %1088, %v941
        %v1090 = vpop.permute.xlu0 %1089
        %1093 = vset.pattern.permute.xlu0 0
        %1094 = vperm.xlu0 %1093, %v942
        %v1095 = vpop.permute.xlu0 %1094
        %1098 = vset.pattern.permute.xlu0 0
        %1099 = vperm.xlu0 %1098, %v943
        %v1100 = vpop.permute.xlu0 %1099
        %1103 = vset.pattern.permute.xlu0 0
        %1104 = vperm.xlu0 %1103, %v944
        %v1105 = vpop.permute.xlu0 %1104
        %v1108 = vlaneseq
        %v1109 = vshrl.u32 %v1108, 7
        %v1110 = vsub.s32 0, %v1109
        %v1111 = vrot.slane %v946, %v1110
        %v1113 = vmul.f32 %v950, %v1111
        %v1114 = vmul.f32 %v955, %v1111
        %v1115 = vmul.f32 %v960, %v1111
        %v1116 = vmul.f32 %v965, %v1111
        %v1117 = vmul.f32 %v970, %v1111
        %v1118 = vmul.f32 %v975, %v1111
        %v1119 = vmul.f32 %v980, %v1111
        %v1120 = vmul.f32 %v985, %v1111
        %v1121 = vmul.f32 %v990, %v1111
        %v1122 = vmul.f32 %v995, %v1111
        %v1123 = vmul.f32 %v1000, %v1111
        %v1124 = vmul.f32 %v1005, %v1111
        %v1125 = vmul.f32 %v1010, %v1111
        %v1126 = vmul.f32 %v1015, %v1111
        %v1127 = vmul.f32 %v1020, %v1111
        %v1128 = vmul.f32 %v1025, %v1111
        %v1129 = vmul.f32 %v1030, %v1111
        %v1130 = vmul.f32 %v1035, %v1111
        %v1131 = vmul.f32 %v1040, %v1111
        %v1132 = vmul.f32 %v1045, %v1111
        %v1133 = vmul.f32 %v1050, %v1111
        %v1134 = vmul.f32 %v1055, %v1111
        %v1135 = vmul.f32 %v1060, %v1111
        %v1136 = vmul.f32 %v1065, %v1111
        %v1137 = vmul.f32 %v1070, %v1111
        %v1138 = vmul.f32 %v1075, %v1111
        %v1139 = vmul.f32 %v1080, %v1111
        %v1140 = vmul.f32 %v1085, %v1111
        %v1141 = vmul.f32 %v1090, %v1111
        %v1142 = vmul.f32 %v1095, %v1111
        %v1143 = vmul.f32 %v1100, %v1111
        %v1144 = vmul.f32 %v1105, %v1111
        %v1145 = vadd.f32 %v881, %v1113
        %v1146 = vadd.f32 %v882, %v1114
        %v1147 = vadd.f32 %v883, %v1115
        %v1148 = vadd.f32 %v884, %v1116
        %v1149 = vadd.f32 %v885, %v1117
        %v1150 = vadd.f32 %v886, %v1118
        %v1151 = vadd.f32 %v887, %v1119
        %v1152 = vadd.f32 %v888, %v1120
        %v1153 = vadd.f32 %v889, %v1121
        %v1154 = vadd.f32 %v890, %v1122
        %v1155 = vadd.f32 %v891, %v1123
        %v1156 = vadd.f32 %v892, %v1124
        %v1157 = vadd.f32 %v893, %v1125
        %v1158 = vadd.f32 %v894, %v1126
        %v1159 = vadd.f32 %v895, %v1127
        %v1160 = vadd.f32 %v896, %v1128
        %v1161 = vadd.f32 %v897, %v1129
        %v1162 = vadd.f32 %v898, %v1130
        %v1163 = vadd.f32 %v899, %v1131
        %v1164 = vadd.f32 %v900, %v1132
        %v1165 = vadd.f32 %v901, %v1133
        %v1166 = vadd.f32 %v902, %v1134
        %v1167 = vadd.f32 %v903, %v1135
        %v1168 = vadd.f32 %v904, %v1136
        %v1169 = vadd.f32 %v905, %v1137
        %v1170 = vadd.f32 %v906, %v1138
        %v1171 = vadd.f32 %v907, %v1139
        %v1172 = vadd.f32 %v908, %v1140
        %v1173 = vadd.f32 %v909, %v1141
        %v1174 = vadd.f32 %v910, %v1142
        %v1175 = vadd.f32 %v911, %v1143
        %v1176 = vadd.f32 %v912, %v1144
        %v1177 = vld [vmem:[%s353] sm:$0xff]
        %v1178 = vld [vmem:[%s353 + $0x8] sm:$0xff]
        %v1179 = vld [vmem:[%s353 + $0x18] sm:$0xff]
        %v1180 = vld [vmem:[%s353 + $0x20] sm:$0xff]
        %v1181 = vld [vmem:[%s353 + $0x30] sm:$0xff]
        %v1182 = vld [vmem:[%s353 + $0x38] sm:$0xff]
        %v1183 = vld [vmem:[%s353 + $0x48] sm:$0xff]
        %v1184 = vld [vmem:[%s353 + $0x50] sm:$0xff]
        %v1185 = vld [vmem:[%s353 + $0x60] sm:$0xff]
        %v1186 = vld [vmem:[%s353 + $0x68] sm:$0xff]
        %v1187 = vld [vmem:[%s353 + $0x78] sm:$0xff]
        %v1188 = vld [vmem:[%s353 + $0x80] sm:$0xff]
        %v1189 = vld [vmem:[%s353 + $0x90] sm:$0xff]
        %v1190 = vld [vmem:[%s353 + $0x98] sm:$0xff]
        %v1191 = vld [vmem:[%s353 + $0xa8] sm:$0xff]
        %v1192 = vld [vmem:[%s353 + $0xb0] sm:$0xff]
        %v1193 = vld [vmem:[%s353 + $0xc0] sm:$0xff]
        %v1194 = vld [vmem:[%s353 + $0xc8] sm:$0xff]
        %v1195 = vld [vmem:[%s353 + $0xd8] sm:$0xff]
        %v1196 = vld [vmem:[%s353 + $0xe0] sm:$0xff]
        %v1197 = vld [vmem:[%s353 + $0xf0] sm:$0xff]
        %v1198 = vld [vmem:[%s353 + $0xf8] sm:$0xff]
        %v1199 = vld [vmem:[%s353 + $0x108] sm:$0xff]
        %v1200 = vld [vmem:[%s353 + $0x110] sm:$0xff]
        %v1201 = vld [vmem:[%s353 + $0x120] sm:$0xff]
        %v1202 = vld [vmem:[%s353 + $0x128] sm:$0xff]
        %v1203 = vld [vmem:[%s353 + $0x138] sm:$0xff]
        %v1204 = vld [vmem:[%s353 + $0x140] sm:$0xff]
        %v1205 = vld [vmem:[%s353 + $0x150] sm:$0xff]
        %v1206 = vld [vmem:[%s353 + $0x158] sm:$0xff]
        %v1207 = vld [vmem:[%s353 + $0x168] sm:$0xff]
        %v1208 = vld [vmem:[%s353 + $0x170] sm:$0xff]
        %s1209 = scalar_lea.vmem [#allocation8], 3
        %v1210 = vld [vmem:[%s1209] sm:$0x1]
        %1212 = vset.pattern.permute.xlu0 0
        %1213 = vperm.xlu0 %1212, %v1177
        %v1214 = vpop.permute.xlu0 %1213
        %1217 = vset.pattern.permute.xlu0 0
        %1218 = vperm.xlu0 %1217, %v1178
        %v1219 = vpop.permute.xlu0 %1218
        %1222 = vset.pattern.permute.xlu0 0
        %1223 = vperm.xlu0 %1222, %v1179
        %v1224 = vpop.permute.xlu0 %1223
        %1227 = vset.pattern.permute.xlu0 0
        %1228 = vperm.xlu0 %1227, %v1180
        %v1229 = vpop.permute.xlu0 %1228
        %1232 = vset.pattern.permute.xlu0 0
        %1233 = vperm.xlu0 %1232, %v1181
        %v1234 = vpop.permute.xlu0 %1233
        %1237 = vset.pattern.permute.xlu0 0
        %1238 = vperm.xlu0 %1237, %v1182
        %v1239 = vpop.permute.xlu0 %1238
        %1242 = vset.pattern.permute.xlu0 0
        %1243 = vperm.xlu0 %1242, %v1183
        %v1244 = vpop.permute.xlu0 %1243
        %1247 = vset.pattern.permute.xlu0 0
        %1248 = vperm.xlu0 %1247, %v1184
        %v1249 = vpop.permute.xlu0 %1248
        %1252 = vset.pattern.permute.xlu0 0
        %1253 = vperm.xlu0 %1252, %v1185
        %v1254 = vpop.permute.xlu0 %1253
        %1257 = vset.pattern.permute.xlu0 0
        %1258 = vperm.xlu0 %1257, %v1186
        %v1259 = vpop.permute.xlu0 %1258
        %1262 = vset.pattern.permute.xlu0 0
        %1263 = vperm.xlu0 %1262, %v1187
        %v1264 = vpop.permute.xlu0 %1263
        %1267 = vset.pattern.permute.xlu0 0
        %1268 = vperm.xlu0 %1267, %v1188
        %v1269 = vpop.permute.xlu0 %1268
        %1272 = vset.pattern.permute.xlu0 0
        %1273 = vperm.xlu0 %1272, %v1189
        %v1274 = vpop.permute.xlu0 %1273
        %1277 = vset.pattern.permute.xlu0 0
        %1278 = vperm.xlu0 %1277, %v1190
        %v1279 = vpop.permute.xlu0 %1278
        %1282 = vset.pattern.permute.xlu0 0
        %1283 = vperm.xlu0 %1282, %v1191
        %v1284 = vpop.permute.xlu0 %1283
        %1287 = vset.pattern.permute.xlu0 0
        %1288 = vperm.xlu0 %1287, %v1192
        %v1289 = vpop.permute.xlu0 %1288
        %1292 = vset.pattern.permute.xlu0 0
        %1293 = vperm.xlu0 %1292, %v1193
        %v1294 = vpop.permute.xlu0 %1293
        %1297 = vset.pattern.permute.xlu0 0
        %1298 = vperm.xlu0 %1297, %v1194
        %v1299 = vpop.permute.xlu0 %1298
        %1302 = vset.pattern.permute.xlu0 0
        %1303 = vperm.xlu0 %1302, %v1195
        %v1304 = vpop.permute.xlu0 %1303
        %1307 = vset.pattern.permute.xlu0 0
        %1308 = vperm.xlu0 %1307, %v1196
        %v1309 = vpop.permute.xlu0 %1308
        %1312 = vset.pattern.permute.xlu0 0
        %1313 = vperm.xlu0 %1312, %v1197
        %v1314 = vpop.permute.xlu0 %1313
        %1317 = vset.pattern.permute.xlu0 0
        %1318 = vperm.xlu0 %1317, %v1198
        %v1319 = vpop.permute.xlu0 %1318
        %1322 = vset.pattern.permute.xlu0 0
        %1323 = vperm.xlu0 %1322, %v1199
        %v1324 = vpop.permute.xlu0 %1323
        %1327 = vset.pattern.permute.xlu0 0
        %1328 = vperm.xlu0 %1327, %v1200
        %v1329 = vpop.permute.xlu0 %1328
        %1332 = vset.pattern.permute.xlu0 0
        %1333 = vperm.xlu0 %1332, %v1201
        %v1334 = vpop.permute.xlu0 %1333
        %1337 = vset.pattern.permute.xlu0 0
        %1338 = vperm.xlu0 %1337, %v1202
        %v1339 = vpop.permute.xlu0 %1338
        %1342 = vset.pattern.permute.xlu0 0
        %1343 = vperm.xlu0 %1342, %v1203
        %v1344 = vpop.permute.xlu0 %1343
        %1347 = vset.pattern.permute.xlu0 0
        %1348 = vperm.xlu0 %1347, %v1204
        %v1349 = vpop.permute.xlu0 %1348
        %1352 = vset.pattern.permute.xlu0 0
        %1353 = vperm.xlu0 %1352, %v1205
        %v1354 = vpop.permute.xlu0 %1353
        %1357 = vset.pattern.permute.xlu0 0
        %1358 = vperm.xlu0 %1357, %v1206
        %v1359 = vpop.permute.xlu0 %1358
        %1362 = vset.pattern.permute.xlu0 0
        %1363 = vperm.xlu0 %1362, %v1207
        %v1364 = vpop.permute.xlu0 %1363
        %1367 = vset.pattern.permute.xlu0 0
        %1368 = vperm.xlu0 %1367, %v1208
        %v1369 = vpop.permute.xlu0 %1368
        %v1372 = vlaneseq
        %v1373 = vshrl.u32 %v1372, 7
        %v1374 = vsub.s32 0, %v1373
        %v1375 = vrot.slane %v1210, %v1374
        %v1377 = vmul.f32 %v1214, %v1375
        %v1378 = vmul.f32 %v1219, %v1375
        %v1379 = vmul.f32 %v1224, %v1375
        %v1380 = vmul.f32 %v1229, %v1375
        %v1381 = vmul.f32 %v1234, %v1375
        %v1382 = vmul.f32 %v1239, %v1375
        %v1383 = vmul.f32 %v1244, %v1375
        %v1384 = vmul.f32 %v1249, %v1375
        %v1385 = vmul.f32 %v1254, %v1375
        %v1386 = vmul.f32 %v1259, %v1375
        %v1387 = vmul.f32 %v1264, %v1375
        %v1388 = vmul.f32 %v1269, %v1375
        %v1389 = vmul.f32 %v1274, %v1375
        %v1390 = vmul.f32 %v1279, %v1375
        %v1391 = vmul.f32 %v1284, %v1375
        %v1392 = vmul.f32 %v1289, %v1375
        %v1393 = vmul.f32 %v1294, %v1375
        %v1394 = vmul.f32 %v1299, %v1375
        %v1395 = vmul.f32 %v1304, %v1375
        %v1396 = vmul.f32 %v1309, %v1375
        %v1397 = vmul.f32 %v1314, %v1375
        %v1398 = vmul.f32 %v1319, %v1375
        %v1399 = vmul.f32 %v1324, %v1375
        %v1400 = vmul.f32 %v1329, %v1375
        %v1401 = vmul.f32 %v1334, %v1375
        %v1402 = vmul.f32 %v1339, %v1375
        %v1403 = vmul.f32 %v1344, %v1375
        %v1404 = vmul.f32 %v1349, %v1375
        %v1405 = vmul.f32 %v1354, %v1375
        %v1406 = vmul.f32 %v1359, %v1375
        %v1407 = vmul.f32 %v1364, %v1375
        %v1408 = vmul.f32 %v1369, %v1375
        %v1409 = vadd.f32 %v1145, %v1377
        %v1410 = vadd.f32 %v1146, %v1378
        %v1411 = vadd.f32 %v1147, %v1379
        %v1412 = vadd.f32 %v1148, %v1380
        %v1413 = vadd.f32 %v1149, %v1381
        %v1414 = vadd.f32 %v1150, %v1382
        %v1415 = vadd.f32 %v1151, %v1383
        %v1416 = vadd.f32 %v1152, %v1384
        %v1417 = vadd.f32 %v1153, %v1385
        %v1418 = vadd.f32 %v1154, %v1386
        %v1419 = vadd.f32 %v1155, %v1387
        %v1420 = vadd.f32 %v1156, %v1388
        %v1421 = vadd.f32 %v1157, %v1389
        %v1422 = vadd.f32 %v1158, %v1390
        %v1423 = vadd.f32 %v1159, %v1391
        %v1424 = vadd.f32 %v1160, %v1392
        %v1425 = vadd.f32 %v1161, %v1393
        %v1426 = vadd.f32 %v1162, %v1394
        %v1427 = vadd.f32 %v1163, %v1395
        %v1428 = vadd.f32 %v1164, %v1396
        %v1429 = vadd.f32 %v1165, %v1397
        %v1430 = vadd.f32 %v1166, %v1398
        %v1431 = vadd.f32 %v1167, %v1399
        %v1432 = vadd.f32 %v1168, %v1400
        %v1433 = vadd.f32 %v1169, %v1401
        %v1434 = vadd.f32 %v1170, %v1402
        %v1435 = vadd.f32 %v1171, %v1403
        %v1436 = vadd.f32 %v1172, %v1404
        %v1437 = vadd.f32 %v1173, %v1405
        %v1438 = vadd.f32 %v1174, %v1406
        %v1439 = vadd.f32 %v1175, %v1407
        %v1440 = vadd.f32 %v1176, %v1408
        %v1441 = vld [vmem:[%s353 + $0x1] sm:$0xff]
        %v1442 = vld [vmem:[%s353 + $0x9] sm:$0xff]
        %v1443 = vld [vmem:[%s353 + $0x19] sm:$0xff]
        %v1444 = vld [vmem:[%s353 + $0x21] sm:$0xff]
        %v1445 = vld [vmem:[%s353 + $0x31] sm:$0xff]
        %v1446 = vld [vmem:[%s353 + $0x39] sm:$0xff]
        %v1447 = vld [vmem:[%s353 + $0x49] sm:$0xff]
        %v1448 = vld [vmem:[%s353 + $0x51] sm:$0xff]
        %v1449 = vld [vmem:[%s353 + $0x61] sm:$0xff]
        %v1450 = vld [vmem:[%s353 + $0x69] sm:$0xff]
        %v1451 = vld [vmem:[%s353 + $0x79] sm:$0xff]
        %v1452 = vld [vmem:[%s353 + $0x81] sm:$0xff]
        %v1453 = vld [vmem:[%s353 + $0x91] sm:$0xff]
        %v1454 = vld [vmem:[%s353 + $0x99] sm:$0xff]
        %v1455 = vld [vmem:[%s353 + $0xa9] sm:$0xff]
        %v1456 = vld [vmem:[%s353 + $0xb1] sm:$0xff]
        %v1457 = vld [vmem:[%s353 + $0xc1] sm:$0xff]
        %v1458 = vld [vmem:[%s353 + $0xc9] sm:$0xff]
        %v1459 = vld [vmem:[%s353 + $0xd9] sm:$0xff]
        %v1460 = vld [vmem:[%s353 + $0xe1] sm:$0xff]
        %v1461 = vld [vmem:[%s353 + $0xf1] sm:$0xff]
        %v1462 = vld [vmem:[%s353 + $0xf9] sm:$0xff]
        %v1463 = vld [vmem:[%s353 + $0x109] sm:$0xff]
        %v1464 = vld [vmem:[%s353 + $0x111] sm:$0xff]
        %v1465 = vld [vmem:[%s353 + $0x121] sm:$0xff]
        %v1466 = vld [vmem:[%s353 + $0x129] sm:$0xff]
        %v1467 = vld [vmem:[%s353 + $0x139] sm:$0xff]
        %v1468 = vld [vmem:[%s353 + $0x141] sm:$0xff]
        %v1469 = vld [vmem:[%s353 + $0x151] sm:$0xff]
        %v1470 = vld [vmem:[%s353 + $0x159] sm:$0xff]
        %v1471 = vld [vmem:[%s353 + $0x169] sm:$0xff]
        %v1472 = vld [vmem:[%s353 + $0x171] sm:$0xff]
        %s1473 = scalar_lea.vmem [#allocation8], 4
        %v1474 = vld [vmem:[%s1473] sm:$0x1]
        %1476 = vset.pattern.permute.xlu0 0
        %1477 = vperm.xlu0 %1476, %v1441
        %v1478 = vpop.permute.xlu0 %1477
        %1481 = vset.pattern.permute.xlu0 0
        %1482 = vperm.xlu0 %1481, %v1442
        %v1483 = vpop.permute.xlu0 %1482
        %1486 = vset.pattern.permute.xlu0 0
        %1487 = vperm.xlu0 %1486, %v1443
        %v1488 = vpop.permute.xlu0 %1487
        %1491 = vset.pattern.permute.xlu0 0
        %1492 = vperm.xlu0 %1491, %v1444
        %v1493 = vpop.permute.xlu0 %1492
        %1496 = vset.pattern.permute.xlu0 0
        %1497 = vperm.xlu0 %1496, %v1445
        %v1498 = vpop.permute.xlu0 %1497
        %1501 = vset.pattern.permute.xlu0 0
        %1502 = vperm.xlu0 %1501, %v1446
        %v1503 = vpop.permute.xlu0 %1502
        %1506 = vset.pattern.permute.xlu0 0
        %1507 = vperm.xlu0 %1506, %v1447
        %v1508 = vpop.permute.xlu0 %1507
        %1511 = vset.pattern.permute.xlu0 0
        %1512 = vperm.xlu0 %1511, %v1448
        %v1513 = vpop.permute.xlu0 %1512
        %1516 = vset.pattern.permute.xlu0 0
        %1517 = vperm.xlu0 %1516, %v1449
        %v1518 = vpop.permute.xlu0 %1517
        %1521 = vset.pattern.permute.xlu0 0
        %1522 = vperm.xlu0 %1521, %v1450
        %v1523 = vpop.permute.xlu0 %1522
        %1526 = vset.pattern.permute.xlu0 0
        %1527 = vperm.xlu0 %1526, %v1451
        %v1528 = vpop.permute.xlu0 %1527
        %1531 = vset.pattern.permute.xlu0 0
        %1532 = vperm.xlu0 %1531, %v1452
        %v1533 = vpop.permute.xlu0 %1532
        %1536 = vset.pattern.permute.xlu0 0
        %1537 = vperm.xlu0 %1536, %v1453
        %v1538 = vpop.permute.xlu0 %1537
        %1541 = vset.pattern.permute.xlu0 0
        %1542 = vperm.xlu0 %1541, %v1454
        %v1543 = vpop.permute.xlu0 %1542
        %1546 = vset.pattern.permute.xlu0 0
        %1547 = vperm.xlu0 %1546, %v1455
        %v1548 = vpop.permute.xlu0 %1547
        %1551 = vset.pattern.permute.xlu0 0
        %1552 = vperm.xlu0 %1551, %v1456
        %v1553 = vpop.permute.xlu0 %1552
        %1556 = vset.pattern.permute.xlu0 0
        %1557 = vperm.xlu0 %1556, %v1457
        %v1558 = vpop.permute.xlu0 %1557
        %1561 = vset.pattern.permute.xlu0 0
        %1562 = vperm.xlu0 %1561, %v1458
        %v1563 = vpop.permute.xlu0 %1562
        %1566 = vset.pattern.permute.xlu0 0
        %1567 = vperm.xlu0 %1566, %v1459
        %v1568 = vpop.permute.xlu0 %1567
        %1571 = vset.pattern.permute.xlu0 0
        %1572 = vperm.xlu0 %1571, %v1460
        %v1573 = vpop.permute.xlu0 %1572
        %1576 = vset.pattern.permute.xlu0 0
        %1577 = vperm.xlu0 %1576, %v1461
        %v1578 = vpop.permute.xlu0 %1577
        %1581 = vset.pattern.permute.xlu0 0
        %1582 = vperm.xlu0 %1581, %v1462
        %v1583 = vpop.permute.xlu0 %1582
        %1586 = vset.pattern.permute.xlu0 0
        %1587 = vperm.xlu0 %1586, %v1463
        %v1588 = vpop.permute.xlu0 %1587
        %1591 = vset.pattern.permute.xlu0 0
        %1592 = vperm.xlu0 %1591, %v1464
        %v1593 = vpop.permute.xlu0 %1592
        %1596 = vset.pattern.permute.xlu0 0
        %1597 = vperm.xlu0 %1596, %v1465
        %v1598 = vpop.permute.xlu0 %1597
        %1601 = vset.pattern.permute.xlu0 0
        %1602 = vperm.xlu0 %1601, %v1466
        %v1603 = vpop.permute.xlu0 %1602
        %1606 = vset.pattern.permute.xlu0 0
        %1607 = vperm.xlu0 %1606, %v1467
        %v1608 = vpop.permute.xlu0 %1607
        %1611 = vset.pattern.permute.xlu0 0
        %1612 = vperm.xlu0 %1611, %v1468
        %v1613 = vpop.permute.xlu0 %1612
        %1616 = vset.pattern.permute.xlu0 0
        %1617 = vperm.xlu0 %1616, %v1469
        %v1618 = vpop.permute.xlu0 %1617
        %1621 = vset.pattern.permute.xlu0 0
        %1622 = vperm.xlu0 %1621, %v1470
        %v1623 = vpop.permute.xlu0 %1622
        %1626 = vset.pattern.permute.xlu0 0
        %1627 = vperm.xlu0 %1626, %v1471
        %v1628 = vpop.permute.xlu0 %1627
        %1631 = vset.pattern.permute.xlu0 0
        %1632 = vperm.xlu0 %1631, %v1472
        %v1633 = vpop.permute.xlu0 %1632
        %v1636 = vlaneseq
        %v1637 = vshrl.u32 %v1636, 7
        %v1638 = vsub.s32 0, %v1637
        %v1639 = vrot.slane %v1474, %v1638
        %v1641 = vmul.f32 %v1478, %v1639
        %v1642 = vmul.f32 %v1483, %v1639
        %v1643 = vmul.f32 %v1488, %v1639
        %v1644 = vmul.f32 %v1493, %v1639
        %v1645 = vmul.f32 %v1498, %v1639
        %v1646 = vmul.f32 %v1503, %v1639
        %v1647 = vmul.f32 %v1508, %v1639
        %v1648 = vmul.f32 %v1513, %v1639
        %v1649 = vmul.f32 %v1518, %v1639
        %v1650 = vmul.f32 %v1523, %v1639
        %v1651 = vmul.f32 %v1528, %v1639
        %v1652 = vmul.f32 %v1533, %v1639
        %v1653 = vmul.f32 %v1538, %v1639
        %v1654 = vmul.f32 %v1543, %v1639
        %v1655 = vmul.f32 %v1548, %v1639
        %v1656 = vmul.f32 %v1553, %v1639
        %v1657 = vmul.f32 %v1558, %v1639
        %v1658 = vmul.f32 %v1563, %v1639
        %v1659 = vmul.f32 %v1568, %v1639
        %v1660 = vmul.f32 %v1573, %v1639
        %v1661 = vmul.f32 %v1578, %v1639
        %v1662 = vmul.f32 %v1583, %v1639
        %v1663 = vmul.f32 %v1588, %v1639
        %v1664 = vmul.f32 %v1593, %v1639
        %v1665 = vmul.f32 %v1598, %v1639
        %v1666 = vmul.f32 %v1603, %v1639
        %v1667 = vmul.f32 %v1608, %v1639
        %v1668 = vmul.f32 %v1613, %v1639
        %v1669 = vmul.f32 %v1618, %v1639
        %v1670 = vmul.f32 %v1623, %v1639
        %v1671 = vmul.f32 %v1628, %v1639
        %v1672 = vmul.f32 %v1633, %v1639
        %v1673 = vadd.f32 %v1409, %v1641
        %v1674 = vadd.f32 %v1410, %v1642
        %v1675 = vadd.f32 %v1411, %v1643
        %v1676 = vadd.f32 %v1412, %v1644
        %v1677 = vadd.f32 %v1413, %v1645
        %v1678 = vadd.f32 %v1414, %v1646
        %v1679 = vadd.f32 %v1415, %v1647
        %v1680 = vadd.f32 %v1416, %v1648
        %v1681 = vadd.f32 %v1417, %v1649
        %v1682 = vadd.f32 %v1418, %v1650
        %v1683 = vadd.f32 %v1419, %v1651
        %v1684 = vadd.f32 %v1420, %v1652
        %v1685 = vadd.f32 %v1421, %v1653
        %v1686 = vadd.f32 %v1422, %v1654
        %v1687 = vadd.f32 %v1423, %v1655
        %v1688 = vadd.f32 %v1424, %v1656
        %v1689 = vadd.f32 %v1425, %v1657
        %v1690 = vadd.f32 %v1426, %v1658
        %v1691 = vadd.f32 %v1427, %v1659
        %v1692 = vadd.f32 %v1428, %v1660
        %v1693 = vadd.f32 %v1429, %v1661
        %v1694 = vadd.f32 %v1430, %v1662
        %v1695 = vadd.f32 %v1431, %v1663
        %v1696 = vadd.f32 %v1432, %v1664
        %v1697 = vadd.f32 %v1433, %v1665
        %v1698 = vadd.f32 %v1434, %v1666
        %v1699 = vadd.f32 %v1435, %v1667
        %v1700 = vadd.f32 %v1436, %v1668
        %v1701 = vadd.f32 %v1437, %v1669
        %v1702 = vadd.f32 %v1438, %v1670
        %v1703 = vadd.f32 %v1439, %v1671
        %v1704 = vadd.f32 %v1440, %v1672
        %v1705 = vld [vmem:[%s353 + $0x2] sm:$0xff]
        %v1706 = vld [vmem:[%s353 + $0xa] sm:$0xff]
        %v1707 = vld [vmem:[%s353 + $0x1a] sm:$0xff]
        %v1708 = vld [vmem:[%s353 + $0x22] sm:$0xff]
        %v1709 = vld [vmem:[%s353 + $0x32] sm:$0xff]
        %v1710 = vld [vmem:[%s353 + $0x3a] sm:$0xff]
        %v1711 = vld [vmem:[%s353 + $0x4a] sm:$0xff]
        %v1712 = vld [vmem:[%s353 + $0x52] sm:$0xff]
        %v1713 = vld [vmem:[%s353 + $0x62] sm:$0xff]
        %v1714 = vld [vmem:[%s353 + $0x6a] sm:$0xff]
        %v1715 = vld [vmem:[%s353 + $0x7a] sm:$0xff]
        %v1716 = vld [vmem:[%s353 + $0x82] sm:$0xff]
        %v1717 = vld [vmem:[%s353 + $0x92] sm:$0xff]
        %v1718 = vld [vmem:[%s353 + $0x9a] sm:$0xff]
        %v1719 = vld [vmem:[%s353 + $0xaa] sm:$0xff]
        %v1720 = vld [vmem:[%s353 + $0xb2] sm:$0xff]
        %v1721 = vld [vmem:[%s353 + $0xc2] sm:$0xff]
        %v1722 = vld [vmem:[%s353 + $0xca] sm:$0xff]
        %v1723 = vld [vmem:[%s353 + $0xda] sm:$0xff]
        %v1724 = vld [vmem:[%s353 + $0xe2] sm:$0xff]
        %v1725 = vld [vmem:[%s353 + $0xf2] sm:$0xff]
        %v1726 = vld [vmem:[%s353 + $0xfa] sm:$0xff]
        %v1727 = vld [vmem:[%s353 + $0x10a] sm:$0xff]
        %v1728 = vld [vmem:[%s353 + $0x112] sm:$0xff]
        %v1729 = vld [vmem:[%s353 + $0x122] sm:$0xff]
        %v1730 = vld [vmem:[%s353 + $0x12a] sm:$0xff]
        %v1731 = vld [vmem:[%s353 + $0x13a] sm:$0xff]
        %v1732 = vld [vmem:[%s353 + $0x142] sm:$0xff]
        %v1733 = vld [vmem:[%s353 + $0x152] sm:$0xff]
        %v1734 = vld [vmem:[%s353 + $0x15a] sm:$0xff]
        %v1735 = vld [vmem:[%s353 + $0x16a] sm:$0xff]
        %v1736 = vld [vmem:[%s353 + $0x172] sm:$0xff]
        %s1737 = scalar_lea.vmem [#allocation8], 5
        %v1738 = vld [vmem:[%s1737] sm:$0x1]
        %1740 = vset.pattern.permute.xlu0 0
        %1741 = vperm.xlu0 %1740, %v1705
        %v1742 = vpop.permute.xlu0 %1741
        %1745 = vset.pattern.permute.xlu0 0
        %1746 = vperm.xlu0 %1745, %v1706
        %v1747 = vpop.permute.xlu0 %1746
        %1750 = vset.pattern.permute.xlu0 0
        %1751 = vperm.xlu0 %1750, %v1707
        %v1752 = vpop.permute.xlu0 %1751
        %1755 = vset.pattern.permute.xlu0 0
        %1756 = vperm.xlu0 %1755, %v1708
        %v1757 = vpop.permute.xlu0 %1756
        %1760 = vset.pattern.permute.xlu0 0
        %1761 = vperm.xlu0 %1760, %v1709
        %v1762 = vpop.permute.xlu0 %1761
        %1765 = vset.pattern.permute.xlu0 0
        %1766 = vperm.xlu0 %1765, %v1710
        %v1767 = vpop.permute.xlu0 %1766
        %1770 = vset.pattern.permute.xlu0 0
        %1771 = vperm.xlu0 %1770, %v1711
        %v1772 = vpop.permute.xlu0 %1771
        %1775 = vset.pattern.permute.xlu0 0
        %1776 = vperm.xlu0 %1775, %v1712
        %v1777 = vpop.permute.xlu0 %1776
        %1780 = vset.pattern.permute.xlu0 0
        %1781 = vperm.xlu0 %1780, %v1713
        %v1782 = vpop.permute.xlu0 %1781
        %1785 = vset.pattern.permute.xlu0 0
        %1786 = vperm.xlu0 %1785, %v1714
        %v1787 = vpop.permute.xlu0 %1786
        %1790 = vset.pattern.permute.xlu0 0
        %1791 = vperm.xlu0 %1790, %v1715
        %v1792 = vpop.permute.xlu0 %1791
        %1795 = vset.pattern.permute.xlu0 0
        %1796 = vperm.xlu0 %1795, %v1716
        %v1797 = vpop.permute.xlu0 %1796
        %1800 = vset.pattern.permute.xlu0 0
        %1801 = vperm.xlu0 %1800, %v1717
        %v1802 = vpop.permute.xlu0 %1801
        %1805 = vset.pattern.permute.xlu0 0
        %1806 = vperm.xlu0 %1805, %v1718
        %v1807 = vpop.permute.xlu0 %1806
        %1810 = vset.pattern.permute.xlu0 0
        %1811 = vperm.xlu0 %1810, %v1719
        %v1812 = vpop.permute.xlu0 %1811
        %1815 = vset.pattern.permute.xlu0 0
        %1816 = vperm.xlu0 %1815, %v1720
        %v1817 = vpop.permute.xlu0 %1816
        %1820 = vset.pattern.permute.xlu0 0
        %1821 = vperm.xlu0 %1820, %v1721
        %v1822 = vpop.permute.xlu0 %1821
        %1825 = vset.pattern.permute.xlu0 0
        %1826 = vperm.xlu0 %1825, %v1722
        %v1827 = vpop.permute.xlu0 %1826
        %1830 = vset.pattern.permute.xlu0 0
        %1831 = vperm.xlu0 %1830, %v1723
        %v1832 = vpop.permute.xlu0 %1831
        %1835 = vset.pattern.permute.xlu0 0
        %1836 = vperm.xlu0 %1835, %v1724
        %v1837 = vpop.permute.xlu0 %1836
        %1840 = vset.pattern.permute.xlu0 0
        %1841 = vperm.xlu0 %1840, %v1725
        %v1842 = vpop.permute.xlu0 %1841
        %1845 = vset.pattern.permute.xlu0 0
        %1846 = vperm.xlu0 %1845, %v1726
        %v1847 = vpop.permute.xlu0 %1846
        %1850 = vset.pattern.permute.xlu0 0
        %1851 = vperm.xlu0 %1850, %v1727
        %v1852 = vpop.permute.xlu0 %1851
        %1855 = vset.pattern.permute.xlu0 0
        %1856 = vperm.xlu0 %1855, %v1728
        %v1857 = vpop.permute.xlu0 %1856
        %1860 = vset.pattern.permute.xlu0 0
        %1861 = vperm.xlu0 %1860, %v1729
        %v1862 = vpop.permute.xlu0 %1861
        %1865 = vset.pattern.permute.xlu0 0
        %1866 = vperm.xlu0 %1865, %v1730
        %v1867 = vpop.permute.xlu0 %1866
        %1870 = vset.pattern.permute.xlu0 0
        %1871 = vperm.xlu0 %1870, %v1731
        %v1872 = vpop.permute.xlu0 %1871
        %1875 = vset.pattern.permute.xlu0 0
        %1876 = vperm.xlu0 %1875, %v1732
        %v1877 = vpop.permute.xlu0 %1876
        %1880 = vset.pattern.permute.xlu0 0
        %1881 = vperm.xlu0 %1880, %v1733
        %v1882 = vpop.permute.xlu0 %1881
        %1885 = vset.pattern.permute.xlu0 0
        %1886 = vperm.xlu0 %1885, %v1734
        %v1887 = vpop.permute.xlu0 %1886
        %1890 = vset.pattern.permute.xlu0 0
        %1891 = vperm.xlu0 %1890, %v1735
        %v1892 = vpop.permute.xlu0 %1891
        %1895 = vset.pattern.permute.xlu0 0
        %1896 = vperm.xlu0 %1895, %v1736
        %v1897 = vpop.permute.xlu0 %1896
        %v1900 = vlaneseq
        %v1901 = vshrl.u32 %v1900, 7
        %v1902 = vsub.s32 0, %v1901
        %v1903 = vrot.slane %v1738, %v1902
        %v1905 = vmul.f32 %v1742, %v1903
        %v1906 = vmul.f32 %v1747, %v1903
        %v1907 = vmul.f32 %v1752, %v1903
        %v1908 = vmul.f32 %v1757, %v1903
        %v1909 = vmul.f32 %v1762, %v1903
        %v1910 = vmul.f32 %v1767, %v1903
        %v1911 = vmul.f32 %v1772, %v1903
        %v1912 = vmul.f32 %v1777, %v1903
        %v1913 = vmul.f32 %v1782, %v1903
        %v1914 = vmul.f32 %v1787, %v1903
        %v1915 = vmul.f32 %v1792, %v1903
        %v1916 = vmul.f32 %v1797, %v1903
        %v1917 = vmul.f32 %v1802, %v1903
        %v1918 = vmul.f32 %v1807, %v1903
        %v1919 = vmul.f32 %v1812, %v1903
        %v1920 = vmul.f32 %v1817, %v1903
        %v1921 = vmul.f32 %v1822, %v1903
        %v1922 = vmul.f32 %v1827, %v1903
        %v1923 = vmul.f32 %v1832, %v1903
        %v1924 = vmul.f32 %v1837, %v1903
        %v1925 = vmul.f32 %v1842, %v1903
        %v1926 = vmul.f32 %v1847, %v1903
        %v1927 = vmul.f32 %v1852, %v1903
        %v1928 = vmul.f32 %v1857, %v1903
        %v1929 = vmul.f32 %v1862, %v1903
        %v1930 = vmul.f32 %v1867, %v1903
        %v1931 = vmul.f32 %v1872, %v1903
        %v1932 = vmul.f32 %v1877, %v1903
        %v1933 = vmul.f32 %v1882, %v1903
        %v1934 = vmul.f32 %v1887, %v1903
        %v1935 = vmul.f32 %v1892, %v1903
        %v1936 = vmul.f32 %v1897, %v1903
        %v1937 = vadd.f32 %v1673, %v1905
        %v1938 = vadd.f32 %v1674, %v1906
        %v1939 = vadd.f32 %v1675, %v1907
        %v1940 = vadd.f32 %v1676, %v1908
        %v1941 = vadd.f32 %v1677, %v1909
        %v1942 = vadd.f32 %v1678, %v1910
        %v1943 = vadd.f32 %v1679, %v1911
        %v1944 = vadd.f32 %v1680, %v1912
        %v1945 = vadd.f32 %v1681, %v1913
        %v1946 = vadd.f32 %v1682, %v1914
        %v1947 = vadd.f32 %v1683, %v1915
        %v1948 = vadd.f32 %v1684, %v1916
        %v1949 = vadd.f32 %v1685, %v1917
        %v1950 = vadd.f32 %v1686, %v1918
        %v1951 = vadd.f32 %v1687, %v1919
        %v1952 = vadd.f32 %v1688, %v1920
        %v1953 = vadd.f32 %v1689, %v1921
        %v1954 = vadd.f32 %v1690, %v1922
        %v1955 = vadd.f32 %v1691, %v1923
        %v1956 = vadd.f32 %v1692, %v1924
        %v1957 = vadd.f32 %v1693, %v1925
        %v1958 = vadd.f32 %v1694, %v1926
        %v1959 = vadd.f32 %v1695, %v1927
        %v1960 = vadd.f32 %v1696, %v1928
        %v1961 = vadd.f32 %v1697, %v1929
        %v1962 = vadd.f32 %v1698, %v1930
        %v1963 = vadd.f32 %v1699, %v1931
        %v1964 = vadd.f32 %v1700, %v1932
        %v1965 = vadd.f32 %v1701, %v1933
        %v1966 = vadd.f32 %v1702, %v1934
        %v1967 = vadd.f32 %v1703, %v1935
        %v1968 = vadd.f32 %v1704, %v1936
        %s1969 = scalar_lea.vmem [#allocation2], 48
        %v1970 = vld [vmem:[%s1969] sm:$0xff]
        %v1971 = vld [vmem:[%s1969 + $0x8] sm:$0xff]
        %v1972 = vld [vmem:[%s1969 + $0x18] sm:$0xff]
        %v1973 = vld [vmem:[%s1969 + $0x20] sm:$0xff]
        %v1974 = vld [vmem:[%s1969 + $0x30] sm:$0xff]
        %v1975 = vld [vmem:[%s1969 + $0x38] sm:$0xff]
        %v1976 = vld [vmem:[%s1969 + $0x48] sm:$0xff]
        %v1977 = vld [vmem:[%s1969 + $0x50] sm:$0xff]
        %v1978 = vld [vmem:[%s1969 + $0x60] sm:$0xff]
        %v1979 = vld [vmem:[%s1969 + $0x68] sm:$0xff]
        %v1980 = vld [vmem:[%s1969 + $0x78] sm:$0xff]
        %v1981 = vld [vmem:[%s1969 + $0x80] sm:$0xff]
        %v1982 = vld [vmem:[%s1969 + $0x90] sm:$0xff]
        %v1983 = vld [vmem:[%s1969 + $0x98] sm:$0xff]
        %v1984 = vld [vmem:[%s1969 + $0xa8] sm:$0xff]
        %v1985 = vld [vmem:[%s1969 + $0xb0] sm:$0xff]
        %v1986 = vld [vmem:[%s1969 + $0xc0] sm:$0xff]
        %v1987 = vld [vmem:[%s1969 + $0xc8] sm:$0xff]
        %v1988 = vld [vmem:[%s1969 + $0xd8] sm:$0xff]
        %v1989 = vld [vmem:[%s1969 + $0xe0] sm:$0xff]
        %v1990 = vld [vmem:[%s1969 + $0xf0] sm:$0xff]
        %v1991 = vld [vmem:[%s1969 + $0xf8] sm:$0xff]
        %v1992 = vld [vmem:[%s1969 + $0x108] sm:$0xff]
        %v1993 = vld [vmem:[%s1969 + $0x110] sm:$0xff]
        %v1994 = vld [vmem:[%s1969 + $0x120] sm:$0xff]
        %v1995 = vld [vmem:[%s1969 + $0x128] sm:$0xff]
        %v1996 = vld [vmem:[%s1969 + $0x138] sm:$0xff]
        %v1997 = vld [vmem:[%s1969 + $0x140] sm:$0xff]
        %v1998 = vld [vmem:[%s1969 + $0x150] sm:$0xff]
        %v1999 = vld [vmem:[%s1969 + $0x158] sm:$0xff]
        %v2000 = vld [vmem:[%s1969 + $0x168] sm:$0xff]
        %v2001 = vld [vmem:[%s1969 + $0x170] sm:$0xff]
        %s2002 = scalar_lea.vmem [#allocation8], 6
        %v2003 = vld [vmem:[%s2002] sm:$0x1]
        %2005 = vset.pattern.permute.xlu0 0
        %2006 = vperm.xlu0 %2005, %v1970
        %v2007 = vpop.permute.xlu0 %2006
        %2010 = vset.pattern.permute.xlu0 0
        %2011 = vperm.xlu0 %2010, %v1971
        %v2012 = vpop.permute.xlu0 %2011
        %2015 = vset.pattern.permute.xlu0 0
        %2016 = vperm.xlu0 %2015, %v1972
        %v2017 = vpop.permute.xlu0 %2016
        %2020 = vset.pattern.permute.xlu0 0
        %2021 = vperm.xlu0 %2020, %v1973
        %v2022 = vpop.permute.xlu0 %2021
        %2025 = vset.pattern.permute.xlu0 0
        %2026 = vperm.xlu0 %2025, %v1974
        %v2027 = vpop.permute.xlu0 %2026
        %2030 = vset.pattern.permute.xlu0 0
        %2031 = vperm.xlu0 %2030, %v1975
        %v2032 = vpop.permute.xlu0 %2031
        %2035 = vset.pattern.permute.xlu0 0
        %2036 = vperm.xlu0 %2035, %v1976
        %v2037 = vpop.permute.xlu0 %2036
        %2040 = vset.pattern.permute.xlu0 0
        %2041 = vperm.xlu0 %2040, %v1977
        %v2042 = vpop.permute.xlu0 %2041
        %2045 = vset.pattern.permute.xlu0 0
        %2046 = vperm.xlu0 %2045, %v1978
        %v2047 = vpop.permute.xlu0 %2046
        %2050 = vset.pattern.permute.xlu0 0
        %2051 = vperm.xlu0 %2050, %v1979
        %v2052 = vpop.permute.xlu0 %2051
        %2055 = vset.pattern.permute.xlu0 0
        %2056 = vperm.xlu0 %2055, %v1980
        %v2057 = vpop.permute.xlu0 %2056
        %2060 = vset.pattern.permute.xlu0 0
        %2061 = vperm.xlu0 %2060, %v1981
        %v2062 = vpop.permute.xlu0 %2061
        %2065 = vset.pattern.permute.xlu0 0
        %2066 = vperm.xlu0 %2065, %v1982
        %v2067 = vpop.permute.xlu0 %2066
        %2070 = vset.pattern.permute.xlu0 0
        %2071 = vperm.xlu0 %2070, %v1983
        %v2072 = vpop.permute.xlu0 %2071
        %2075 = vset.pattern.permute.xlu0 0
        %2076 = vperm.xlu0 %2075, %v1984
        %v2077 = vpop.permute.xlu0 %2076
        %2080 = vset.pattern.permute.xlu0 0
        %2081 = vperm.xlu0 %2080, %v1985
        %v2082 = vpop.permute.xlu0 %2081
        %2085 = vset.pattern.permute.xlu0 0
        %2086 = vperm.xlu0 %2085, %v1986
        %v2087 = vpop.permute.xlu0 %2086
        %2090 = vset.pattern.permute.xlu0 0
        %2091 = vperm.xlu0 %2090, %v1987
        %v2092 = vpop.permute.xlu0 %2091
        %2095 = vset.pattern.permute.xlu0 0
        %2096 = vperm.xlu0 %2095, %v1988
        %v2097 = vpop.permute.xlu0 %2096
        %2100 = vset.pattern.permute.xlu0 0
        %2101 = vperm.xlu0 %2100, %v1989
        %v2102 = vpop.permute.xlu0 %2101
        %2105 = vset.pattern.permute.xlu0 0
        %2106 = vperm.xlu0 %2105, %v1990
        %v2107 = vpop.permute.xlu0 %2106
        %2110 = vset.pattern.permute.xlu0 0
        %2111 = vperm.xlu0 %2110, %v1991
        %v2112 = vpop.permute.xlu0 %2111
        %2115 = vset.pattern.permute.xlu0 0
        %2116 = vperm.xlu0 %2115, %v1992
        %v2117 = vpop.permute.xlu0 %2116
        %2120 = vset.pattern.permute.xlu0 0
        %2121 = vperm.xlu0 %2120, %v1993
        %v2122 = vpop.permute.xlu0 %2121
        %2125 = vset.pattern.permute.xlu0 0
        %2126 = vperm.xlu0 %2125, %v1994
        %v2127 = vpop.permute.xlu0 %2126
        %2130 = vset.pattern.permute.xlu0 0
        %2131 = vperm.xlu0 %2130, %v1995
        %v2132 = vpop.permute.xlu0 %2131
        %2135 = vset.pattern.permute.xlu0 0
        %2136 = vperm.xlu0 %2135, %v1996
        %v2137 = vpop.permute.xlu0 %2136
        %2140 = vset.pattern.permute.xlu0 0
        %2141 = vperm.xlu0 %2140, %v1997
        %v2142 = vpop.permute.xlu0 %2141
        %2145 = vset.pattern.permute.xlu0 0
        %2146 = vperm.xlu0 %2145, %v1998
        %v2147 = vpop.permute.xlu0 %2146
        %2150 = vset.pattern.permute.xlu0 0
        %2151 = vperm.xlu0 %2150, %v1999
        %v2152 = vpop.permute.xlu0 %2151
        %2155 = vset.pattern.permute.xlu0 0
        %2156 = vperm.xlu0 %2155, %v2000
        %v2157 = vpop.permute.xlu0 %2156
        %2160 = vset.pattern.permute.xlu0 0
        %2161 = vperm.xlu0 %2160, %v2001
        %v2162 = vpop.permute.xlu0 %2161
        %v2165 = vlaneseq
        %v2166 = vshrl.u32 %v2165, 7
        %v2167 = vsub.s32 0, %v2166
        %v2168 = vrot.slane %v2003, %v2167
        %v2170 = vmul.f32 %v2007, %v2168
        %v2171 = vmul.f32 %v2012, %v2168
        %v2172 = vmul.f32 %v2017, %v2168
        %v2173 = vmul.f32 %v2022, %v2168
        %v2174 = vmul.f32 %v2027, %v2168
        %v2175 = vmul.f32 %v2032, %v2168
        %v2176 = vmul.f32 %v2037, %v2168
        %v2177 = vmul.f32 %v2042, %v2168
        %v2178 = vmul.f32 %v2047, %v2168
        %v2179 = vmul.f32 %v2052, %v2168
        %v2180 = vmul.f32 %v2057, %v2168
        %v2181 = vmul.f32 %v2062, %v2168
        %v2182 = vmul.f32 %v2067, %v2168
        %v2183 = vmul.f32 %v2072, %v2168
        %v2184 = vmul.f32 %v2077, %v2168
        %v2185 = vmul.f32 %v2082, %v2168
        %v2186 = vmul.f32 %v2087, %v2168
        %v2187 = vmul.f32 %v2092, %v2168
        %v2188 = vmul.f32 %v2097, %v2168
        %v2189 = vmul.f32 %v2102, %v2168
        %v2190 = vmul.f32 %v2107, %v2168
        %v2191 = vmul.f32 %v2112, %v2168
        %v2192 = vmul.f32 %v2117, %v2168
        %v2193 = vmul.f32 %v2122, %v2168
        %v2194 = vmul.f32 %v2127, %v2168
        %v2195 = vmul.f32 %v2132, %v2168
        %v2196 = vmul.f32 %v2137, %v2168
        %v2197 = vmul.f32 %v2142, %v2168
        %v2198 = vmul.f32 %v2147, %v2168
        %v2199 = vmul.f32 %v2152, %v2168
        %v2200 = vmul.f32 %v2157, %v2168
        %v2201 = vmul.f32 %v2162, %v2168
        %v2202 = vadd.f32 %v1937, %v2170
        %v2203 = vadd.f32 %v1938, %v2171
        %v2204 = vadd.f32 %v1939, %v2172
        %v2205 = vadd.f32 %v1940, %v2173
        %v2206 = vadd.f32 %v1941, %v2174
        %v2207 = vadd.f32 %v1942, %v2175
        %v2208 = vadd.f32 %v1943, %v2176
        %v2209 = vadd.f32 %v1944, %v2177
        %v2210 = vadd.f32 %v1945, %v2178
        %v2211 = vadd.f32 %v1946, %v2179
        %v2212 = vadd.f32 %v1947, %v2180
        %v2213 = vadd.f32 %v1948, %v2181
        %v2214 = vadd.f32 %v1949, %v2182
        %v2215 = vadd.f32 %v1950, %v2183
        %v2216 = vadd.f32 %v1951, %v2184
        %v2217 = vadd.f32 %v1952, %v2185
        %v2218 = vadd.f32 %v1953, %v2186
        %v2219 = vadd.f32 %v1954, %v2187
        %v2220 = vadd.f32 %v1955, %v2188
        %v2221 = vadd.f32 %v1956, %v2189
        %v2222 = vadd.f32 %v1957, %v2190
        %v2223 = vadd.f32 %v1958, %v2191
        %v2224 = vadd.f32 %v1959, %v2192
        %v2225 = vadd.f32 %v1960, %v2193
        %v2226 = vadd.f32 %v1961, %v2194
        %v2227 = vadd.f32 %v1962, %v2195
        %v2228 = vadd.f32 %v1963, %v2196
        %v2229 = vadd.f32 %v1964, %v2197
        %v2230 = vadd.f32 %v1965, %v2198
        %v2231 = vadd.f32 %v1966, %v2199
        %v2232 = vadd.f32 %v1967, %v2200
        %v2233 = vadd.f32 %v1968, %v2201
        %v2234 = vld [vmem:[%s1969 + $0x1] sm:$0xff]
        %v2235 = vld [vmem:[%s1969 + $0x9] sm:$0xff]
        %v2236 = vld [vmem:[%s1969 + $0x19] sm:$0xff]
        %v2237 = vld [vmem:[%s1969 + $0x21] sm:$0xff]
        %v2238 = vld [vmem:[%s1969 + $0x31] sm:$0xff]
        %v2239 = vld [vmem:[%s1969 + $0x39] sm:$0xff]
        %v2240 = vld [vmem:[%s1969 + $0x49] sm:$0xff]
        %v2241 = vld [vmem:[%s1969 + $0x51] sm:$0xff]
        %v2242 = vld [vmem:[%s1969 + $0x61] sm:$0xff]
        %v2243 = vld [vmem:[%s1969 + $0x69] sm:$0xff]
        %v2244 = vld [vmem:[%s1969 + $0x79] sm:$0xff]
        %v2245 = vld [vmem:[%s1969 + $0x81] sm:$0xff]
        %v2246 = vld [vmem:[%s1969 + $0x91] sm:$0xff]
        %v2247 = vld [vmem:[%s1969 + $0x99] sm:$0xff]
        %v2248 = vld [vmem:[%s1969 + $0xa9] sm:$0xff]
        %v2249 = vld [vmem:[%s1969 + $0xb1] sm:$0xff]
        %v2250 = vld [vmem:[%s1969 + $0xc1] sm:$0xff]
        %v2251 = vld [vmem:[%s1969 + $0xc9] sm:$0xff]
        %v2252 = vld [vmem:[%s1969 + $0xd9] sm:$0xff]
        %v2253 = vld [vmem:[%s1969 + $0xe1] sm:$0xff]
        %v2254 = vld [vmem:[%s1969 + $0xf1] sm:$0xff]
        %v2255 = vld [vmem:[%s1969 + $0xf9] sm:$0xff]
        %v2256 = vld [vmem:[%s1969 + $0x109] sm:$0xff]
        %v2257 = vld [vmem:[%s1969 + $0x111] sm:$0xff]
        %v2258 = vld [vmem:[%s1969 + $0x121] sm:$0xff]
        %v2259 = vld [vmem:[%s1969 + $0x129] sm:$0xff]
        %v2260 = vld [vmem:[%s1969 + $0x139] sm:$0xff]
        %v2261 = vld [vmem:[%s1969 + $0x141] sm:$0xff]
        %v2262 = vld [vmem:[%s1969 + $0x151] sm:$0xff]
        %v2263 = vld [vmem:[%s1969 + $0x159] sm:$0xff]
        %v2264 = vld [vmem:[%s1969 + $0x169] sm:$0xff]
        %v2265 = vld [vmem:[%s1969 + $0x171] sm:$0xff]
        %s2266 = scalar_lea.vmem [#allocation8], 7
        %v2267 = vld [vmem:[%s2266] sm:$0x1]
        %2269 = vset.pattern.permute.xlu0 0
        %2270 = vperm.xlu0 %2269, %v2234
        %v2271 = vpop.permute.xlu0 %2270
        %2274 = vset.pattern.permute.xlu0 0
        %2275 = vperm.xlu0 %2274, %v2235
        %v2276 = vpop.permute.xlu0 %2275
        %2279 = vset.pattern.permute.xlu0 0
        %2280 = vperm.xlu0 %2279, %v2236
        %v2281 = vpop.permute.xlu0 %2280
        %2284 = vset.pattern.permute.xlu0 0
        %2285 = vperm.xlu0 %2284, %v2237
        %v2286 = vpop.permute.xlu0 %2285
        %2289 = vset.pattern.permute.xlu0 0
        %2290 = vperm.xlu0 %2289, %v2238
        %v2291 = vpop.permute.xlu0 %2290
        %2294 = vset.pattern.permute.xlu0 0
        %2295 = vperm.xlu0 %2294, %v2239
        %v2296 = vpop.permute.xlu0 %2295
        %2299 = vset.pattern.permute.xlu0 0
        %2300 = vperm.xlu0 %2299, %v2240
        %v2301 = vpop.permute.xlu0 %2300
        %2304 = vset.pattern.permute.xlu0 0
        %2305 = vperm.xlu0 %2304, %v2241
        %v2306 = vpop.permute.xlu0 %2305
        %2309 = vset.pattern.permute.xlu0 0
        %2310 = vperm.xlu0 %2309, %v2242
        %v2311 = vpop.permute.xlu0 %2310
        %2314 = vset.pattern.permute.xlu0 0
        %2315 = vperm.xlu0 %2314, %v2243
        %v2316 = vpop.permute.xlu0 %2315
        %2319 = vset.pattern.permute.xlu0 0
        %2320 = vperm.xlu0 %2319, %v2244
        %v2321 = vpop.permute.xlu0 %2320
        %2324 = vset.pattern.permute.xlu0 0
        %2325 = vperm.xlu0 %2324, %v2245
        %v2326 = vpop.permute.xlu0 %2325
        %2329 = vset.pattern.permute.xlu0 0
        %2330 = vperm.xlu0 %2329, %v2246
        %v2331 = vpop.permute.xlu0 %2330
        %2334 = vset.pattern.permute.xlu0 0
        %2335 = vperm.xlu0 %2334, %v2247
        %v2336 = vpop.permute.xlu0 %2335
        %2339 = vset.pattern.permute.xlu0 0
        %2340 = vperm.xlu0 %2339, %v2248
        %v2341 = vpop.permute.xlu0 %2340
        %2344 = vset.pattern.permute.xlu0 0
        %2345 = vperm.xlu0 %2344, %v2249
        %v2346 = vpop.permute.xlu0 %2345
        %2349 = vset.pattern.permute.xlu0 0
        %2350 = vperm.xlu0 %2349, %v2250
        %v2351 = vpop.permute.xlu0 %2350
        %2354 = vset.pattern.permute.xlu0 0
        %2355 = vperm.xlu0 %2354, %v2251
        %v2356 = vpop.permute.xlu0 %2355
        %2359 = vset.pattern.permute.xlu0 0
        %2360 = vperm.xlu0 %2359, %v2252
        %v2361 = vpop.permute.xlu0 %2360
        %2364 = vset.pattern.permute.xlu0 0
        %2365 = vperm.xlu0 %2364, %v2253
        %v2366 = vpop.permute.xlu0 %2365
        %2369 = vset.pattern.permute.xlu0 0
        %2370 = vperm.xlu0 %2369, %v2254
        %v2371 = vpop.permute.xlu0 %2370
        %2374 = vset.pattern.permute.xlu0 0
        %2375 = vperm.xlu0 %2374, %v2255
        %v2376 = vpop.permute.xlu0 %2375
        %2379 = vset.pattern.permute.xlu0 0
        %2380 = vperm.xlu0 %2379, %v2256
        %v2381 = vpop.permute.xlu0 %2380
        %2384 = vset.pattern.permute.xlu0 0
        %2385 = vperm.xlu0 %2384, %v2257
        %v2386 = vpop.permute.xlu0 %2385
        %2389 = vset.pattern.permute.xlu0 0
        %2390 = vperm.xlu0 %2389, %v2258
        %v2391 = vpop.permute.xlu0 %2390
        %2394 = vset.pattern.permute.xlu0 0
        %2395 = vperm.xlu0 %2394, %v2259
        %v2396 = vpop.permute.xlu0 %2395
        %2399 = vset.pattern.permute.xlu0 0
        %2400 = vperm.xlu0 %2399, %v2260
        %v2401 = vpop.permute.xlu0 %2400
        %2404 = vset.pattern.permute.xlu0 0
        %2405 = vperm.xlu0 %2404, %v2261
        %v2406 = vpop.permute.xlu0 %2405
        %2409 = vset.pattern.permute.xlu0 0
        %2410 = vperm.xlu0 %2409, %v2262
        %v2411 = vpop.permute.xlu0 %2410
        %2414 = vset.pattern.permute.xlu0 0
        %2415 = vperm.xlu0 %2414, %v2263
        %v2416 = vpop.permute.xlu0 %2415
        %2419 = vset.pattern.permute.xlu0 0
        %2420 = vperm.xlu0 %2419, %v2264
        %v2421 = vpop.permute.xlu0 %2420
        %2424 = vset.pattern.permute.xlu0 0
        %2425 = vperm.xlu0 %2424, %v2265
        %v2426 = vpop.permute.xlu0 %2425
        %v2429 = vlaneseq
        %v2430 = vshrl.u32 %v2429, 7
        %v2431 = vsub.s32 0, %v2430
        %v2432 = vrot.slane %v2267, %v2431
        %v2434 = vmul.f32 %v2271, %v2432
        %v2435 = vmul.f32 %v2276, %v2432
        %v2436 = vmul.f32 %v2281, %v2432
        %v2437 = vmul.f32 %v2286, %v2432
        %v2438 = vmul.f32 %v2291, %v2432
        %v2439 = vmul.f32 %v2296, %v2432
        %v2440 = vmul.f32 %v2301, %v2432
        %v2441 = vmul.f32 %v2306, %v2432
        %v2442 = vmul.f32 %v2311, %v2432
        %v2443 = vmul.f32 %v2316, %v2432
        %v2444 = vmul.f32 %v2321, %v2432
        %v2445 = vmul.f32 %v2326, %v2432
        %v2446 = vmul.f32 %v2331, %v2432
        %v2447 = vmul.f32 %v2336, %v2432
        %v2448 = vmul.f32 %v2341, %v2432
        %v2449 = vmul.f32 %v2346, %v2432
        %v2450 = vmul.f32 %v2351, %v2432
        %v2451 = vmul.f32 %v2356, %v2432
        %v2452 = vmul.f32 %v2361, %v2432
        %v2453 = vmul.f32 %v2366, %v2432
        %v2454 = vmul.f32 %v2371, %v2432
        %v2455 = vmul.f32 %v2376, %v2432
        %v2456 = vmul.f32 %v2381, %v2432
        %v2457 = vmul.f32 %v2386, %v2432
        %v2458 = vmul.f32 %v2391, %v2432
        %v2459 = vmul.f32 %v2396, %v2432
        %v2460 = vmul.f32 %v2401, %v2432
        %v2461 = vmul.f32 %v2406, %v2432
        %v2462 = vmul.f32 %v2411, %v2432
        %v2463 = vmul.f32 %v2416, %v2432
        %v2464 = vmul.f32 %v2421, %v2432
        %v2465 = vmul.f32 %v2426, %v2432
        %v2466 = vadd.f32 %v2202, %v2434
        %v2467 = vadd.f32 %v2203, %v2435
        %v2468 = vadd.f32 %v2204, %v2436
        %v2469 = vadd.f32 %v2205, %v2437
        %v2470 = vadd.f32 %v2206, %v2438
        %v2471 = vadd.f32 %v2207, %v2439
        %v2472 = vadd.f32 %v2208, %v2440
        %v2473 = vadd.f32 %v2209, %v2441
        %v2474 = vadd.f32 %v2210, %v2442
        %v2475 = vadd.f32 %v2211, %v2443
        %v2476 = vadd.f32 %v2212, %v2444
        %v2477 = vadd.f32 %v2213, %v2445
        %v2478 = vadd.f32 %v2214, %v2446
        %v2479 = vadd.f32 %v2215, %v2447
        %v2480 = vadd.f32 %v2216, %v2448
        %v2481 = vadd.f32 %v2217, %v2449
        %v2482 = vadd.f32 %v2218, %v2450
        %v2483 = vadd.f32 %v2219, %v2451
        %v2484 = vadd.f32 %v2220, %v2452
        %v2485 = vadd.f32 %v2221, %v2453
        %v2486 = vadd.f32 %v2222, %v2454
        %v2487 = vadd.f32 %v2223, %v2455
        %v2488 = vadd.f32 %v2224, %v2456
        %v2489 = vadd.f32 %v2225, %v2457
        %v2490 = vadd.f32 %v2226, %v2458
        %v2491 = vadd.f32 %v2227, %v2459
        %v2492 = vadd.f32 %v2228, %v2460
        %v2493 = vadd.f32 %v2229, %v2461
        %v2494 = vadd.f32 %v2230, %v2462
        %v2495 = vadd.f32 %v2231, %v2463
        %v2496 = vadd.f32 %v2232, %v2464
        %v2497 = vadd.f32 %v2233, %v2465
        %v2498 = vld [vmem:[%s1969 + $0x2] sm:$0xff]
        %v2499 = vld [vmem:[%s1969 + $0xa] sm:$0xff]
        %v2500 = vld [vmem:[%s1969 + $0x1a] sm:$0xff]
        %v2501 = vld [vmem:[%s1969 + $0x22] sm:$0xff]
        %v2502 = vld [vmem:[%s1969 + $0x32] sm:$0xff]
        %v2503 = vld [vmem:[%s1969 + $0x3a] sm:$0xff]
        %v2504 = vld [vmem:[%s1969 + $0x4a] sm:$0xff]
        %v2505 = vld [vmem:[%s1969 + $0x52] sm:$0xff]
        %v2506 = vld [vmem:[%s1969 + $0x62] sm:$0xff]
        %v2507 = vld [vmem:[%s1969 + $0x6a] sm:$0xff]
        %v2508 = vld [vmem:[%s1969 + $0x7a] sm:$0xff]
        %v2509 = vld [vmem:[%s1969 + $0x82] sm:$0xff]
        %v2510 = vld [vmem:[%s1969 + $0x92] sm:$0xff]
        %v2511 = vld [vmem:[%s1969 + $0x9a] sm:$0xff]
        %v2512 = vld [vmem:[%s1969 + $0xaa] sm:$0xff]
        %v2513 = vld [vmem:[%s1969 + $0xb2] sm:$0xff]
        %v2514 = vld [vmem:[%s1969 + $0xc2] sm:$0xff]
        %v2515 = vld [vmem:[%s1969 + $0xca] sm:$0xff]
        %v2516 = vld [vmem:[%s1969 + $0xda] sm:$0xff]
        %v2517 = vld [vmem:[%s1969 + $0xe2] sm:$0xff]
        %v2518 = vld [vmem:[%s1969 + $0xf2] sm:$0xff]
        %v2519 = vld [vmem:[%s1969 + $0xfa] sm:$0xff]
        %v2520 = vld [vmem:[%s1969 + $0x10a] sm:$0xff]
        %v2521 = vld [vmem:[%s1969 + $0x112] sm:$0xff]
        %v2522 = vld [vmem:[%s1969 + $0x122] sm:$0xff]
        %v2523 = vld [vmem:[%s1969 + $0x12a] sm:$0xff]
        %v2524 = vld [vmem:[%s1969 + $0x13a] sm:$0xff]
        %v2525 = vld [vmem:[%s1969 + $0x142] sm:$0xff]
        %v2526 = vld [vmem:[%s1969 + $0x152] sm:$0xff]
        %v2527 = vld [vmem:[%s1969 + $0x15a] sm:$0xff]
        %v2528 = vld [vmem:[%s1969 + $0x16a] sm:$0xff]
        %v2529 = vld [vmem:[%s1969 + $0x172] sm:$0xff]
        %s2530 = scalar_lea.vmem [#allocation8], 8
        %v2531 = vld [vmem:[%s2530] sm:$0x1]
        %2533 = vset.pattern.permute.xlu0 0
        %2534 = vperm.xlu0 %2533, %v2498
        %v2535 = vpop.permute.xlu0 %2534
        %2538 = vset.pattern.permute.xlu0 0
        %2539 = vperm.xlu0 %2538, %v2499
        %v2540 = vpop.permute.xlu0 %2539
        %2543 = vset.pattern.permute.xlu0 0
        %2544 = vperm.xlu0 %2543, %v2500
        %v2545 = vpop.permute.xlu0 %2544
        %2548 = vset.pattern.permute.xlu0 0
        %2549 = vperm.xlu0 %2548, %v2501
        %v2550 = vpop.permute.xlu0 %2549
        %2553 = vset.pattern.permute.xlu0 0
        %2554 = vperm.xlu0 %2553, %v2502
        %v2555 = vpop.permute.xlu0 %2554
        %2558 = vset.pattern.permute.xlu0 0
        %2559 = vperm.xlu0 %2558, %v2503
        %v2560 = vpop.permute.xlu0 %2559
        %2563 = vset.pattern.permute.xlu0 0
        %2564 = vperm.xlu0 %2563, %v2504
        %v2565 = vpop.permute.xlu0 %2564
        %2568 = vset.pattern.permute.xlu0 0
        %2569 = vperm.xlu0 %2568, %v2505
        %v2570 = vpop.permute.xlu0 %2569
        %2573 = vset.pattern.permute.xlu0 0
        %2574 = vperm.xlu0 %2573, %v2506
        %v2575 = vpop.permute.xlu0 %2574
        %2578 = vset.pattern.permute.xlu0 0
        %2579 = vperm.xlu0 %2578, %v2507
        %v2580 = vpop.permute.xlu0 %2579
        %2583 = vset.pattern.permute.xlu0 0
        %2584 = vperm.xlu0 %2583, %v2508
        %v2585 = vpop.permute.xlu0 %2584
        %2588 = vset.pattern.permute.xlu0 0
        %2589 = vperm.xlu0 %2588, %v2509
        %v2590 = vpop.permute.xlu0 %2589
        %2593 = vset.pattern.permute.xlu0 0
        %2594 = vperm.xlu0 %2593, %v2510
        %v2595 = vpop.permute.xlu0 %2594
        %2598 = vset.pattern.permute.xlu0 0
        %2599 = vperm.xlu0 %2598, %v2511
        %v2600 = vpop.permute.xlu0 %2599
        %2603 = vset.pattern.permute.xlu0 0
        %2604 = vperm.xlu0 %2603, %v2512
        %v2605 = vpop.permute.xlu0 %2604
        %2608 = vset.pattern.permute.xlu0 0
        %2609 = vperm.xlu0 %2608, %v2513
        %v2610 = vpop.permute.xlu0 %2609
        %2613 = vset.pattern.permute.xlu0 0
        %2614 = vperm.xlu0 %2613, %v2514
        %v2615 = vpop.permute.xlu0 %2614
        %2618 = vset.pattern.permute.xlu0 0
        %2619 = vperm.xlu0 %2618, %v2515
        %v2620 = vpop.permute.xlu0 %2619
        %2623 = vset.pattern.permute.xlu0 0
        %2624 = vperm.xlu0 %2623, %v2516
        %v2625 = vpop.permute.xlu0 %2624
        %2628 = vset.pattern.permute.xlu0 0
        %2629 = vperm.xlu0 %2628, %v2517
        %v2630 = vpop.permute.xlu0 %2629
        %2633 = vset.pattern.permute.xlu0 0
        %2634 = vperm.xlu0 %2633, %v2518
        %v2635 = vpop.permute.xlu0 %2634
        %2638 = vset.pattern.permute.xlu0 0
        %2639 = vperm.xlu0 %2638, %v2519
        %v2640 = vpop.permute.xlu0 %2639
        %2643 = vset.pattern.permute.xlu0 0
        %2644 = vperm.xlu0 %2643, %v2520
        %v2645 = vpop.permute.xlu0 %2644
        %2648 = vset.pattern.permute.xlu0 0
        %2649 = vperm.xlu0 %2648, %v2521
        %v2650 = vpop.permute.xlu0 %2649
        %2653 = vset.pattern.permute.xlu0 0
        %2654 = vperm.xlu0 %2653, %v2522
        %v2655 = vpop.permute.xlu0 %2654
        %2658 = vset.pattern.permute.xlu0 0
        %2659 = vperm.xlu0 %2658, %v2523
        %v2660 = vpop.permute.xlu0 %2659
        %2663 = vset.pattern.permute.xlu0 0
        %2664 = vperm.xlu0 %2663, %v2524
        %v2665 = vpop.permute.xlu0 %2664
        %2668 = vset.pattern.permute.xlu0 0
        %2669 = vperm.xlu0 %2668, %v2525
        %v2670 = vpop.permute.xlu0 %2669
        %2673 = vset.pattern.permute.xlu0 0
        %2674 = vperm.xlu0 %2673, %v2526
        %v2675 = vpop.permute.xlu0 %2674
        %2678 = vset.pattern.permute.xlu0 0
        %2679 = vperm.xlu0 %2678, %v2527
        %v2680 = vpop.permute.xlu0 %2679
        %2683 = vset.pattern.permute.xlu0 0
        %2684 = vperm.xlu0 %2683, %v2528
        %v2685 = vpop.permute.xlu0 %2684
        %2688 = vset.pattern.permute.xlu0 0
        %2689 = vperm.xlu0 %2688, %v2529
        %v2690 = vpop.permute.xlu0 %2689
        %v2693 = vlaneseq
        %v2694 = vshrl.u32 %v2693, 7
        %v2695 = vsub.s32 0, %v2694
        %v2696 = vrot.slane %v2531, %v2695
        %v2698 = vmul.f32 %v2535, %v2696
        %v2699 = vmul.f32 %v2540, %v2696
        %v2700 = vmul.f32 %v2545, %v2696
        %v2701 = vmul.f32 %v2550, %v2696
        %v2702 = vmul.f32 %v2555, %v2696
        %v2703 = vmul.f32 %v2560, %v2696
        %v2704 = vmul.f32 %v2565, %v2696
        %v2705 = vmul.f32 %v2570, %v2696
        %v2706 = vmul.f32 %v2575, %v2696
        %v2707 = vmul.f32 %v2580, %v2696
        %v2708 = vmul.f32 %v2585, %v2696
        %v2709 = vmul.f32 %v2590, %v2696
        %v2710 = vmul.f32 %v2595, %v2696
        %v2711 = vmul.f32 %v2600, %v2696
        %v2712 = vmul.f32 %v2605, %v2696
        %v2713 = vmul.f32 %v2610, %v2696
        %v2714 = vmul.f32 %v2615, %v2696
        %v2715 = vmul.f32 %v2620, %v2696
        %v2716 = vmul.f32 %v2625, %v2696
        %v2717 = vmul.f32 %v2630, %v2696
        %v2718 = vmul.f32 %v2635, %v2696
        %v2719 = vmul.f32 %v2640, %v2696
        %v2720 = vmul.f32 %v2645, %v2696
        %v2721 = vmul.f32 %v2650, %v2696
        %v2722 = vmul.f32 %v2655, %v2696
        %v2723 = vmul.f32 %v2660, %v2696
        %v2724 = vmul.f32 %v2665, %v2696
        %v2725 = vmul.f32 %v2670, %v2696
        %v2726 = vmul.f32 %v2675, %v2696
        %v2727 = vmul.f32 %v2680, %v2696
        %v2728 = vmul.f32 %v2685, %v2696
        %v2729 = vmul.f32 %v2690, %v2696
        %v2730 = vadd.f32 %v2466, %v2698
        %v2731 = vadd.f32 %v2467, %v2699
        %v2732 = vadd.f32 %v2468, %v2700
        %v2733 = vadd.f32 %v2469, %v2701
        %v2734 = vadd.f32 %v2470, %v2702
        %v2735 = vadd.f32 %v2471, %v2703
        %v2736 = vadd.f32 %v2472, %v2704
        %v2737 = vadd.f32 %v2473, %v2705
        %v2738 = vadd.f32 %v2474, %v2706
        %v2739 = vadd.f32 %v2475, %v2707
        %v2740 = vadd.f32 %v2476, %v2708
        %v2741 = vadd.f32 %v2477, %v2709
        %v2742 = vadd.f32 %v2478, %v2710
        %v2743 = vadd.f32 %v2479, %v2711
        %v2744 = vadd.f32 %v2480, %v2712
        %v2745 = vadd.f32 %v2481, %v2713
        %v2746 = vadd.f32 %v2482, %v2714
        %v2747 = vadd.f32 %v2483, %v2715
        %v2748 = vadd.f32 %v2484, %v2716
        %v2749 = vadd.f32 %v2485, %v2717
        %v2750 = vadd.f32 %v2486, %v2718
        %v2751 = vadd.f32 %v2487, %v2719
        %v2752 = vadd.f32 %v2488, %v2720
        %v2753 = vadd.f32 %v2489, %v2721
        %v2754 = vadd.f32 %v2490, %v2722
        %v2755 = vadd.f32 %v2491, %v2723
        %v2756 = vadd.f32 %v2492, %v2724
        %v2757 = vadd.f32 %v2493, %v2725
        %v2758 = vadd.f32 %v2494, %v2726
        %v2759 = vadd.f32 %v2495, %v2727
        %v2760 = vadd.f32 %v2496, %v2728
        %v2761 = vadd.f32 %v2497, %v2729
        %v2762 = vld [vmem:[#allocation10] sm:$0x1]
        %v2764 = vlaneseq
        %v2765 = vshrl.u32 %v2764, 7
        %v2766 = vsub.s32 0, %v2765
        %v2767 = vrot.slane %v2762, %v2766
        %v2769 = vadd.f32 %v2730, %v2767
        %v2770 = vadd.f32 %v2731, %v2767
        %v2771 = vadd.f32 %v2732, %v2767
        %v2772 = vadd.f32 %v2733, %v2767
        %v2773 = vadd.f32 %v2734, %v2767
        %v2774 = vadd.f32 %v2735, %v2767
        %v2775 = vadd.f32 %v2736, %v2767
        %v2776 = vadd.f32 %v2737, %v2767
        %v2777 = vadd.f32 %v2738, %v2767
        %v2778 = vadd.f32 %v2739, %v2767
        %v2779 = vadd.f32 %v2740, %v2767
        %v2780 = vadd.f32 %v2741, %v2767
        %v2781 = vadd.f32 %v2742, %v2767
        %v2782 = vadd.f32 %v2743, %v2767
        %v2783 = vadd.f32 %v2744, %v2767
        %v2784 = vadd.f32 %v2745, %v2767
        %v2785 = vadd.f32 %v2746, %v2767
        %v2786 = vadd.f32 %v2747, %v2767
        %v2787 = vadd.f32 %v2748, %v2767
        %v2788 = vadd.f32 %v2749, %v2767
        %v2789 = vadd.f32 %v2750, %v2767
        %v2790 = vadd.f32 %v2751, %v2767
        %v2791 = vadd.f32 %v2752, %v2767
        %v2792 = vadd.f32 %v2753, %v2767
        %v2793 = vadd.f32 %v2754, %v2767
        %v2794 = vadd.f32 %v2755, %v2767
        %v2795 = vadd.f32 %v2756, %v2767
        %v2796 = vadd.f32 %v2757, %v2767
        %v2797 = vadd.f32 %v2758, %v2767
        %v2798 = vadd.f32 %v2759, %v2767
        %v2799 = vadd.f32 %v2760, %v2767
        %v2800 = vadd.f32 %v2761, %v2767
        %v2801 = vmax.f32 %v2769, 0.0
        %v2802 = vmax.f32 %v2770, 0.0
        %v2803 = vmax.f32 %v2771, 0.0
        %v2804 = vmax.f32 %v2772, 0.0
        %v2805 = vmax.f32 %v2773, 0.0
        %v2806 = vmax.f32 %v2774, 0.0
        %v2807 = vmax.f32 %v2775, 0.0
        %v2808 = vmax.f32 %v2776, 0.0
        %v2809 = vmax.f32 %v2777, 0.0
        %v2810 = vmax.f32 %v2778, 0.0
        %v2811 = vmax.f32 %v2779, 0.0
        %v2812 = vmax.f32 %v2780, 0.0
        %v2813 = vmax.f32 %v2781, 0.0
        %v2814 = vmax.f32 %v2782, 0.0
        %v2815 = vmax.f32 %v2783, 0.0
        %v2816 = vmax.f32 %v2784, 0.0
        %v2817 = vmax.f32 %v2785, 0.0
        %v2818 = vmax.f32 %v2786, 0.0
        %v2819 = vmax.f32 %v2787, 0.0
        %v2820 = vmax.f32 %v2788, 0.0
        %v2821 = vmax.f32 %v2789, 0.0
        %v2822 = vmax.f32 %v2790, 0.0
        %v2823 = vmax.f32 %v2791, 0.0
        %v2824 = vmax.f32 %v2792, 0.0
        %v2825 = vmax.f32 %v2793, 0.0
        %v2826 = vmax.f32 %v2794, 0.0
        %v2827 = vmax.f32 %v2795, 0.0
        %v2828 = vmax.f32 %v2796, 0.0
        %v2829 = vmax.f32 %v2797, 0.0
        %v2830 = vmax.f32 %v2798, 0.0
        %v2831 = vmax.f32 %v2799, 0.0
        %v2832 = vmax.f32 %v2800, 0.0
        %vm2833 = vcmask 130048
        %2834 = vst.msk [vmem:[#allocation3] sm:$0xff] %vm2833, %v2801
        %2835 = vst.msk [vmem:[#allocation3 + $0x8] sm:$0xff] %vm2833, %v2802
        %2836 = vst.msk [vmem:[#allocation3 + $0x10] sm:$0xff] %vm2833, %v2803
        %2837 = vst.msk [vmem:[#allocation3 + $0x18] sm:$0xff] %vm2833, %v2804
        %2838 = vst.msk [vmem:[#allocation3 + $0x20] sm:$0xff] %vm2833, %v2805
        %2839 = vst.msk [vmem:[#allocation3 + $0x28] sm:$0xff] %vm2833, %v2806
        %2840 = vst.msk [vmem:[#allocation3 + $0x30] sm:$0xff] %vm2833, %v2807
        %2841 = vst.msk [vmem:[#allocation3 + $0x38] sm:$0xff] %vm2833, %v2808
        %2842 = vst.msk [vmem:[#allocation3 + $0x40] sm:$0xff] %vm2833, %v2809
        %2843 = vst.msk [vmem:[#allocation3 + $0x48] sm:$0xff] %vm2833, %v2810
        %2844 = vst.msk [vmem:[#allocation3 + $0x50] sm:$0xff] %vm2833, %v2811
        %2845 = vst.msk [vmem:[#allocation3 + $0x58] sm:$0xff] %vm2833, %v2812
        %2846 = vst.msk [vmem:[#allocation3 + $0x60] sm:$0xff] %vm2833, %v2813
        %2847 = vst.msk [vmem:[#allocation3 + $0x68] sm:$0xff] %vm2833, %v2814
        %2848 = vst.msk [vmem:[#allocation3 + $0x70] sm:$0xff] %vm2833, %v2815
        %2849 = vst.msk [vmem:[#allocation3 + $0x78] sm:$0xff] %vm2833, %v2816
        %2850 = vst.msk [vmem:[#allocation3 + $0x80] sm:$0xff] %vm2833, %v2817
        %2851 = vst.msk [vmem:[#allocation3 + $0x88] sm:$0xff] %vm2833, %v2818
        %2852 = vst.msk [vmem:[#allocation3 + $0x90] sm:$0xff] %vm2833, %v2819
        %2853 = vst.msk [vmem:[#allocation3 + $0x98] sm:$0xff] %vm2833, %v2820
        %2854 = vst.msk [vmem:[#allocation3 + $0xa0] sm:$0xff] %vm2833, %v2821
        %2855 = vst.msk [vmem:[#allocation3 + $0xa8] sm:$0xff] %vm2833, %v2822
        %2856 = vst.msk [vmem:[#allocation3 + $0xb0] sm:$0xff] %vm2833, %v2823
        %2857 = vst.msk [vmem:[#allocation3 + $0xb8] sm:$0xff] %vm2833, %v2824
        %2858 = vst.msk [vmem:[#allocation3 + $0xc0] sm:$0xff] %vm2833, %v2825
        %2859 = vst.msk [vmem:[#allocation3 + $0xc8] sm:$0xff] %vm2833, %v2826
        %2860 = vst.msk [vmem:[#allocation3 + $0xd0] sm:$0xff] %vm2833, %v2827
        %2861 = vst.msk [vmem:[#allocation3 + $0xd8] sm:$0xff] %vm2833, %v2828
        %2862 = vst.msk [vmem:[#allocation3 + $0xe0] sm:$0xff] %vm2833, %v2829
        %2863 = vst.msk [vmem:[#allocation3 + $0xe8] sm:$0xff] %vm2833, %v2830
        %2864 = vst.msk [vmem:[#allocation3 + $0xf0] sm:$0xff] %vm2833, %v2831
        %2865 = vst.msk [vmem:[#allocation3 + $0xf8] sm:$0xff] %vm2833, %v2832
        %v2866 = vld [vmem:[#allocation3] ss:$2 sm:$0xff]
        %s2867 = scalar_lea.vmem [#allocation3], 16
        %v2868 = vld [vmem:[%s2867] ss:$2 sm:$0xff]
        %s2869 = scalar_lea.vmem [#allocation3], 32
        %v2870 = vld [vmem:[%s2869] ss:$2 sm:$0xff]
        %s2871 = scalar_lea.vmem [#allocation3], 48
        %v2872 = vld [vmem:[%s2871] ss:$2 sm:$0xff]
        %s2873 = scalar_lea.vmem [#allocation3], 64
        %v2874 = vld [vmem:[%s2873] ss:$2 sm:$0xff]
        %s2875 = scalar_lea.vmem [#allocation3], 80
        %v2876 = vld [vmem:[%s2875] ss:$2 sm:$0xff]
        %s2877 = scalar_lea.vmem [#allocation3], 96
        %v2878 = vld [vmem:[%s2877] ss:$2 sm:$0xff]
        %s2879 = scalar_lea.vmem [#allocation3], 112
        %v2880 = vld [vmem:[%s2879] ss:$2 sm:$0xff]
        %s2881 = scalar_lea.vmem [#allocation3], 128
        %v2882 = vld [vmem:[%s2881] ss:$2 sm:$0xff]
        %s2883 = scalar_lea.vmem [#allocation3], 144
        %v2884 = vld [vmem:[%s2883] ss:$2 sm:$0xff]
        %s2885 = scalar_lea.vmem [#allocation3], 160
        %v2886 = vld [vmem:[%s2885] ss:$2 sm:$0xff]
        %s2887 = scalar_lea.vmem [#allocation3], 176
        %v2888 = vld [vmem:[%s2887] ss:$2 sm:$0xff]
        %s2889 = scalar_lea.vmem [#allocation3], 192
        %v2890 = vld [vmem:[%s2889] ss:$2 sm:$0xff]
        %s2891 = scalar_lea.vmem [#allocation3], 208
        %v2892 = vld [vmem:[%s2891] ss:$2 sm:$0xff]
        %s2893 = scalar_lea.vmem [#allocation3], 224
        %v2894 = vld [vmem:[%s2893] ss:$2 sm:$0xff]
        %s2895 = scalar_lea.vmem [#allocation3], 240
        %v2896 = vld [vmem:[%s2895] ss:$2 sm:$0xff]
        %s2897 = scalar_lea.vmem [#allocation3], 1
        %v2898 = vld [vmem:[%s2897] ss:$2 sm:$0xff]
        %s2899 = scalar_lea.vmem [#allocation3], 17
        %v2900 = vld [vmem:[%s2899] ss:$2 sm:$0xff]
        %s2901 = scalar_lea.vmem [#allocation3], 33
        %v2902 = vld [vmem:[%s2901] ss:$2 sm:$0xff]
        %s2903 = scalar_lea.vmem [#allocation3], 49
        %v2904 = vld [vmem:[%s2903] ss:$2 sm:$0xff]
        %s2905 = scalar_lea.vmem [#allocation3], 65
        %v2906 = vld [vmem:[%s2905] ss:$2 sm:$0xff]
        %s2907 = scalar_lea.vmem [#allocation3], 81
        %v2908 = vld [vmem:[%s2907] ss:$2 sm:$0xff]
        %s2909 = scalar_lea.vmem [#allocation3], 97
        %v2910 = vld [vmem:[%s2909] ss:$2 sm:$0xff]
        %s2911 = scalar_lea.vmem [#allocation3], 113
        %v2912 = vld [vmem:[%s2911] ss:$2 sm:$0xff]
        %s2913 = scalar_lea.vmem [#allocation3], 129
        %v2914 = vld [vmem:[%s2913] ss:$2 sm:$0xff]
        %s2915 = scalar_lea.vmem [#allocation3], 145
        %v2916 = vld [vmem:[%s2915] ss:$2 sm:$0xff]
        %s2917 = scalar_lea.vmem [#allocation3], 161
        %v2918 = vld [vmem:[%s2917] ss:$2 sm:$0xff]
        %s2919 = scalar_lea.vmem [#allocation3], 177
        %v2920 = vld [vmem:[%s2919] ss:$2 sm:$0xff]
        %s2921 = scalar_lea.vmem [#allocation3], 193
        %v2922 = vld [vmem:[%s2921] ss:$2 sm:$0xff]
        %s2923 = scalar_lea.vmem [#allocation3], 209
        %v2924 = vld [vmem:[%s2923] ss:$2 sm:$0xff]
        %s2925 = scalar_lea.vmem [#allocation3], 225
        %v2926 = vld [vmem:[%s2925] ss:$2 sm:$0xff]
        %s2927 = scalar_lea.vmem [#allocation3], 241
        %v2928 = vld [vmem:[%s2927] ss:$2 sm:$0xff]
        %v2929 = vmax.f32 %v2866, %v2898
        %v2930 = vmax.f32 %v2868, %v2900
        %v2931 = vmax.f32 %v2870, %v2902
        %v2932 = vmax.f32 %v2872, %v2904
        %v2933 = vmax.f32 %v2874, %v2906
        %v2934 = vmax.f32 %v2876, %v2908
        %v2935 = vmax.f32 %v2878, %v2910
        %v2936 = vmax.f32 %v2880, %v2912
        %v2937 = vmax.f32 %v2882, %v2914
        %v2938 = vmax.f32 %v2884, %v2916
        %v2939 = vmax.f32 %v2886, %v2918
        %v2940 = vmax.f32 %v2888, %v2920
        %v2941 = vmax.f32 %v2890, %v2922
        %v2942 = vmax.f32 %v2892, %v2924
        %v2943 = vmax.f32 %v2894, %v2926
        %v2944 = vmax.f32 %v2896, %v2928
        %2945 = vst.msk [vmem:[#allocation4] sm:$0xff] %vm2833, %v2929
        %2946 = vst.msk [vmem:[#allocation4 + $0x8] sm:$0xff] %vm2833, %v2930
        %2947 = vst.msk [vmem:[#allocation4 + $0x10] sm:$0xff] %vm2833, %v2931
        %2948 = vst.msk [vmem:[#allocation4 + $0x18] sm:$0xff] %vm2833, %v2932
        %2949 = vst.msk [vmem:[#allocation4 + $0x20] sm:$0xff] %vm2833, %v2933
        %2950 = vst.msk [vmem:[#allocation4 + $0x28] sm:$0xff] %vm2833, %v2934
        %2951 = vst.msk [vmem:[#allocation4 + $0x30] sm:$0xff] %vm2833, %v2935
        %2952 = vst.msk [vmem:[#allocation4 + $0x38] sm:$0xff] %vm2833, %v2936
        %2953 = vst.msk [vmem:[#allocation4 + $0x40] sm:$0xff] %vm2833, %v2937
        %2954 = vst.msk [vmem:[#allocation4 + $0x48] sm:$0xff] %vm2833, %v2938
        %2955 = vst.msk [vmem:[#allocation4 + $0x50] sm:$0xff] %vm2833, %v2939
        %2956 = vst.msk [vmem:[#allocation4 + $0x58] sm:$0xff] %vm2833, %v2940
        %2957 = vst.msk [vmem:[#allocation4 + $0x60] sm:$0xff] %vm2833, %v2941
        %2958 = vst.msk [vmem:[#allocation4 + $0x68] sm:$0xff] %vm2833, %v2942
        %2959 = vst.msk [vmem:[#allocation4 + $0x70] sm:$0xff] %vm2833, %v2943
        %2960 = vst.msk [vmem:[#allocation4 + $0x78] sm:$0xff] %vm2833, %v2944
        %2961 = vst.msk [vmem:[#allocation5] sm:$0xff] %vm2833, 0.0
        %vm2962 = vcmask 123904
        %2963 = vst.msk [vmem:[#allocation5 + $0x8] sm:$0x3] %vm2962, 0.0
        %2964 = vst.msk [vmem:[#allocation5 + $0x10] sm:$0xff] %vm2833, 0.0
        %2965 = vst.msk [vmem:[#allocation5 + $0x18] sm:$0x3] %vm2962, 0.0
        %2966 = vst.msk [vmem:[#allocation5 + $0x20] sm:$0xff] %vm2833, 0.0
        %2967 = vst.msk [vmem:[#allocation5 + $0x28] sm:$0x3] %vm2962, 0.0
        %2968 = vst.msk [vmem:[#allocation5 + $0x30] sm:$0xff] %vm2833, 0.0
        %2969 = vst.msk [vmem:[#allocation5 + $0x38] sm:$0x3] %vm2962, 0.0
        %2970 = vst.msk [vmem:[#allocation5 + $0x40] sm:$0xff] %vm2833, 0.0
        %2971 = vst.msk [vmem:[#allocation5 + $0x48] sm:$0x3] %vm2962, 0.0
        %2972 = vst.msk [vmem:[#allocation5 + $0x50] sm:$0xff] %vm2833, 0.0
        %2973 = vst.msk [vmem:[#allocation5 + $0x58] sm:$0x3] %vm2962, 0.0
        %2974 = vst.msk [vmem:[#allocation5 + $0x60] sm:$0xff] %vm2833, 0.0
        %2975 = vst.msk [vmem:[#allocation5 + $0x68] sm:$0x3] %vm2962, 0.0
        %2976 = vst.msk [vmem:[#allocation5 + $0x70] sm:$0xff] %vm2833, 0.0
        %2977 = vst.msk [vmem:[#allocation5 + $0x78] sm:$0x3] %vm2962, 0.0
        %2978 = vst.msk [vmem:[#allocation5 + $0x80] sm:$0xff] %vm2833, 0.0
        %2979 = vst.msk [vmem:[#allocation5 + $0x88] sm:$0x3] %vm2962, 0.0
        %2980 = vst.msk [vmem:[#allocation5 + $0x90] sm:$0xff] %vm2833, 0.0
        %2981 = vst.msk [vmem:[#allocation5 + $0x98] sm:$0x3] %vm2962, 0.0
        %v2982 = vld [vmem:[#allocation4] sm:$0xff]
        %v2983 = vld [vmem:[#allocation4 + $0x10] sm:$0xff]
        %v2984 = vld [vmem:[#allocation4 + $0x20] sm:$0xff]
        %v2985 = vld [vmem:[#allocation4 + $0x30] sm:$0xff]
        %v2986 = vld [vmem:[#allocation4 + $0x40] sm:$0xff]
        %v2987 = vld [vmem:[#allocation4 + $0x50] sm:$0xff]
        %v2988 = vld [vmem:[#allocation4 + $0x60] sm:$0xff]
        %v2989 = vld [vmem:[#allocation4 + $0x70] sm:$0xff]
        %s2990 = scalar_lea.vmem [#allocation4], 8
        %v2991 = vld [vmem:[%s2990] sm:$0xff]
        %v2992 = vld [vmem:[%s2990 + $0x10] sm:$0xff]
        %v2993 = vld [vmem:[%s2990 + $0x20] sm:$0xff]
        %v2994 = vld [vmem:[%s2990 + $0x30] sm:$0xff]
        %v2995 = vld [vmem:[%s2990 + $0x40] sm:$0xff]
        %v2996 = vld [vmem:[%s2990 + $0x50] sm:$0xff]
        %v2997 = vld [vmem:[%s2990 + $0x60] sm:$0xff]
        %v2998 = vld [vmem:[%s2990 + $0x70] sm:$0xff]
        %v2999 = vmax.f32 %v2982, %v2991
        %v3000 = vmax.f32 %v2983, %v2992
        %v3001 = vmax.f32 %v2984, %v2993
        %v3002 = vmax.f32 %v2985, %v2994
        %v3003 = vmax.f32 %v2986, %v2995
        %v3004 = vmax.f32 %v2987, %v2996
        %v3005 = vmax.f32 %v2988, %v2997
        %v3006 = vmax.f32 %v2989, %v2998
        %s3007 = scalar_lea.vmem [#allocation5], 16
        %3008 = vst.msk [vmem:[%s3007 + $0x1] sm:$0xff] %vm2833, %v2999
        %3009 = vst.msk [vmem:[%s3007 + $0x11] sm:$0xff] %vm2833, %v3000
        %3010 = vst.msk [vmem:[%s3007 + $0x21] sm:$0xff] %vm2833, %v3001
        %3011 = vst.msk [vmem:[%s3007 + $0x31] sm:$0xff] %vm2833, %v3002
        %3012 = vst.msk [vmem:[%s3007 + $0x41] sm:$0xff] %vm2833, %v3003
        %3013 = vst.msk [vmem:[%s3007 + $0x51] sm:$0xff] %vm2833, %v3004
        %3014 = vst.msk [vmem:[%s3007 + $0x61] sm:$0xff] %vm2833, %v3005
        %3015 = vst.msk [vmem:[%s3007 + $0x71] sm:$0xff] %vm2833, %v3006
        %v3016 = vld [vmem:[#allocation5] sm:$0xff]
        %v3017 = vld [vmem:[#allocation5 + $0x10] sm:$0xff]
        %v3018 = vld [vmem:[#allocation5 + $0x20] sm:$0xff]
        %v3019 = vld [vmem:[#allocation5 + $0x30] sm:$0xff]
        %v3020 = vld [vmem:[#allocation5 + $0x40] sm:$0xff]
        %v3021 = vld [vmem:[#allocation5 + $0x50] sm:$0xff]
        %v3022 = vld [vmem:[#allocation5 + $0x60] sm:$0xff]
        %v3023 = vld [vmem:[#allocation5 + $0x70] sm:$0xff]
        %v3024 = vld [vmem:[%s3] sm:$0xff]
        %v3025 = vld [vmem:[%s3 + $0x8] sm:$0xff]
        %v3026 = vld [vmem:[#allocation5 + $0x1] sm:$0xff]
        %v3027 = vld [vmem:[#allocation5 + $0x11] sm:$0xff]
        %v3028 = vld [vmem:[#allocation5 + $0x21] sm:$0xff]
        %v3029 = vld [vmem:[#allocation5 + $0x31] sm:$0xff]
        %v3030 = vld [vmem:[#allocation5 + $0x41] sm:$0xff]
        %v3031 = vld [vmem:[#allocation5 + $0x51] sm:$0xff]
        %v3032 = vld [vmem:[#allocation5 + $0x61] sm:$0xff]
        %v3033 = vld [vmem:[#allocation5 + $0x71] sm:$0xff]
        %s3034 = scalar_lea.vmem %s3, 16
        %v3035 = vld [vmem:[%s3034] sm:$0xff]
        %v3036 = vld [vmem:[%s3034 + $0x8] sm:$0xff]
        %v3038 = vsel %vm2833, %v3026, 0
        %v3041 = vsel %vm2833, %v3027, 0
        %v3044 = vsel %vm2833, %v3028, 0
        %v3047 = vsel %vm2833, %v3029, 0
        %v3050 = vsel %vm2833, %v3030, 0
        %v3053 = vsel %vm2833, %v3031, 0
        %v3056 = vsel %vm2833, %v3032, 0
        %v3059 = vsel %vm2833, %v3033, 0
        %3061 = vmatprep.subr.mxu0 0.0
        %3062 = vmatpush1.msra.mxu0 %v3035
        %3063 = vmatprep.subr.mxu0 0.0
        %3064 = vmatpush1.msra.mxu0 %v3036
        %3065 = vmatprep.subr.mxu0 0.0
        %3066 = vmatpush1.msra.mxu0 0.0
        %3067 = vmatprep.subr.mxu0 0.0
        %3068 = vmatpush1.msra.mxu0 0.0
        %3069 = vmatprep.subr.mxu0 0.0
        %3070 = vmatpush1.msra.mxu0 0.0
        %3071 = vmatprep.subr.mxu0 0.0
        %3072 = vmatpush1.msra.mxu0 0.0
        %3073 = vmatprep.subr.mxu0 0.0
        %3074 = vmatpush1.msra.mxu0 0.0
        %3075 = vmatprep.subr.mxu0 0.0
        %3076 = vmatpush1.msra.mxu0 0.0
        %3077 = vmatprep.subr.mxu0 0.0
        %3078 = vmatpush1.msra.mxu0 0.0
        %3079 = vmatprep.subr.mxu0 0.0
        %3080 = vmatpush1.msra.mxu0 0.0
        %3081 = vmatprep.subr.mxu0 0.0
        %3082 = vmatpush1.msra.mxu0 0.0
        %3083 = vmatprep.subr.mxu0 0.0
        %3084 = vmatpush1.msra.mxu0 0.0
        %3085 = vmatprep.subr.mxu0 0.0
        %3086 = vmatpush1.msra.mxu0 0.0
        %3087 = vmatprep.subr.mxu0 0.0
        %3088 = vmatpush1.msra.mxu0 0.0
        %3089 = vmatprep.subr.mxu0 0.0
        %3090 = vmatpush1.msra.mxu0 0.0
        %3091 = vmatprep.subr.mxu0 0.0
        %3092 = vmatpush1.msra.mxu0 0.0
        %3093 = vmatprep.subr.mxu0 0.0
        %3094 = vmatpush1.msra.mxu0 0.0
        %3095 = vmatprep.subr.mxu0 0.0
        %3096 = vmatpush1.msra.mxu0 0.0
        %3097 = vmatprep.subr.mxu0 0.0
        %3098 = vmatpush1.msra.mxu0 0.0
        %3099 = vmatprep.subr.mxu0 0.0
        %3100 = vmatpush1.msra.mxu0 0.0
        %3101 = vmatprep.subr.mxu0 0.0
        %3102 = vmatpush1.msra.mxu0 0.0
        %3103 = vmatprep.subr.mxu0 0.0
        %3104 = vmatpush1.msra.mxu0 0.0
        %3105 = vmatprep.subr.mxu0 0.0
        %3106 = vmatpush1.msra.mxu0 0.0
        %3107 = vmatprep.subr.mxu0 0.0
        %3108 = vmatpush1.msra.mxu0 0.0
        %3109 = vmatprep.subr.mxu0 0.0
        %3110 = vmatpush1.msra.mxu0 0.0
        %3111 = vmatprep.subr.mxu0 0.0
        %3112 = vmatpush1.msra.mxu0 0.0
        %3113 = vmatprep.subr.mxu0 0.0
        %3114 = vmatpush1.msra.mxu0 0.0
        %3115 = vmatprep.subr.mxu0 0.0
        %3116 = vmatpush1.msra.mxu0 0.0
        %3117 = vmatprep.subr.mxu0 0.0
        %3118 = vmatpush1.msra.mxu0 0.0
        %3119 = vmatprep.subr.mxu0 0.0
        %3120 = vmatpush1.msra.mxu0 0.0
        %3121 = vmatprep.subr.mxu0 0.0
        %3122 = vmatpush1.msra.mxu0 0.0
        %3123 = vmatprep.subr.mxu0 0.0
        %3124 = vmatpush1.msra.mxu0 0.0
        %3125 = vmatprep.mubr.f32.mxu0 0.0
        %3126 = vmatmul.mubr.f32.gmra.mrb[0].mxu0 %v3038
        %v3127 = vpop.f32.mrb[0].mxu0
        %v3128 = vadd.f32 0.0, %v3127
        %v3129 = vpop.f32.mrb[0].mxu0
        %3130 = vmatprep.mubr.f32.mxu0 0.0
        %3131 = vmatmul.mubr.f32.gmra.mrb[0].mxu0 %v3041
        %v3132 = vpop.f32.mrb[0].mxu0
        %v3133 = vadd.f32 0.0, %v3132
        %v3134 = vpop.f32.mrb[0].mxu0
        %3135 = vmatprep.mubr.f32.mxu0 0.0
        %3136 = vmatmul.mubr.f32.gmra.mrb[0].mxu0 %v3044
        %v3137 = vpop.f32.mrb[0].mxu0
        %v3138 = vadd.f32 0.0, %v3137
        %v3139 = vpop.f32.mrb[0].mxu0
        %3140 = vmatprep.mubr.f32.mxu0 0.0
        %3141 = vmatmul.mubr.f32.gmra.mrb[0].mxu0 %v3047
        %v3142 = vpop.f32.mrb[0].mxu0
        %v3143 = vadd.f32 0.0, %v3142
        %v3144 = vpop.f32.mrb[0].mxu0
        %3145 = vmatprep.mubr.f32.mxu0 0.0
        %3146 = vmatmul.mubr.f32.gmra.mrb[0].mxu0 %v3050
        %v3147 = vpop.f32.mrb[0].mxu0
        %v3148 = vadd.f32 0.0, %v3147
        %v3149 = vpop.f32.mrb[0].mxu0
        %3150 = vmatprep.mubr.f32.mxu0 0.0
        %3151 = vmatmul.mubr.f32.gmra.mrb[0].mxu0 %v3053
        %v3152 = vpop.f32.mrb[0].mxu0
        %v3153 = vadd.f32 0.0, %v3152
        %v3154 = vpop.f32.mrb[0].mxu0
        %3155 = vmatprep.mubr.f32.mxu0 0.0
        %3156 = vmatmul.mubr.f32.gmra.mrb[0].mxu0 %v3056
        %v3157 = vpop.f32.mrb[0].mxu0
        %v3158 = vadd.f32 0.0, %v3157
        %v3159 = vpop.f32.mrb[0].mxu0
        %3160 = vmatprep.mubr.f32.mxu0 0.0
        %3161 = vmatmul.mubr.f32.gmra.mrb[0].mxu0 %v3059
        %v3162 = vpop.f32.mrb[0].mxu0
        %v3163 = vadd.f32 0.0, %v3162
        %v3164 = vpop.f32.mrb[0].mxu0
        %3165 = vdwg.mxu0
        %v3167 = vsel %vm2833, %v3016, 0
        %v3170 = vsel %vm2833, %v3017, 0
        %v3173 = vsel %vm2833, %v3018, 0
        %v3176 = vsel %vm2833, %v3019, 0
        %v3179 = vsel %vm2833, %v3020, 0
        %v3182 = vsel %vm2833, %v3021, 0
        %v3185 = vsel %vm2833, %v3022, 0
        %v3188 = vsel %vm2833, %v3023, 0
        %3190 = vmatprep.subr.mxu0 0.0
        %3191 = vmatpush1.msra.mxu0 %v3024
        %3192 = vmatprep.subr.mxu0 0.0
        %3193 = vmatpush1.msra.mxu0 %v3025
        %3194 = vmatprep.subr.mxu0 0.0
        %3195 = vmatpush1.msra.mxu0 0.0
        %3196 = vmatprep.subr.mxu0 0.0
        %3197 = vmatpush1.msra.mxu0 0.0
        %3198 = vmatprep.subr.mxu0 0.0
        %3199 = vmatpush1.msra.mxu0 0.0
        %3200 = vmatprep.subr.mxu0 0.0
        %3201 = vmatpush1.msra.mxu0 0.0
        %3202 = vmatprep.subr.mxu0 0.0
        %3203 = vmatpush1.msra.mxu0 0.0
        %3204 = vmatprep.subr.mxu0 0.0
        %3205 = vmatpush1.msra.mxu0 0.0
        %3206 = vmatprep.subr.mxu0 0.0
        %3207 = vmatpush1.msra.mxu0 0.0
        %3208 = vmatprep.subr.mxu0 0.0
        %3209 = vmatpush1.msra.mxu0 0.0
        %3210 = vmatprep.subr.mxu0 0.0
        %3211 = vmatpush1.msra.mxu0 0.0
        %3212 = vmatprep.subr.mxu0 0.0
        %3213 = vmatpush1.msra.mxu0 0.0
        %3214 = vmatprep.subr.mxu0 0.0
        %3215 = vmatpush1.msra.mxu0 0.0
        %3216 = vmatprep.subr.mxu0 0.0
        %3217 = vmatpush1.msra.mxu0 0.0
        %3218 = vmatprep.subr.mxu0 0.0
        %3219 = vmatpush1.msra.mxu0 0.0
        %3220 = vmatprep.subr.mxu0 0.0
        %3221 = vmatpush1.msra.mxu0 0.0
        %3222 = vmatprep.subr.mxu0 0.0
        %3223 = vmatpush1.msra.mxu0 0.0
        %3224 = vmatprep.subr.mxu0 0.0
        %3225 = vmatpush1.msra.mxu0 0.0
        %3226 = vmatprep.subr.mxu0 0.0
        %3227 = vmatpush1.msra.mxu0 0.0
        %3228 = vmatprep.subr.mxu0 0.0
        %3229 = vmatpush1.msra.mxu0 0.0
        %3230 = vmatprep.subr.mxu0 0.0
        %3231 = vmatpush1.msra.mxu0 0.0
        %3232 = vmatprep.subr.mxu0 0.0
        %3233 = vmatpush1.msra.mxu0 0.0
        %3234 = vmatprep.subr.mxu0 0.0
        %3235 = vmatpush1.msra.mxu0 0.0
        %3236 = vmatprep.subr.mxu0 0.0
        %3237 = vmatpush1.msra.mxu0 0.0
        %3238 = vmatprep.subr.mxu0 0.0
        %3239 = vmatpush1.msra.mxu0 0.0
        %3240 = vmatprep.subr.mxu0 0.0
        %3241 = vmatpush1.msra.mxu0 0.0
        %3242 = vmatprep.subr.mxu0 0.0
        %3243 = vmatpush1.msra.mxu0 0.0
        %3244 = vmatprep.subr.mxu0 0.0
        %3245 = vmatpush1.msra.mxu0 0.0
        %3246 = vmatprep.subr.mxu0 0.0
        %3247 = vmatpush1.msra.mxu0 0.0
        %3248 = vmatprep.subr.mxu0 0.0
        %3249 = vmatpush1.msra.mxu0 0.0
        %3250 = vmatprep.subr.mxu0 0.0
        %3251 = vmatpush1.msra.mxu0 0.0
        %3252 = vmatprep.subr.mxu0 0.0
        %3253 = vmatpush1.msra.mxu0 0.0
        %3254 = vmatprep.mubr.f32.mxu0 0.0
        %3255 = vmatmul.mubr.f32.gmra.mrb[0].mxu0 %v3167
        %v3256 = vpop.f32.mrb[0].mxu0
        %v3257 = vadd.f32 %v3128, %v3256
        %v3258 = vpop.f32.mrb[0].mxu0
        %3259 = vmatprep.mubr.f32.mxu0 0.0
        %3260 = vmatmul.mubr.f32.gmra.mrb[0].mxu0 %v3170
        %v3261 = vpop.f32.mrb[0].mxu0
        %v3262 = vadd.f32 %v3133, %v3261
        %v3263 = vpop.f32.mrb[0].mxu0
        %3264 = vmatprep.mubr.f32.mxu0 0.0
        %3265 = vmatmul.mubr.f32.gmra.mrb[0].mxu0 %v3173
        %v3266 = vpop.f32.mrb[0].mxu0
        %v3267 = vadd.f32 %v3138, %v3266
        %v3268 = vpop.f32.mrb[0].mxu0
        %3269 = vmatprep.mubr.f32.mxu0 0.0
        %3270 = vmatmul.mubr.f32.gmra.mrb[0].mxu0 %v3176
        %v3271 = vpop.f32.mrb[0].mxu0
        %v3272 = vadd.f32 %v3143, %v3271
        %v3273 = vpop.f32.mrb[0].mxu0
        %3274 = vmatprep.mubr.f32.mxu0 0.0
        %3275 = vmatmul.mubr.f32.gmra.mrb[0].mxu0 %v3179
        %v3276 = vpop.f32.mrb[0].mxu0
        %v3277 = vadd.f32 %v3148, %v3276
        %v3278 = vpop.f32.mrb[0].mxu0
        %3279 = vmatprep.mubr.f32.mxu0 0.0
        %3280 = vmatmul.mubr.f32.gmra.mrb[0].mxu0 %v3182
        %v3281 = vpop.f32.mrb[0].mxu0
        %v3282 = vadd.f32 %v3153, %v3281
        %v3283 = vpop.f32.mrb[0].mxu0
        %3284 = vmatprep.mubr.f32.mxu0 0.0
        %3285 = vmatmul.mubr.f32.gmra.mrb[0].mxu0 %v3185
        %v3286 = vpop.f32.mrb[0].mxu0
        %v3287 = vadd.f32 %v3158, %v3286
        %v3288 = vpop.f32.mrb[0].mxu0
        %3289 = vmatprep.mubr.f32.mxu0 0.0
        %3290 = vmatmul.mubr.f32.gmra.mrb[0].mxu0 %v3188
        %v3291 = vpop.f32.mrb[0].mxu0
        %v3292 = vadd.f32 %v3163, %v3291
        %v3293 = vpop.f32.mrb[0].mxu0
        %3294 = vdwg.mxu0
        %v3295 = vld [vmem:[#allocation5 + $0x2] sm:$0xff]
        %v3296 = vld [vmem:[#allocation5 + $0x12] sm:$0xff]
        %v3297 = vld [vmem:[#allocation5 + $0x22] sm:$0xff]
        %v3298 = vld [vmem:[#allocation5 + $0x32] sm:$0xff]
        %v3299 = vld [vmem:[#allocation5 + $0x42] sm:$0xff]
        %v3300 = vld [vmem:[#allocation5 + $0x52] sm:$0xff]
        %v3301 = vld [vmem:[#allocation5 + $0x62] sm:$0xff]
        %v3302 = vld [vmem:[#allocation5 + $0x72] sm:$0xff]
        %s3303 = scalar_lea.vmem %s3, 32
        %v3304 = vld [vmem:[%s3303] sm:$0xff]
        %v3305 = vld [vmem:[%s3303 + $0x8] sm:$0xff]
        %v3307 = vsel %vm2833, %v3295, 0
        %v3310 = vsel %vm2833, %v3296, 0
        %v3313 = vsel %vm2833, %v3297, 0
        %v3316 = vsel %vm2833, %v3298, 0
        %v3319 = vsel %vm2833, %v3299, 0
        %v3322 = vsel %vm2833, %v3300, 0
        %v3325 = vsel %vm2833, %v3301, 0
        %v3328 = vsel %vm2833, %v3302, 0
        %3330 = vmatprep.subr.mxu0 0.0
        %3331 = vmatpush1.msra.mxu0 %v3304
        %3332 = vmatprep.subr.mxu0 0.0
        %3333 = vmatpush1.msra.mxu0 %v3305
        %3334 = vmatprep.subr.mxu0 0.0
        %3335 = vmatpush1.msra.mxu0 0.0
        %3336 = vmatprep.subr.mxu0 0.0
        %3337 = vmatpush1.msra.mxu0 0.0
        %3338 = vmatprep.subr.mxu0 0.0
        %3339 = vmatpush1.msra.mxu0 0.0
        %3340 = vmatprep.subr.mxu0 0.0
        %3341 = vmatpush1.msra.mxu0 0.0
        %3342 = vmatprep.subr.mxu0 0.0
        %3343 = vmatpush1.msra.mxu0 0.0
        %3344 = vmatprep.subr.mxu0 0.0
        %3345 = vmatpush1.msra.mxu0 0.0
        %3346 = vmatprep.subr.mxu0 0.0
        %3347 = vmatpush1.msra.mxu0 0.0
        %3348 = vmatprep.subr.mxu0 0.0
        %3349 = vmatpush1.msra.mxu0 0.0
        %3350 = vmatprep.subr.mxu0 0.0
        %3351 = vmatpush1.msra.mxu0 0.0
        %3352 = vmatprep.subr.mxu0 0.0
        %3353 = vmatpush1.msra.mxu0 0.0
        %3354 = vmatprep.subr.mxu0 0.0
        %3355 = vmatpush1.msra.mxu0 0.0
        %3356 = vmatprep.subr.mxu0 0.0
        %3357 = vmatpush1.msra.mxu0 0.0
        %3358 = vmatprep.subr.mxu0 0.0
        %3359 = vmatpush1.msra.mxu0 0.0
        %3360 = vmatprep.subr.mxu0 0.0
        %3361 = vmatpush1.msra.mxu0 0.0
        %3362 = vmatprep.subr.mxu0 0.0
        %3363 = vmatpush1.msra.mxu0 0.0
        %3364 = vmatprep.subr.mxu0 0.0
        %3365 = vmatpush1.msra.mxu0 0.0
        %3366 = vmatprep.subr.mxu0 0.0
        %3367 = vmatpush1.msra.mxu0 0.0
        %3368 = vmatprep.subr.mxu0 0.0
        %3369 = vmatpush1.msra.mxu0 0.0
        %3370 = vmatprep.subr.mxu0 0.0
        %3371 = vmatpush1.msra.mxu0 0.0
        %3372 = vmatprep.subr.mxu0 0.0
        %3373 = vmatpush1.msra.mxu0 0.0
        %3374 = vmatprep.subr.mxu0 0.0
        %3375 = vmatpush1.msra.mxu0 0.0
        %3376 = vmatprep.subr.mxu0 0.0
        %3377 = vmatpush1.msra.mxu0 0.0
        %3378 = vmatprep.subr.mxu0 0.0
        %3379 = vmatpush1.msra.mxu0 0.0
        %3380 = vmatprep.subr.mxu0 0.0
        %3381 = vmatpush1.msra.mxu0 0.0
        %3382 = vmatprep.subr.mxu0 0.0
        %3383 = vmatpush1.msra.mxu0 0.0
        %3384 = vmatprep.subr.mxu0 0.0
        %3385 = vmatpush1.msra.mxu0 0.0
        %3386 = vmatprep.subr.mxu0 0.0
        %3387 = vmatpush1.msra.mxu0 0.0
        %3388 = vmatprep.subr.mxu0 0.0
        %3389 = vmatpush1.msra.mxu0 0.0
        %3390 = vmatprep.subr.mxu0 0.0
        %3391 = vmatpush1.msra.mxu0 0.0
        %3392 = vmatprep.subr.mxu0 0.0
        %3393 = vmatpush1.msra.mxu0 0.0
        %3394 = vmatprep.mubr.f32.mxu0 0.0
        %3395 = vmatmul.mubr.f32.gmra.mrb[0].mxu0 %v3307
        %v3396 = vpop.f32.mrb[0].mxu0
        %v3397 = vadd.f32 0.0, %v3396
        %v3398 = vpop.f32.mrb[0].mxu0
        %3399 = vmatprep.mubr.f32.mxu0 0.0
        %3400 = vmatmul.mubr.f32.gmra.mrb[0].mxu0 %v3310
        %v3401 = vpop.f32.mrb[0].mxu0
        %v3402 = vadd.f32 0.0, %v3401
        %v3403 = vpop.f32.mrb[0].mxu0
        %3404 = vmatprep.mubr.f32.mxu0 0.0
        %3405 = vmatmul.mubr.f32.gmra.mrb[0].mxu0 %v3313
        %v3406 = vpop.f32.mrb[0].mxu0
        %v3407 = vadd.f32 0.0, %v3406
        %v3408 = vpop.f32.mrb[0].mxu0
        %3409 = vmatprep.mubr.f32.mxu0 0.0
        %3410 = vmatmul.mubr.f32.gmra.mrb[0].mxu0 %v3316
        %v3411 = vpop.f32.mrb[0].mxu0
        %v3412 = vadd.f32 0.0, %v3411
        %v3413 = vpop.f32.mrb[0].mxu0
        %3414 = vmatprep.mubr.f32.mxu0 0.0
        %3415 = vmatmul.mubr.f32.gmra.mrb[0].mxu0 %v3319
        %v3416 = vpop.f32.mrb[0].mxu0
        %v3417 = vadd.f32 0.0, %v3416
        %v3418 = vpop.f32.mrb[0].mxu0
        %3419 = vmatprep.mubr.f32.mxu0 0.0
        %3420 = vmatmul.mubr.f32.gmra.mrb[0].mxu0 %v3322
        %v3421 = vpop.f32.mrb[0].mxu0
        %v3422 = vadd.f32 0.0, %v3421
        %v3423 = vpop.f32.mrb[0].mxu0
        %3424 = vmatprep.mubr.f32.mxu0 0.0
        %3425 = vmatmul.mubr.f32.gmra.mrb[0].mxu0 %v3325
        %v3426 = vpop.f32.mrb[0].mxu0
        %v3427 = vadd.f32 0.0, %v3426
        %v3428 = vpop.f32.mrb[0].mxu0
        %3429 = vmatprep.mubr.f32.mxu0 0.0
        %3430 = vmatmul.mubr.f32.gmra.mrb[0].mxu0 %v3328
        %v3431 = vpop.f32.mrb[0].mxu0
        %v3432 = vadd.f32 0.0, %v3431
        %v3433 = vpop.f32.mrb[0].mxu0
        %3434 = vdwg.mxu0
        %v3435 = vadd.f32 %v3257, %v3397
        %v3436 = vadd.f32 %v3262, %v3402
        %v3437 = vadd.f32 %v3267, %v3407
        %v3438 = vadd.f32 %v3272, %v3412
        %v3439 = vadd.f32 %v3277, %v3417
        %v3440 = vadd.f32 %v3282, %v3422
        %v3441 = vadd.f32 %v3287, %v3427
        %v3442 = vadd.f32 %v3292, %v3432
        %v3443 = vld [vmem:[%s3007] sm:$0xff]
        %v3444 = vld [vmem:[%s3007 + $0x10] sm:$0xff]
        %v3445 = vld [vmem:[%s3007 + $0x20] sm:$0xff]
        %v3446 = vld [vmem:[%s3007 + $0x30] sm:$0xff]
        %v3447 = vld [vmem:[%s3007 + $0x40] sm:$0xff]
        %v3448 = vld [vmem:[%s3007 + $0x50] sm:$0xff]
        %v3449 = vld [vmem:[%s3007 + $0x60] sm:$0xff]
        %v3450 = vld [vmem:[%s3007 + $0x70] sm:$0xff]
        %s3451 = scalar_lea.vmem %s3, 48
        %v3452 = vld [vmem:[%s3451] sm:$0xff]
        %v3453 = vld [vmem:[%s3451 + $0x8] sm:$0xff]
        %v3455 = vsel %vm2833, %v3443, 0
        %v3458 = vsel %vm2833, %v3444, 0
        %v3461 = vsel %vm2833, %v3445, 0
        %v3464 = vsel %vm2833, %v3446, 0
        %v3467 = vsel %vm2833, %v3447, 0
        %v3470 = vsel %vm2833, %v3448, 0
        %v3473 = vsel %vm2833, %v3449, 0
        %v3476 = vsel %vm2833, %v3450, 0
        %3478 = vmatprep.subr.mxu0 0.0
        %3479 = vmatpush1.msra.mxu0 %v3452
        %3480 = vmatprep.subr.mxu0 0.0
        %3481 = vmatpush1.msra.mxu0 %v3453
        %3482 = vmatprep.subr.mxu0 0.0
        %3483 = vmatpush1.msra.mxu0 0.0
        %3484 = vmatprep.subr.mxu0 0.0
        %3485 = vmatpush1.msra.mxu0 0.0
        %3486 = vmatprep.subr.mxu0 0.0
        %3487 = vmatpush1.msra.mxu0 0.0
        %3488 = vmatprep.subr.mxu0 0.0
        %3489 = vmatpush1.msra.mxu0 0.0
        %3490 = vmatprep.subr.mxu0 0.0
        %3491 = vmatpush1.msra.mxu0 0.0
        %3492 = vmatprep.subr.mxu0 0.0
        %3493 = vmatpush1.msra.mxu0 0.0
        %3494 = vmatprep.subr.mxu0 0.0
        %3495 = vmatpush1.msra.mxu0 0.0
        %3496 = vmatprep.subr.mxu0 0.0
        %3497 = vmatpush1.msra.mxu0 0.0
        %3498 = vmatprep.subr.mxu0 0.0
        %3499 = vmatpush1.msra.mxu0 0.0
        %3500 = vmatprep.subr.mxu0 0.0
        %3501 = vmatpush1.msra.mxu0 0.0
        %3502 = vmatprep.subr.mxu0 0.0
        %3503 = vmatpush1.msra.mxu0 0.0
        %3504 = vmatprep.subr.mxu0 0.0
        %3505 = vmatpush1.msra.mxu0 0.0
        %3506 = vmatprep.subr.mxu0 0.0
        %3507 = vmatpush1.msra.mxu0 0.0
        %3508 = vmatprep.subr.mxu0 0.0
        %3509 = vmatpush1.msra.mxu0 0.0
        %3510 = vmatprep.subr.mxu0 0.0
        %3511 = vmatpush1.msra.mxu0 0.0
        %3512 = vmatprep.subr.mxu0 0.0
        %3513 = vmatpush1.msra.mxu0 0.0
        %3514 = vmatprep.subr.mxu0 0.0
        %3515 = vmatpush1.msra.mxu0 0.0
        %3516 = vmatprep.subr.mxu0 0.0
        %3517 = vmatpush1.msra.mxu0 0.0
        %3518 = vmatprep.subr.mxu0 0.0
        %3519 = vmatpush1.msra.mxu0 0.0
        %3520 = vmatprep.subr.mxu0 0.0
        %3521 = vmatpush1.msra.mxu0 0.0
        %3522 = vmatprep.subr.mxu0 0.0
        %3523 = vmatpush1.msra.mxu0 0.0
        %3524 = vmatprep.subr.mxu0 0.0
        %3525 = vmatpush1.msra.mxu0 0.0
        %3526 = vmatprep.subr.mxu0 0.0
        %3527 = vmatpush1.msra.mxu0 0.0
        %3528 = vmatprep.subr.mxu0 0.0
        %3529 = vmatpush1.msra.mxu0 0.0
        %3530 = vmatprep.subr.mxu0 0.0
        %3531 = vmatpush1.msra.mxu0 0.0
        %3532 = vmatprep.subr.mxu0 0.0
        %3533 = vmatpush1.msra.mxu0 0.0
        %3534 = vmatprep.subr.mxu0 0.0
        %3535 = vmatpush1.msra.mxu0 0.0
        %3536 = vmatprep.subr.mxu0 0.0
        %3537 = vmatpush1.msra.mxu0 0.0
        %3538 = vmatprep.subr.mxu0 0.0
        %3539 = vmatpush1.msra.mxu0 0.0
        %3540 = vmatprep.subr.mxu0 0.0
        %3541 = vmatpush1.msra.mxu0 0.0
        %3542 = vmatprep.mubr.f32.mxu0 0.0
        %3543 = vmatmul.mubr.f32.gmra.mrb[0].mxu0 %v3455
        %v3544 = vpop.f32.mrb[0].mxu0
        %v3545 = vadd.f32 0.0, %v3544
        %v3546 = vpop.f32.mrb[0].mxu0
        %3547 = vmatprep.mubr.f32.mxu0 0.0
        %3548 = vmatmul.mubr.f32.gmra.mrb[0].mxu0 %v3458
        %v3549 = vpop.f32.mrb[0].mxu0
        %v3550 = vadd.f32 0.0, %v3549
        %v3551 = vpop.f32.mrb[0].mxu0
        %3552 = vmatprep.mubr.f32.mxu0 0.0
        %3553 = vmatmul.mubr.f32.gmra.mrb[0].mxu0 %v3461
        %v3554 = vpop.f32.mrb[0].mxu0
        %v3555 = vadd.f32 0.0, %v3554
        %v3556 = vpop.f32.mrb[0].mxu0
        %3557 = vmatprep.mubr.f32.mxu0 0.0
        %3558 = vmatmul.mubr.f32.gmra.mrb[0].mxu0 %v3464
        %v3559 = vpop.f32.mrb[0].mxu0
        %v3560 = vadd.f32 0.0, %v3559
        %v3561 = vpop.f32.mrb[0].mxu0
        %3562 = vmatprep.mubr.f32.mxu0 0.0
        %3563 = vmatmul.mubr.f32.gmra.mrb[0].mxu0 %v3467
        %v3564 = vpop.f32.mrb[0].mxu0
        %v3565 = vadd.f32 0.0, %v3564
        %v3566 = vpop.f32.mrb[0].mxu0
        %3567 = vmatprep.mubr.f32.mxu0 0.0
        %3568 = vmatmul.mubr.f32.gmra.mrb[0].mxu0 %v3470
        %v3569 = vpop.f32.mrb[0].mxu0
        %v3570 = vadd.f32 0.0, %v3569
        %v3571 = vpop.f32.mrb[0].mxu0
        %3572 = vmatprep.mubr.f32.mxu0 0.0
        %3573 = vmatmul.mubr.f32.gmra.mrb[0].mxu0 %v3473
        %v3574 = vpop.f32.mrb[0].mxu0
        %v3575 = vadd.f32 0.0, %v3574
        %v3576 = vpop.f32.mrb[0].mxu0
        %3577 = vmatprep.mubr.f32.mxu0 0.0
        %3578 = vmatmul.mubr.f32.gmra.mrb[0].mxu0 %v3476
        %v3579 = vpop.f32.mrb[0].mxu0
        %v3580 = vadd.f32 0.0, %v3579
        %v3581 = vpop.f32.mrb[0].mxu0
        %3582 = vdwg.mxu0
        %v3583 = vadd.f32 %v3435, %v3545
        %v3584 = vadd.f32 %v3436, %v3550
        %v3585 = vadd.f32 %v3437, %v3555
        %v3586 = vadd.f32 %v3438, %v3560
        %v3587 = vadd.f32 %v3439, %v3565
        %v3588 = vadd.f32 %v3440, %v3570
        %v3589 = vadd.f32 %v3441, %v3575
        %v3590 = vadd.f32 %v3442, %v3580
        %v3591 = vld [vmem:[%s3007 + $0x1] sm:$0xff]
        %v3592 = vld [vmem:[%s3007 + $0x11] sm:$0xff]
        %v3593 = vld [vmem:[%s3007 + $0x21] sm:$0xff]
        %v3594 = vld [vmem:[%s3007 + $0x31] sm:$0xff]
        %v3595 = vld [vmem:[%s3007 + $0x41] sm:$0xff]
        %v3596 = vld [vmem:[%s3007 + $0x51] sm:$0xff]
        %v3597 = vld [vmem:[%s3007 + $0x61] sm:$0xff]
        %v3598 = vld [vmem:[%s3007 + $0x71] sm:$0xff]
        %s3599 = scalar_lea.vmem %s3, 64
        %v3600 = vld [vmem:[%s3599] sm:$0xff]
        %v3601 = vld [vmem:[%s3599 + $0x8] sm:$0xff]
        %v3603 = vsel %vm2833, %v3591, 0
        %v3606 = vsel %vm2833, %v3592, 0
        %v3609 = vsel %vm2833, %v3593, 0
        %v3612 = vsel %vm2833, %v3594, 0
        %v3615 = vsel %vm2833, %v3595, 0
        %v3618 = vsel %vm2833, %v3596, 0
        %v3621 = vsel %vm2833, %v3597, 0
        %v3624 = vsel %vm2833, %v3598, 0
        %3626 = vmatprep.subr.mxu0 0.0
        %3627 = vmatpush1.msra.mxu0 %v3600
        %3628 = vmatprep.subr.mxu0 0.0
        %3629 = vmatpush1.msra.mxu0 %v3601
        %3630 = vmatprep.subr.mxu0 0.0
        %3631 = vmatpush1.msra.mxu0 0.0
        %3632 = vmatprep.subr.mxu0 0.0
        %3633 = vmatpush1.msra.mxu0 0.0
        %3634 = vmatprep.subr.mxu0 0.0
        %3635 = vmatpush1.msra.mxu0 0.0
        %3636 = vmatprep.subr.mxu0 0.0
        %3637 = vmatpush1.msra.mxu0 0.0
        %3638 = vmatprep.subr.mxu0 0.0
        %3639 = vmatpush1.msra.mxu0 0.0
        %3640 = vmatprep.subr.mxu0 0.0
        %3641 = vmatpush1.msra.mxu0 0.0
        %3642 = vmatprep.subr.mxu0 0.0
        %3643 = vmatpush1.msra.mxu0 0.0
        %3644 = vmatprep.subr.mxu0 0.0
        %3645 = vmatpush1.msra.mxu0 0.0
        %3646 = vmatprep.subr.mxu0 0.0
        %3647 = vmatpush1.msra.mxu0 0.0
        %3648 = vmatprep.subr.mxu0 0.0
        %3649 = vmatpush1.msra.mxu0 0.0
        %3650 = vmatprep.subr.mxu0 0.0
        %3651 = vmatpush1.msra.mxu0 0.0
        %3652 = vmatprep.subr.mxu0 0.0
        %3653 = vmatpush1.msra.mxu0 0.0
        %3654 = vmatprep.subr.mxu0 0.0
        %3655 = vmatpush1.msra.mxu0 0.0
        %3656 = vmatprep.subr.mxu0 0.0
        %3657 = vmatpush1.msra.mxu0 0.0
        %3658 = vmatprep.subr.mxu0 0.0
        %3659 = vmatpush1.msra.mxu0 0.0
        %3660 = vmatprep.subr.mxu0 0.0
        %3661 = vmatpush1.msra.mxu0 0.0
        %3662 = vmatprep.subr.mxu0 0.0
        %3663 = vmatpush1.msra.mxu0 0.0
        %3664 = vmatprep.subr.mxu0 0.0
        %3665 = vmatpush1.msra.mxu0 0.0
        %3666 = vmatprep.subr.mxu0 0.0
        %3667 = vmatpush1.msra.mxu0 0.0
        %3668 = vmatprep.subr.mxu0 0.0
        %3669 = vmatpush1.msra.mxu0 0.0
        %3670 = vmatprep.subr.mxu0 0.0
        %3671 = vmatpush1.msra.mxu0 0.0
        %3672 = vmatprep.subr.mxu0 0.0
        %3673 = vmatpush1.msra.mxu0 0.0
        %3674 = vmatprep.subr.mxu0 0.0
        %3675 = vmatpush1.msra.mxu0 0.0
        %3676 = vmatprep.subr.mxu0 0.0
        %3677 = vmatpush1.msra.mxu0 0.0
        %3678 = vmatprep.subr.mxu0 0.0
        %3679 = vmatpush1.msra.mxu0 0.0
        %3680 = vmatprep.subr.mxu0 0.0
        %3681 = vmatpush1.msra.mxu0 0.0
        %3682 = vmatprep.subr.mxu0 0.0
        %3683 = vmatpush1.msra.mxu0 0.0
        %3684 = vmatprep.subr.mxu0 0.0
        %3685 = vmatpush1.msra.mxu0 0.0
        %3686 = vmatprep.subr.mxu0 0.0
        %3687 = vmatpush1.msra.mxu0 0.0
        %3688 = vmatprep.subr.mxu0 0.0
        %3689 = vmatpush1.msra.mxu0 0.0
        %3690 = vmatprep.mubr.f32.mxu0 0.0
        %3691 = vmatmul.mubr.f32.gmra.mrb[0].mxu0 %v3603
        %v3692 = vpop.f32.mrb[0].mxu0
        %v3693 = vadd.f32 0.0, %v3692
        %v3694 = vpop.f32.mrb[0].mxu0
        %3695 = vmatprep.mubr.f32.mxu0 0.0
        %3696 = vmatmul.mubr.f32.gmra.mrb[0].mxu0 %v3606
        %v3697 = vpop.f32.mrb[0].mxu0
        %v3698 = vadd.f32 0.0, %v3697
        %v3699 = vpop.f32.mrb[0].mxu0
        %3700 = vmatprep.mubr.f32.mxu0 0.0
        %3701 = vmatmul.mubr.f32.gmra.mrb[0].mxu0 %v3609
        %v3702 = vpop.f32.mrb[0].mxu0
        %v3703 = vadd.f32 0.0, %v3702
        %v3704 = vpop.f32.mrb[0].mxu0
        %3705 = vmatprep.mubr.f32.mxu0 0.0
        %3706 = vmatmul.mubr.f32.gmra.mrb[0].mxu0 %v3612
        %v3707 = vpop.f32.mrb[0].mxu0
        %v3708 = vadd.f32 0.0, %v3707
        %v3709 = vpop.f32.mrb[0].mxu0
        %3710 = vmatprep.mubr.f32.mxu0 0.0
        %3711 = vmatmul.mubr.f32.gmra.mrb[0].mxu0 %v3615
        %v3712 = vpop.f32.mrb[0].mxu0
        %v3713 = vadd.f32 0.0, %v3712
        %v3714 = vpop.f32.mrb[0].mxu0
        %3715 = vmatprep.mubr.f32.mxu0 0.0
        %3716 = vmatmul.mubr.f32.gmra.mrb[0].mxu0 %v3618
        %v3717 = vpop.f32.mrb[0].mxu0
        %v3718 = vadd.f32 0.0, %v3717
        %v3719 = vpop.f32.mrb[0].mxu0
        %3720 = vmatprep.mubr.f32.mxu0 0.0
        %3721 = vmatmul.mubr.f32.gmra.mrb[0].mxu0 %v3621
        %v3722 = vpop.f32.mrb[0].mxu0
        %v3723 = vadd.f32 0.0, %v3722
        %v3724 = vpop.f32.mrb[0].mxu0
        %3725 = vmatprep.mubr.f32.mxu0 0.0
        %3726 = vmatmul.mubr.f32.gmra.mrb[0].mxu0 %v3624
        %v3727 = vpop.f32.mrb[0].mxu0
        %v3728 = vadd.f32 0.0, %v3727
        %v3729 = vpop.f32.mrb[0].mxu0
        %3730 = vdwg.mxu0
        %v3731 = vadd.f32 %v3583, %v3693
        %v3732 = vadd.f32 %v3584, %v3698
        %v3733 = vadd.f32 %v3585, %v3703
        %v3734 = vadd.f32 %v3586, %v3708
        %v3735 = vadd.f32 %v3587, %v3713
        %v3736 = vadd.f32 %v3588, %v3718
        %v3737 = vadd.f32 %v3589, %v3723
        %v3738 = vadd.f32 %v3590, %v3728
        %v3739 = vld [vmem:[%s3007 + $0x2] sm:$0xff]
        %v3740 = vld [vmem:[%s3007 + $0x12] sm:$0xff]
        %v3741 = vld [vmem:[%s3007 + $0x22] sm:$0xff]
        %v3742 = vld [vmem:[%s3007 + $0x32] sm:$0xff]
        %v3743 = vld [vmem:[%s3007 + $0x42] sm:$0xff]
        %v3744 = vld [vmem:[%s3007 + $0x52] sm:$0xff]
        %v3745 = vld [vmem:[%s3007 + $0x62] sm:$0xff]
        %v3746 = vld [vmem:[%s3007 + $0x72] sm:$0xff]
        %s3747 = scalar_lea.vmem %s3, 80
        %v3748 = vld [vmem:[%s3747] sm:$0xff]
        %v3749 = vld [vmem:[%s3747 + $0x8] sm:$0xff]
        %v3751 = vsel %vm2833, %v3739, 0
        %v3754 = vsel %vm2833, %v3740, 0
        %v3757 = vsel %vm2833, %v3741, 0
        %v3760 = vsel %vm2833, %v3742, 0
        %v3763 = vsel %vm2833, %v3743, 0
        %v3766 = vsel %vm2833, %v3744, 0
        %v3769 = vsel %vm2833, %v3745, 0
        %v3772 = vsel %vm2833, %v3746, 0
        %3774 = vmatprep.subr.mxu0 0.0
        %3775 = vmatpush1.msra.mxu0 %v3748
        %3776 = vmatprep.subr.mxu0 0.0
        %3777 = vmatpush1.msra.mxu0 %v3749
        %3778 = vmatprep.subr.mxu0 0.0
        %3779 = vmatpush1.msra.mxu0 0.0
        %3780 = vmatprep.subr.mxu0 0.0
        %3781 = vmatpush1.msra.mxu0 0.0
        %3782 = vmatprep.subr.mxu0 0.0
        %3783 = vmatpush1.msra.mxu0 0.0
        %3784 = vmatprep.subr.mxu0 0.0
        %3785 = vmatpush1.msra.mxu0 0.0
        %3786 = vmatprep.subr.mxu0 0.0
        %3787 = vmatpush1.msra.mxu0 0.0
        %3788 = vmatprep.subr.mxu0 0.0
        %3789 = vmatpush1.msra.mxu0 0.0
        %3790 = vmatprep.subr.mxu0 0.0
        %3791 = vmatpush1.msra.mxu0 0.0
        %3792 = vmatprep.subr.mxu0 0.0
        %3793 = vmatpush1.msra.mxu0 0.0
        %3794 = vmatprep.subr.mxu0 0.0
        %3795 = vmatpush1.msra.mxu0 0.0
        %3796 = vmatprep.subr.mxu0 0.0
        %3797 = vmatpush1.msra.mxu0 0.0
        %3798 = vmatprep.subr.mxu0 0.0
        %3799 = vmatpush1.msra.mxu0 0.0
        %3800 = vmatprep.subr.mxu0 0.0
        %3801 = vmatpush1.msra.mxu0 0.0
        %3802 = vmatprep.subr.mxu0 0.0
        %3803 = vmatpush1.msra.mxu0 0.0
        %3804 = vmatprep.subr.mxu0 0.0
        %3805 = vmatpush1.msra.mxu0 0.0
        %3806 = vmatprep.subr.mxu0 0.0
        %3807 = vmatpush1.msra.mxu0 0.0
        %3808 = vmatprep.subr.mxu0 0.0
        %3809 = vmatpush1.msra.mxu0 0.0
        %3810 = vmatprep.subr.mxu0 0.0
        %3811 = vmatpush1.msra.mxu0 0.0
        %3812 = vmatprep.subr.mxu0 0.0
        %3813 = vmatpush1.msra.mxu0 0.0
        %3814 = vmatprep.subr.mxu0 0.0
        %3815 = vmatpush1.msra.mxu0 0.0
        %3816 = vmatprep.subr.mxu0 0.0
        %3817 = vmatpush1.msra.mxu0 0.0
        %3818 = vmatprep.subr.mxu0 0.0
        %3819 = vmatpush1.msra.mxu0 0.0
        %3820 = vmatprep.subr.mxu0 0.0
        %3821 = vmatpush1.msra.mxu0 0.0
        %3822 = vmatprep.subr.mxu0 0.0
        %3823 = vmatpush1.msra.mxu0 0.0
        %3824 = vmatprep.subr.mxu0 0.0
        %3825 = vmatpush1.msra.mxu0 0.0
        %3826 = vmatprep.subr.mxu0 0.0
        %3827 = vmatpush1.msra.mxu0 0.0
        %3828 = vmatprep.subr.mxu0 0.0
        %3829 = vmatpush1.msra.mxu0 0.0
        %3830 = vmatprep.subr.mxu0 0.0
        %3831 = vmatpush1.msra.mxu0 0.0
        %3832 = vmatprep.subr.mxu0 0.0
        %3833 = vmatpush1.msra.mxu0 0.0
        %3834 = vmatprep.subr.mxu0 0.0
        %3835 = vmatpush1.msra.mxu0 0.0
        %3836 = vmatprep.subr.mxu0 0.0
        %3837 = vmatpush1.msra.mxu0 0.0
        %3838 = vmatprep.mubr.f32.mxu0 0.0
        %3839 = vmatmul.mubr.f32.gmra.mrb[0].mxu0 %v3751
        %v3840 = vpop.f32.mrb[0].mxu0
        %v3841 = vadd.f32 0.0, %v3840
        %v3842 = vpop.f32.mrb[0].mxu0
        %3843 = vmatprep.mubr.f32.mxu0 0.0
        %3844 = vmatmul.mubr.f32.gmra.mrb[0].mxu0 %v3754
        %v3845 = vpop.f32.mrb[0].mxu0
        %v3846 = vadd.f32 0.0, %v3845
        %v3847 = vpop.f32.mrb[0].mxu0
        %3848 = vmatprep.mubr.f32.mxu0 0.0
        %3849 = vmatmul.mubr.f32.gmra.mrb[0].mxu0 %v3757
        %v3850 = vpop.f32.mrb[0].mxu0
        %v3851 = vadd.f32 0.0, %v3850
        %v3852 = vpop.f32.mrb[0].mxu0
        %3853 = vmatprep.mubr.f32.mxu0 0.0
        %3854 = vmatmul.mubr.f32.gmra.mrb[0].mxu0 %v3760
        %v3855 = vpop.f32.mrb[0].mxu0
        %v3856 = vadd.f32 0.0, %v3855
        %v3857 = vpop.f32.mrb[0].mxu0
        %3858 = vmatprep.mubr.f32.mxu0 0.0
        %3859 = vmatmul.mubr.f32.gmra.mrb[0].mxu0 %v3763
        %v3860 = vpop.f32.mrb[0].mxu0
        %v3861 = vadd.f32 0.0, %v3860
        %v3862 = vpop.f32.mrb[0].mxu0
        %3863 = vmatprep.mubr.f32.mxu0 0.0
        %3864 = vmatmul.mubr.f32.gmra.mrb[0].mxu0 %v3766
        %v3865 = vpop.f32.mrb[0].mxu0
        %v3866 = vadd.f32 0.0, %v3865
        %v3867 = vpop.f32.mrb[0].mxu0
        %3868 = vmatprep.mubr.f32.mxu0 0.0
        %3869 = vmatmul.mubr.f32.gmra.mrb[0].mxu0 %v3769
        %v3870 = vpop.f32.mrb[0].mxu0
        %v3871 = vadd.f32 0.0, %v3870
        %v3872 = vpop.f32.mrb[0].mxu0
        %3873 = vmatprep.mubr.f32.mxu0 0.0
        %3874 = vmatmul.mubr.f32.gmra.mrb[0].mxu0 %v3772
        %v3875 = vpop.f32.mrb[0].mxu0
        %v3876 = vadd.f32 0.0, %v3875
        %v3877 = vpop.f32.mrb[0].mxu0
        %3878 = vdwg.mxu0
        %v3879 = vadd.f32 %v3731, %v3841
        %v3880 = vadd.f32 %v3732, %v3846
        %v3881 = vadd.f32 %v3733, %v3851
        %v3882 = vadd.f32 %v3734, %v3856
        %v3883 = vadd.f32 %v3735, %v3861
        %v3884 = vadd.f32 %v3736, %v3866
        %v3885 = vadd.f32 %v3737, %v3871
        %v3886 = vadd.f32 %v3738, %v3876
        %s3887 = scalar_lea.vmem [#allocation5], 32
        %v3888 = vld [vmem:[%s3887] sm:$0xff]
        %v3889 = vld [vmem:[%s3887 + $0x10] sm:$0xff]
        %v3890 = vld [vmem:[%s3887 + $0x20] sm:$0xff]
        %v3891 = vld [vmem:[%s3887 + $0x30] sm:$0xff]
        %v3892 = vld [vmem:[%s3887 + $0x40] sm:$0xff]
        %v3893 = vld [vmem:[%s3887 + $0x50] sm:$0xff]
        %v3894 = vld [vmem:[%s3887 + $0x60] sm:$0xff]
        %v3895 = vld [vmem:[%s3887 + $0x70] sm:$0xff]
        %s3896 = scalar_lea.vmem %s3, 96
        %v3897 = vld [vmem:[%s3896] sm:$0xff]
        %v3898 = vld [vmem:[%s3896 + $0x8] sm:$0xff]
        %v3900 = vsel %vm2833, %v3888, 0
        %v3903 = vsel %vm2833, %v3889, 0
        %v3906 = vsel %vm2833, %v3890, 0
        %v3909 = vsel %vm2833, %v3891, 0
        %v3912 = vsel %vm2833, %v3892, 0
        %v3915 = vsel %vm2833, %v3893, 0
        %v3918 = vsel %vm2833, %v3894, 0
        %v3921 = vsel %vm2833, %v3895, 0
        %3923 = vmatprep.subr.mxu0 0.0
        %3924 = vmatpush1.msra.mxu0 %v3897
        %3925 = vmatprep.subr.mxu0 0.0
        %3926 = vmatpush1.msra.mxu0 %v3898
        %3927 = vmatprep.subr.mxu0 0.0
        %3928 = vmatpush1.msra.mxu0 0.0
        %3929 = vmatprep.subr.mxu0 0.0
        %3930 = vmatpush1.msra.mxu0 0.0
        %3931 = vmatprep.subr.mxu0 0.0
        %3932 = vmatpush1.msra.mxu0 0.0
        %3933 = vmatprep.subr.mxu0 0.0
        %3934 = vmatpush1.msra.mxu0 0.0
        %3935 = vmatprep.subr.mxu0 0.0
        %3936 = vmatpush1.msra.mxu0 0.0
        %3937 = vmatprep.subr.mxu0 0.0
        %3938 = vmatpush1.msra.mxu0 0.0
        %3939 = vmatprep.subr.mxu0 0.0
        %3940 = vmatpush1.msra.mxu0 0.0
        %3941 = vmatprep.subr.mxu0 0.0
        %3942 = vmatpush1.msra.mxu0 0.0
        %3943 = vmatprep.subr.mxu0 0.0
        %3944 = vmatpush1.msra.mxu0 0.0
        %3945 = vmatprep.subr.mxu0 0.0
        %3946 = vmatpush1.msra.mxu0 0.0
        %3947 = vmatprep.subr.mxu0 0.0
        %3948 = vmatpush1.msra.mxu0 0.0
        %3949 = vmatprep.subr.mxu0 0.0
        %3950 = vmatpush1.msra.mxu0 0.0
        %3951 = vmatprep.subr.mxu0 0.0
        %3952 = vmatpush1.msra.mxu0 0.0
        %3953 = vmatprep.subr.mxu0 0.0
        %3954 = vmatpush1.msra.mxu0 0.0
        %3955 = vmatprep.subr.mxu0 0.0
        %3956 = vmatpush1.msra.mxu0 0.0
        %3957 = vmatprep.subr.mxu0 0.0
        %3958 = vmatpush1.msra.mxu0 0.0
        %3959 = vmatprep.subr.mxu0 0.0
        %3960 = vmatpush1.msra.mxu0 0.0
        %3961 = vmatprep.subr.mxu0 0.0
        %3962 = vmatpush1.msra.mxu0 0.0
        %3963 = vmatprep.subr.mxu0 0.0
        %3964 = vmatpush1.msra.mxu0 0.0
        %3965 = vmatprep.subr.mxu0 0.0
        %3966 = vmatpush1.msra.mxu0 0.0
        %3967 = vmatprep.subr.mxu0 0.0
        %3968 = vmatpush1.msra.mxu0 0.0
        %3969 = vmatprep.subr.mxu0 0.0
        %3970 = vmatpush1.msra.mxu0 0.0
        %3971 = vmatprep.subr.mxu0 0.0
        %3972 = vmatpush1.msra.mxu0 0.0
        %3973 = vmatprep.subr.mxu0 0.0
        %3974 = vmatpush1.msra.mxu0 0.0
        %3975 = vmatprep.subr.mxu0 0.0
        %3976 = vmatpush1.msra.mxu0 0.0
        %3977 = vmatprep.subr.mxu0 0.0
        %3978 = vmatpush1.msra.mxu0 0.0
        %3979 = vmatprep.subr.mxu0 0.0
        %3980 = vmatpush1.msra.mxu0 0.0
        %3981 = vmatprep.subr.mxu0 0.0
        %3982 = vmatpush1.msra.mxu0 0.0
        %3983 = vmatprep.subr.mxu0 0.0
        %3984 = vmatpush1.msra.mxu0 0.0
        %3985 = vmatprep.subr.mxu0 0.0
        %3986 = vmatpush1.msra.mxu0 0.0
        %3987 = vmatprep.mubr.f32.mxu0 0.0
        %3988 = vmatmul.mubr.f32.gmra.mrb[0].mxu0 %v3900
        %v3989 = vpop.f32.mrb[0].mxu0
        %v3990 = vadd.f32 0.0, %v3989
        %v3991 = vpop.f32.mrb[0].mxu0
        %3992 = vmatprep.mubr.f32.mxu0 0.0
        %3993 = vmatmul.mubr.f32.gmra.mrb[0].mxu0 %v3903
        %v3994 = vpop.f32.mrb[0].mxu0
        %v3995 = vadd.f32 0.0, %v3994
        %v3996 = vpop.f32.mrb[0].mxu0
        %3997 = vmatprep.mubr.f32.mxu0 0.0
        %3998 = vmatmul.mubr.f32.gmra.mrb[0].mxu0 %v3906
        %v3999 = vpop.f32.mrb[0].mxu0
        %v4000 = vadd.f32 0.0, %v3999
        %v4001 = vpop.f32.mrb[0].mxu0
        %4002 = vmatprep.mubr.f32.mxu0 0.0
        %4003 = vmatmul.mubr.f32.gmra.mrb[0].mxu0 %v3909
        %v4004 = vpop.f32.mrb[0].mxu0
        %v4005 = vadd.f32 0.0, %v4004
        %v4006 = vpop.f32.mrb[0].mxu0
        %4007 = vmatprep.mubr.f32.mxu0 0.0
        %4008 = vmatmul.mubr.f32.gmra.mrb[0].mxu0 %v3912
        %v4009 = vpop.f32.mrb[0].mxu0
        %v4010 = vadd.f32 0.0, %v4009
        %v4011 = vpop.f32.mrb[0].mxu0
        %4012 = vmatprep.mubr.f32.mxu0 0.0
        %4013 = vmatmul.mubr.f32.gmra.mrb[0].mxu0 %v3915
        %v4014 = vpop.f32.mrb[0].mxu0
        %v4015 = vadd.f32 0.0, %v4014
        %v4016 = vpop.f32.mrb[0].mxu0
        %4017 = vmatprep.mubr.f32.mxu0 0.0
        %4018 = vmatmul.mubr.f32.gmra.mrb[0].mxu0 %v3918
        %v4019 = vpop.f32.mrb[0].mxu0
        %v4020 = vadd.f32 0.0, %v4019
        %v4021 = vpop.f32.mrb[0].mxu0
        %4022 = vmatprep.mubr.f32.mxu0 0.0
        %4023 = vmatmul.mubr.f32.gmra.mrb[0].mxu0 %v3921
        %v4024 = vpop.f32.mrb[0].mxu0
        %v4025 = vadd.f32 0.0, %v4024
        %v4026 = vpop.f32.mrb[0].mxu0
        %4027 = vdwg.mxu0
        %v4028 = vadd.f32 %v3879, %v3990
        %v4029 = vadd.f32 %v3880, %v3995
        %v4030 = vadd.f32 %v3881, %v4000
        %v4031 = vadd.f32 %v3882, %v4005
        %v4032 = vadd.f32 %v3883, %v4010
        %v4033 = vadd.f32 %v3884, %v4015
        %v4034 = vadd.f32 %v3885, %v4020
        %v4035 = vadd.f32 %v3886, %v4025
        %v4036 = vld [vmem:[%s3887 + $0x1] sm:$0xff]
        %v4037 = vld [vmem:[%s3887 + $0x11] sm:$0xff]
        %v4038 = vld [vmem:[%s3887 + $0x21] sm:$0xff]
        %v4039 = vld [vmem:[%s3887 + $0x31] sm:$0xff]
        %v4040 = vld [vmem:[%s3887 + $0x41] sm:$0xff]
        %v4041 = vld [vmem:[%s3887 + $0x51] sm:$0xff]
        %v4042 = vld [vmem:[%s3887 + $0x61] sm:$0xff]
        %v4043 = vld [vmem:[%s3887 + $0x71] sm:$0xff]
        %s4044 = scalar_lea.vmem %s3, 112
        %v4045 = vld [vmem:[%s4044] sm:$0xff]
        %v4046 = vld [vmem:[%s4044 + $0x8] sm:$0xff]
        %v4048 = vsel %vm2833, %v4036, 0
        %v4051 = vsel %vm2833, %v4037, 0
        %v4054 = vsel %vm2833, %v4038, 0
        %v4057 = vsel %vm2833, %v4039, 0
        %v4060 = vsel %vm2833, %v4040, 0
        %v4063 = vsel %vm2833, %v4041, 0
        %v4066 = vsel %vm2833, %v4042, 0
        %v4069 = vsel %vm2833, %v4043, 0
        %4071 = vmatprep.subr.mxu0 0.0
        %4072 = vmatpush1.msra.mxu0 %v4045
        %4073 = vmatprep.subr.mxu0 0.0
        %4074 = vmatpush1.msra.mxu0 %v4046
        %4075 = vmatprep.subr.mxu0 0.0
        %4076 = vmatpush1.msra.mxu0 0.0
        %4077 = vmatprep.subr.mxu0 0.0
        %4078 = vmatpush1.msra.mxu0 0.0
        %4079 = vmatprep.subr.mxu0 0.0
        %4080 = vmatpush1.msra.mxu0 0.0
        %4081 = vmatprep.subr.mxu0 0.0
        %4082 = vmatpush1.msra.mxu0 0.0
        %4083 = vmatprep.subr.mxu0 0.0
        %4084 = vmatpush1.msra.mxu0 0.0
        %4085 = vmatprep.subr.mxu0 0.0
        %4086 = vmatpush1.msra.mxu0 0.0
        %4087 = vmatprep.subr.mxu0 0.0
        %4088 = vmatpush1.msra.mxu0 0.0
        %4089 = vmatprep.subr.mxu0 0.0
        %4090 = vmatpush1.msra.mxu0 0.0
        %4091 = vmatprep.subr.mxu0 0.0
        %4092 = vmatpush1.msra.mxu0 0.0
        %4093 = vmatprep.subr.mxu0 0.0
        %4094 = vmatpush1.msra.mxu0 0.0
        %4095 = vmatprep.subr.mxu0 0.0
        %4096 = vmatpush1.msra.mxu0 0.0
        %4097 = vmatprep.subr.mxu0 0.0
        %4098 = vmatpush1.msra.mxu0 0.0
        %4099 = vmatprep.subr.mxu0 0.0
        %4100 = vmatpush1.msra.mxu0 0.0
        %4101 = vmatprep.subr.mxu0 0.0
        %4102 = vmatpush1.msra.mxu0 0.0
        %4103 = vmatprep.subr.mxu0 0.0
        %4104 = vmatpush1.msra.mxu0 0.0
        %4105 = vmatprep.subr.mxu0 0.0
        %4106 = vmatpush1.msra.mxu0 0.0
        %4107 = vmatprep.subr.mxu0 0.0
        %4108 = vmatpush1.msra.mxu0 0.0
        %4109 = vmatprep.subr.mxu0 0.0
        %4110 = vmatpush1.msra.mxu0 0.0
        %4111 = vmatprep.subr.mxu0 0.0
        %4112 = vmatpush1.msra.mxu0 0.0
        %4113 = vmatprep.subr.mxu0 0.0
        %4114 = vmatpush1.msra.mxu0 0.0
        %4115 = vmatprep.subr.mxu0 0.0
        %4116 = vmatpush1.msra.mxu0 0.0
        %4117 = vmatprep.subr.mxu0 0.0
        %4118 = vmatpush1.msra.mxu0 0.0
        %4119 = vmatprep.subr.mxu0 0.0
        %4120 = vmatpush1.msra.mxu0 0.0
        %4121 = vmatprep.subr.mxu0 0.0
        %4122 = vmatpush1.msra.mxu0 0.0
        %4123 = vmatprep.subr.mxu0 0.0
        %4124 = vmatpush1.msra.mxu0 0.0
        %4125 = vmatprep.subr.mxu0 0.0
        %4126 = vmatpush1.msra.mxu0 0.0
        %4127 = vmatprep.subr.mxu0 0.0
        %4128 = vmatpush1.msra.mxu0 0.0
        %4129 = vmatprep.subr.mxu0 0.0
        %4130 = vmatpush1.msra.mxu0 0.0
        %4131 = vmatprep.subr.mxu0 0.0
        %4132 = vmatpush1.msra.mxu0 0.0
        %4133 = vmatprep.subr.mxu0 0.0
        %4134 = vmatpush1.msra.mxu0 0.0
        %4135 = vmatprep.mubr.f32.mxu0 0.0
        %4136 = vmatmul.mubr.f32.gmra.mrb[0].mxu0 %v4048
        %v4137 = vpop.f32.mrb[0].mxu0
        %v4138 = vadd.f32 0.0, %v4137
        %v4139 = vpop.f32.mrb[0].mxu0
        %4140 = vmatprep.mubr.f32.mxu0 0.0
        %4141 = vmatmul.mubr.f32.gmra.mrb[0].mxu0 %v4051
        %v4142 = vpop.f32.mrb[0].mxu0
        %v4143 = vadd.f32 0.0, %v4142
        %v4144 = vpop.f32.mrb[0].mxu0
        %4145 = vmatprep.mubr.f32.mxu0 0.0
        %4146 = vmatmul.mubr.f32.gmra.mrb[0].mxu0 %v4054
        %v4147 = vpop.f32.mrb[0].mxu0
        %v4148 = vadd.f32 0.0, %v4147
        %v4149 = vpop.f32.mrb[0].mxu0
        %4150 = vmatprep.mubr.f32.mxu0 0.0
        %4151 = vmatmul.mubr.f32.gmra.mrb[0].mxu0 %v4057
        %v4152 = vpop.f32.mrb[0].mxu0
        %v4153 = vadd.f32 0.0, %v4152
        %v4154 = vpop.f32.mrb[0].mxu0
        %4155 = vmatprep.mubr.f32.mxu0 0.0
        %4156 = vmatmul.mubr.f32.gmra.mrb[0].mxu0 %v4060
        %v4157 = vpop.f32.mrb[0].mxu0
        %v4158 = vadd.f32 0.0, %v4157
        %v4159 = vpop.f32.mrb[0].mxu0
        %4160 = vmatprep.mubr.f32.mxu0 0.0
        %4161 = vmatmul.mubr.f32.gmra.mrb[0].mxu0 %v4063
        %v4162 = vpop.f32.mrb[0].mxu0
        %v4163 = vadd.f32 0.0, %v4162
        %v4164 = vpop.f32.mrb[0].mxu0
        %4165 = vmatprep.mubr.f32.mxu0 0.0
        %4166 = vmatmul.mubr.f32.gmra.mrb[0].mxu0 %v4066
        %v4167 = vpop.f32.mrb[0].mxu0
        %v4168 = vadd.f32 0.0, %v4167
        %v4169 = vpop.f32.mrb[0].mxu0
        %4170 = vmatprep.mubr.f32.mxu0 0.0
        %4171 = vmatmul.mubr.f32.gmra.mrb[0].mxu0 %v4069
        %v4172 = vpop.f32.mrb[0].mxu0
        %v4173 = vadd.f32 0.0, %v4172
        %v4174 = vpop.f32.mrb[0].mxu0
        %4175 = vdwg.mxu0
        %v4176 = vadd.f32 %v4028, %v4138
        %v4177 = vadd.f32 %v4029, %v4143
        %v4178 = vadd.f32 %v4030, %v4148
        %v4179 = vadd.f32 %v4031, %v4153
        %v4180 = vadd.f32 %v4032, %v4158
        %v4181 = vadd.f32 %v4033, %v4163
        %v4182 = vadd.f32 %v4034, %v4168
        %v4183 = vadd.f32 %v4035, %v4173
        %v4184 = vld [vmem:[%s3887 + $0x2] sm:$0xff]
        %v4185 = vld [vmem:[%s3887 + $0x12] sm:$0xff]
        %v4186 = vld [vmem:[%s3887 + $0x22] sm:$0xff]
        %v4187 = vld [vmem:[%s3887 + $0x32] sm:$0xff]
        %v4188 = vld [vmem:[%s3887 + $0x42] sm:$0xff]
        %v4189 = vld [vmem:[%s3887 + $0x52] sm:$0xff]
        %v4190 = vld [vmem:[%s3887 + $0x62] sm:$0xff]
        %v4191 = vld [vmem:[%s3887 + $0x72] sm:$0xff]
        %s4192 = scalar_lea.vmem %s3, 128
        %v4193 = vld [vmem:[%s4192] sm:$0xff]
        %v4194 = vld [vmem:[%s4192 + $0x8] sm:$0xff]
        %v4196 = vsel %vm2833, %v4184, 0
        %v4199 = vsel %vm2833, %v4185, 0
        %v4202 = vsel %vm2833, %v4186, 0
        %v4205 = vsel %vm2833, %v4187, 0
        %v4208 = vsel %vm2833, %v4188, 0
        %v4211 = vsel %vm2833, %v4189, 0
        %v4214 = vsel %vm2833, %v4190, 0
        %v4217 = vsel %vm2833, %v4191, 0
        %4219 = vmatprep.subr.mxu0 0.0
        %4220 = vmatpush1.msra.mxu0 %v4193
        %4221 = vmatprep.subr.mxu0 0.0
        %4222 = vmatpush1.msra.mxu0 %v4194
        %4223 = vmatprep.subr.mxu0 0.0
        %4224 = vmatpush1.msra.mxu0 0.0
        %4225 = vmatprep.subr.mxu0 0.0
        %4226 = vmatpush1.msra.mxu0 0.0
        %4227 = vmatprep.subr.mxu0 0.0
        %4228 = vmatpush1.msra.mxu0 0.0
        %4229 = vmatprep.subr.mxu0 0.0
        %4230 = vmatpush1.msra.mxu0 0.0
        %4231 = vmatprep.subr.mxu0 0.0
        %4232 = vmatpush1.msra.mxu0 0.0
        %4233 = vmatprep.subr.mxu0 0.0
        %4234 = vmatpush1.msra.mxu0 0.0
        %4235 = vmatprep.subr.mxu0 0.0
        %4236 = vmatpush1.msra.mxu0 0.0
        %4237 = vmatprep.subr.mxu0 0.0
        %4238 = vmatpush1.msra.mxu0 0.0
        %4239 = vmatprep.subr.mxu0 0.0
        %4240 = vmatpush1.msra.mxu0 0.0
        %4241 = vmatprep.subr.mxu0 0.0
        %4242 = vmatpush1.msra.mxu0 0.0
        %4243 = vmatprep.subr.mxu0 0.0
        %4244 = vmatpush1.msra.mxu0 0.0
        %4245 = vmatprep.subr.mxu0 0.0
        %4246 = vmatpush1.msra.mxu0 0.0
        %4247 = vmatprep.subr.mxu0 0.0
        %4248 = vmatpush1.msra.mxu0 0.0
        %4249 = vmatprep.subr.mxu0 0.0
        %4250 = vmatpush1.msra.mxu0 0.0
        %4251 = vmatprep.subr.mxu0 0.0
        %4252 = vmatpush1.msra.mxu0 0.0
        %4253 = vmatprep.subr.mxu0 0.0
        %4254 = vmatpush1.msra.mxu0 0.0
        %4255 = vmatprep.subr.mxu0 0.0
        %4256 = vmatpush1.msra.mxu0 0.0
        %4257 = vmatprep.subr.mxu0 0.0
        %4258 = vmatpush1.msra.mxu0 0.0
        %4259 = vmatprep.subr.mxu0 0.0
        %4260 = vmatpush1.msra.mxu0 0.0
        %4261 = vmatprep.subr.mxu0 0.0
        %4262 = vmatpush1.msra.mxu0 0.0
        %4263 = vmatprep.subr.mxu0 0.0
        %4264 = vmatpush1.msra.mxu0 0.0
        %4265 = vmatprep.subr.mxu0 0.0
        %4266 = vmatpush1.msra.mxu0 0.0
        %4267 = vmatprep.subr.mxu0 0.0
        %4268 = vmatpush1.msra.mxu0 0.0
        %4269 = vmatprep.subr.mxu0 0.0
        %4270 = vmatpush1.msra.mxu0 0.0
        %4271 = vmatprep.subr.mxu0 0.0
        %4272 = vmatpush1.msra.mxu0 0.0
        %4273 = vmatprep.subr.mxu0 0.0
        %4274 = vmatpush1.msra.mxu0 0.0
        %4275 = vmatprep.subr.mxu0 0.0
        %4276 = vmatpush1.msra.mxu0 0.0
        %4277 = vmatprep.subr.mxu0 0.0
        %4278 = vmatpush1.msra.mxu0 0.0
        %4279 = vmatprep.subr.mxu0 0.0
        %4280 = vmatpush1.msra.mxu0 0.0
        %4281 = vmatprep.subr.mxu0 0.0
        %4282 = vmatpush1.msra.mxu0 0.0
        %4283 = vmatprep.mubr.f32.mxu0 0.0
        %4284 = vmatmul.mubr.f32.gmra.mrb[0].mxu0 %v4196
        %v4285 = vpop.f32.mrb[0].mxu0
        %v4286 = vadd.f32 0.0, %v4285
        %v4287 = vpop.f32.mrb[0].mxu0
        %4288 = vmatprep.mubr.f32.mxu0 0.0
        %4289 = vmatmul.mubr.f32.gmra.mrb[0].mxu0 %v4199
        %v4290 = vpop.f32.mrb[0].mxu0
        %v4291 = vadd.f32 0.0, %v4290
        %v4292 = vpop.f32.mrb[0].mxu0
        %4293 = vmatprep.mubr.f32.mxu0 0.0
        %4294 = vmatmul.mubr.f32.gmra.mrb[0].mxu0 %v4202
        %v4295 = vpop.f32.mrb[0].mxu0
        %v4296 = vadd.f32 0.0, %v4295
        %v4297 = vpop.f32.mrb[0].mxu0
        %4298 = vmatprep.mubr.f32.mxu0 0.0
        %4299 = vmatmul.mubr.f32.gmra.mrb[0].mxu0 %v4205
        %v4300 = vpop.f32.mrb[0].mxu0
        %v4301 = vadd.f32 0.0, %v4300
        %v4302 = vpop.f32.mrb[0].mxu0
        %4303 = vmatprep.mubr.f32.mxu0 0.0
        %4304 = vmatmul.mubr.f32.gmra.mrb[0].mxu0 %v4208
        %v4305 = vpop.f32.mrb[0].mxu0
        %v4306 = vadd.f32 0.0, %v4305
        %v4307 = vpop.f32.mrb[0].mxu0
        %4308 = vmatprep.mubr.f32.mxu0 0.0
        %4309 = vmatmul.mubr.f32.gmra.mrb[0].mxu0 %v4211
        %v4310 = vpop.f32.mrb[0].mxu0
        %v4311 = vadd.f32 0.0, %v4310
        %v4312 = vpop.f32.mrb[0].mxu0
        %4313 = vmatprep.mubr.f32.mxu0 0.0
        %4314 = vmatmul.mubr.f32.gmra.mrb[0].mxu0 %v4214
        %v4315 = vpop.f32.mrb[0].mxu0
        %v4316 = vadd.f32 0.0, %v4315
        %v4317 = vpop.f32.mrb[0].mxu0
        %4318 = vmatprep.mubr.f32.mxu0 0.0
        %4319 = vmatmul.mubr.f32.gmra.mrb[0].mxu0 %v4217
        %v4320 = vpop.f32.mrb[0].mxu0
        %v4321 = vadd.f32 0.0, %v4320
        %v4322 = vpop.f32.mrb[0].mxu0
        %4323 = vdwg.mxu0
        %v4324 = vadd.f32 %v4176, %v4286
        %v4325 = vadd.f32 %v4177, %v4291
        %v4326 = vadd.f32 %v4178, %v4296
        %v4327 = vadd.f32 %v4179, %v4301
        %v4328 = vadd.f32 %v4180, %v4306
        %v4329 = vadd.f32 %v4181, %v4311
        %v4330 = vadd.f32 %v4182, %v4316
        %v4331 = vadd.f32 %v4183, %v4321
        %v4332 = vld [vmem:[#allocation12] sm:$0x1]
        %v4334 = vlaneseq
        %v4335 = vshrl.u32 %v4334, 7
        %v4336 = vsub.s32 0, %v4335
        %v4337 = vrot.slane %v4332, %v4336
        %v4339 = vadd.f32 %v4324, %v4337
        %v4340 = vadd.f32 %v4325, %v4337
        %v4341 = vadd.f32 %v4326, %v4337
        %v4342 = vadd.f32 %v4327, %v4337
        %v4343 = vadd.f32 %v4328, %v4337
        %v4344 = vadd.f32 %v4329, %v4337
        %v4345 = vadd.f32 %v4330, %v4337
        %v4346 = vadd.f32 %v4331, %v4337
        %v4347 = vmax.f32 %v4339, 0.0
        %v4348 = vmax.f32 %v4340, 0.0
        %v4349 = vmax.f32 %v4341, 0.0
        %v4350 = vmax.f32 %v4342, 0.0
        %v4351 = vmax.f32 %v4343, 0.0
        %v4352 = vmax.f32 %v4344, 0.0
        %v4353 = vmax.f32 %v4345, 0.0
        %v4354 = vmax.f32 %v4346, 0.0
        %vm4355 = vcmask 261120
        %4356 = vst.msk [vmem:[#allocation6] sm:$0xff] %vm4355, %v4347
        %4357 = vst.msk [vmem:[#allocation6 + $0x8] sm:$0xff] %vm4355, %v4348
        %4358 = vst.msk [vmem:[#allocation6 + $0x10] sm:$0xff] %vm4355, %v4349
        %4359 = vst.msk [vmem:[#allocation6 + $0x18] sm:$0xff] %vm4355, %v4350
        %4360 = vst.msk [vmem:[#allocation6 + $0x20] sm:$0xff] %vm4355, %v4351
        %4361 = vst.msk [vmem:[#allocation6 + $0x28] sm:$0xff] %vm4355, %v4352
        %4362 = vst.msk [vmem:[#allocation6 + $0x30] sm:$0xff] %vm4355, %v4353
        %4363 = vst.msk [vmem:[#allocation6 + $0x38] sm:$0xff] %vm4355, %v4354
        %v4364 = vld [vmem:[#allocation6] ss:$2 sm:$0xf]
        %s4365 = scalar_lea.vmem [#allocation6], 8
        %v4366 = vld [vmem:[%s4365] ss:$2 sm:$0xf]
        %s4367 = scalar_lea.vmem [#allocation6], 16
        %v4368 = vld [vmem:[%s4367] ss:$2 sm:$0xf]
        %s4369 = scalar_lea.vmem [#allocation6], 24
        %v4370 = vld [vmem:[%s4369] ss:$2 sm:$0xf]
        %s4371 = scalar_lea.vmem [#allocation6], 32
        %v4372 = vld [vmem:[%s4371] ss:$2 sm:$0xf]
        %s4373 = scalar_lea.vmem [#allocation6], 40
        %v4374 = vld [vmem:[%s4373] ss:$2 sm:$0xf]
        %s4375 = scalar_lea.vmem [#allocation6], 48
        %v4376 = vld [vmem:[%s4375] ss:$2 sm:$0xf]
        %s4377 = scalar_lea.vmem [#allocation6], 56
        %v4378 = vld [vmem:[%s4377] ss:$2 sm:$0xf]
        %s4379 = scalar_lea.vmem [#allocation6], 1
        %v4380 = vld [vmem:[%s4379] ss:$2 sm:$0xf]
        %s4381 = scalar_lea.vmem [#allocation6], 9
        %v4382 = vld [vmem:[%s4381] ss:$2 sm:$0xf]
        %s4383 = scalar_lea.vmem [#allocation6], 17
        %v4384 = vld [vmem:[%s4383] ss:$2 sm:$0xf]
        %s4385 = scalar_lea.vmem [#allocation6], 25
        %v4386 = vld [vmem:[%s4385] ss:$2 sm:$0xf]
        %s4387 = scalar_lea.vmem [#allocation6], 33
        %v4388 = vld [vmem:[%s4387] ss:$2 sm:$0xf]
        %s4389 = scalar_lea.vmem [#allocation6], 41
        %v4390 = vld [vmem:[%s4389] ss:$2 sm:$0xf]
        %s4391 = scalar_lea.vmem [#allocation6], 49
        %v4392 = vld [vmem:[%s4391] ss:$2 sm:$0xf]
        %s4393 = scalar_lea.vmem [#allocation6], 57
        %v4394 = vld [vmem:[%s4393] ss:$2 sm:$0xf]
        %v4395 = vmax.f32 %v4364, %v4380
        %v4396 = vmax.f32 %v4366, %v4382
        %v4397 = vmax.f32 %v4368, %v4384
        %v4398 = vmax.f32 %v4370, %v4386
        %v4399 = vmax.f32 %v4372, %v4388
        %v4400 = vmax.f32 %v4374, %v4390
        %v4401 = vmax.f32 %v4376, %v4392
        %v4402 = vmax.f32 %v4378, %v4394
        %vm4403 = vcmask 257024
        %4404 = vst.msk [vmem:[#allocation7] sm:$0xf] %vm4403, %v4395
        %4405 = vst.msk [vmem:[#allocation7 + $0x4] sm:$0xf] %vm4403, %v4396
        %4406 = vst.msk [vmem:[#allocation7 + $0x8] sm:$0xf] %vm4403, %v4397
        %4407 = vst.msk [vmem:[#allocation7 + $0xc] sm:$0xf] %vm4403, %v4398
        %4408 = vst.msk [vmem:[#allocation7 + $0x10] sm:$0xf] %vm4403, %v4399
        %4409 = vst.msk [vmem:[#allocation7 + $0x14] sm:$0xf] %vm4403, %v4400
        %4410 = vst.msk [vmem:[#allocation7 + $0x18] sm:$0xf] %vm4403, %v4401
        %4411 = vst.msk [vmem:[#allocation7 + $0x1c] sm:$0xf] %vm4403, %v4402
        %v4412 = vld [vmem:[#allocation7] sm:$0xf]
        %v4413 = vld [vmem:[#allocation7 + $0x8] sm:$0xf]
        %v4414 = vld [vmem:[#allocation7 + $0x10] sm:$0xf]
        %v4415 = vld [vmem:[#allocation7 + $0x18] sm:$0xf]
        %s4416 = scalar_lea.vmem [#allocation7], 4
        %v4417 = vld [vmem:[%s4416] sm:$0xf]
        %v4418 = vld [vmem:[%s4416 + $0x8] sm:$0xf]
        %v4419 = vld [vmem:[%s4416 + $0x10] sm:$0xf]
        %v4420 = vld [vmem:[%s4416 + $0x18] sm:$0xf]
        %v4421 = vmax.f32 %v4412, %v4417
        %v4422 = vmax.f32 %v4413, %v4418
        %v4423 = vmax.f32 %v4414, %v4419
        %v4424 = vmax.f32 %v4415, %v4420
        %4425 = vst.msk [vmem:[%s264] sm:$0xf] %vm4403, %v4421
        %4426 = vst.msk [vmem:[%s264 + $0x4] sm:$0xf] %vm4403, %v4422
        %4427 = vst.msk [vmem:[%s264 + $0x8] sm:$0xf] %vm4403, %v4423
        %4428 = vst.msk [vmem:[%s264 + $0xc] sm:$0xf] %vm4403, %v4424
        %p4429 = scmp.lt.s32.totalorder %s18, 1
        %s4430 = scalar_select %p4429, %s18, 1
        %s4431 = smul.addr %s4430, 4
        %s4432 = smul.addr %s4431, 4
        %s4433 = scalar_lea.vmem %s5, %s4432
        // Predicated region
        $region53: #{actor_discrete_image_forward.2} parent=39 // pred_check
          %p4434 = pneg %p146
        $region54: #{actor_discrete_image_forward.2} parent=39 // pred_check_branch
          %4436 = sbr.rel (%p4434) target = $region56
        $region55: #{actor_discrete_image_forward.2} parent=39 // pred_region
          _
        $region56: #{actor_discrete_image_forward.2} parent=39 // pred_fallthru
          _
      $region40: #{actor_discrete_image_forward.2} parent=5 // pred_fallthru
        _
      %p4437 = scmp.le.s32.totalorder 2, %s13
      // Predicated region
      $region57: #{actor_discrete_image_forward.2} parent=5 // pred_check
        %p4438 = pneg %p4437
      $region58: #{actor_discrete_image_forward.2} parent=5 // pred_check_branch
        %4440 = sbr.rel (%p4438) target = $region60
      $region59: #{actor_discrete_image_forward.2} parent=5 // pred_region
        %s4441 = ssub.s32 %s13, 2
        // Predicated region
        $region61: #{actor_discrete_image_forward.2} parent=59 // pred_check
          %p4442 = pneg %p152
        $region62: #{actor_discrete_image_forward.2} parent=59 // pred_check_branch
          %4444 = sbr.rel (%p4442) target = $region64
        $region63: #{actor_discrete_image_forward.2} parent=59 // pred_region
          %p4445 = scmp.lt.s32.totalorder %s19, 1
          %s4446 = scalar_select %p4445, %s19, 1
          %s4447 = smul.addr %s4446, 4
          %s4448 = smul.addr %s4447, 4
          %s4449 = scalar_lea.vmem %s5, %s4448
        $region64: #{actor_discrete_image_forward.2} parent=59 // pred_fallthru
          _
      $region60: #{actor_discrete_image_forward.2} parent=5 // pred_fallthru
        _
    $region6: #{actor_discrete_image_forward.2} parent=1 // loop_footer
      %s17 = sadd.s32 1, %s13
    $region7: #{actor_discrete_image_forward.2} parent=1 // loop_footer_branch
      %12 = sbr.rel target = $region3
    $region8: #{actor_discrete_image_forward.2} parent=1 // loop_exit
      _
    %4450 = vsyncpa [#allocation9], 1
    %s4451 = scalar_lea.sflag [#allocation9], 1
    %4452 = vsyncpa %s4451, 1
    %4453 = vsyncpa [#allocation11], 1

</llo_original>
